<compile_context>
chip_gen: v5e
topology: v5e:2x2
jax: 0.10.0
libtpu: 0.0.40
codegen_flags: <defaults>
</compile_context>

<pallas_src>
import jax
import jax.numpy as jnp
from jax import lax
from jax.experimental import pallas as pl
from jax.experimental.pallas import tpu as pltpu

HID = 16        # hidden channels of every stage (nn.Conv2d(..., 16, ...))
EPS = 1e-5      # BatchNorm2d default eps


# ----------------------------- fused pallas_call ------------------------------

def _build_encoder_call(n, h0, w0):
    """Builds the single fused pallas_call for input spatial size (h0, w0)."""
    c = HID
    # Specialisation used by the aligned reshapes below (16x16 input holds).
    assert h0 % 4 == 0 and w0 % 16 == 0, "kernel specialised to H%4==0, W%16==0"

    h1, w1 = h0 // 2, w0 // 2                      # after pool_1 (pad 0)
    h2, w2 = (h1 + 2) // 2, (w1 + 2) // 2          # after pool_2 (pad 1)
    h3, w3 = h2 // 2, w2 // 2                      # after pool_3 (pad 0, floor)
    w2e = max(8, ((w2 + 7) // 8) * 8)              # 8-aligned stage-3 conv width

    m1 = n * h0 * w0
    m2 = n * h1 * w1
    m3 = n * h2 * w2e                              # includes (w2e - w2) fake cols
    cnt3 = n * h2 * w2                             # real pixels for stage-3 BN

    def kernel(p1_ref, w_ref, bnp_ref, o_ref,
               pool1_ref, pad2_ref, pat2_ref, pool2_ref,
               pad3_ref, pat3_ref, pool3_ref):
        # Dropout2d(p=0.0) is the identity and is skipped in every stage.
        f32 = jnp.float32
        bn = bnp_ref[...]                          # (8, c): g1,b1,g2,b2,g3,b3,0,0

        def bn_relu(y2d, stats_val, count, stage):
            """Training-mode BatchNorm2d (batch stats, biased var) + ReLU."""
            gamma = bn[2 * stage:2 * stage + 1, :]
            beta = bn[2 * stage + 1:2 * stage + 2, :]
            s = stats_val
            acc = s
            while acc.ndim > 1:                    # reduce leading axes one by one
                acc = jnp.sum(acc, axis=0)
            mean = acc * (1.0 / count)             # (c,)
            d = s - mean
            dd = d * d
            while dd.ndim > 1:
                dd = jnp.sum(dd, axis=0)
            var = dd * (1.0 / count)               # (c,) two-pass, >= 0
            scale = gamma * lax.rsqrt(var + EPS)   # (1, c), EUP rsqrt
            shift = beta - mean * scale
            return jnp.maximum(y2d * scale + shift, 0.0)

        def pool_h(a4d):
            """Max over H pairs (a leading dim): (n,H,W,c) -> (n,H//2,W,c)."""
            nn_, hh_, ww_, cc_ = a4d.shape
            a5 = a4d.reshape(nn_, hh_ // 2, 2, ww_, cc_)   # leading-dim split only
            return jnp.maximum(a5[:, :, 0], a5[:, :, 1])

        def pool_w(ah, wref, wo):
            """Max over W pairs (sublane dim) via strided reads from scratch."""
            wref[...] = ah                                   # one dense store
            lo = wref[:, :, pl.ds(0, wo, 2), :]
            hi = wref[:, :, pl.ds(1, wo, 2), :]
            return jnp.maximum(lo, hi)

        # ---- stage 1: conv(1->16) as one (m1,9)@(9,16) matmul ----------------
        w1v = w_ref[0][:9, :]                                # (9, c)
        y = jnp.dot(p1_ref[...], w1v, preferred_element_type=f32)     # (m1, c)
        y = bn_relu(y, y, m1, 0)
        y4 = y.reshape(n, h0, w0, c)                         # 8-aligned retile
        a1 = pool_w(pool_h(y4), pool1_ref, w1)               # (n, h1, w1, c)

        # ---- stage 2: conv(16->16) as one (m2,144)@(144,16) matmul -----------
        pad2_ref[...] = jnp.zeros(pad2_ref.shape, f32)       # zero conv border
        pad2_ref[:, 1:h1 + 1, 1:w1 + 1, :] = a1
        for k in range(9):                                   # im2col into VMEM
            dh, dw = divmod(k, 3)
            tap = pad2_ref[:, dh:dh + h1, dw:dw + w1, :]     # (n, h1, w1, c)
            pat2_ref[:, k * c:(k + 1) * c] = tap.reshape(m2, c)
        y = jnp.dot(pat2_ref[...], w_ref[1], preferred_element_type=f32)
        y = bn_relu(y, y, m2, 1)
        # pool_2 has padding=1: reuse pad2_ref (its border is still zero; since
        # ReLU >= 0, zero padding is exact for the max-pool).  The conv-2 taps
        # above were already read before this overwrite (ref ops stay ordered).
        pad2_ref[:, 1:h1 + 1, 1:w1 + 1, :] = y.reshape(n, h1, w1, c)
        a2 = pool_w(pool_h(pad2_ref[...]), pool2_ref, w2)    # (n, h2, w2, c)

        # ---- stage 3: conv(16->16), width padded to w2e for 8-alignment ------
        pad3_ref[...] = jnp.zeros(pad3_ref.shape, f32)
        pad3_ref[:, 1:h2 + 1, 1:w2 + 1, :] = a2
        for k in range(9):
            dh, dw = divmod(k, 3)
            tap = pad3_ref[:, dh:dh + h2, dw:dw + w2e, :]    # (n, h2, w2e, c)
            pat3_ref[:, k * c:(k + 1) * c] = tap.reshape(m3, c)
        y = jnp.dot(pat3_ref[...], w_ref[2], preferred_element_type=f32)  # (m3,c)
        y4 = y.reshape(n, h2, w2e, c)
        # BN statistics use only the real w2 columns (the extra columns are
        # alignment filler and never reach the output).
        y = bn_relu(y, y4[:, :, 0:w2, :], cnt3, 2)
        y4 = y.reshape(n, h2, w2e, c)[:, 0:2 * h3, :, :]     # rows used by pool_3
        a3 = pool_w(pool_h(y4), pool3_ref, w3)               # (n, h3, w3, c)
        o_ref[...] = a3

    flops = 2 * (m1 * 9 * c + (m2 + m3) * 9 * c * c)
    bytes_accessed = 4 * (m1 * 9 + 3 * 9 * c * c + 8 * c + n * h3 * w3 * c)

    call = pl.pallas_call(
        kernel,
        out_shape=jax.ShapeDtypeStruct((n, h3, w3, c), jnp.float32),
        in_specs=[pl.BlockSpec(memory_space=pltpu.MemorySpace.VMEM)] * 3,
        out_specs=pl.BlockSpec(memory_space=pltpu.MemorySpace.VMEM),
        scratch_shapes=[
            pltpu.VMEM((n, h1, w0, c), jnp.float32),                 # pool1
            pltpu.VMEM((n, h1 + 2, w1 + 2, c), jnp.float32),         # pad2 (reused)
            pltpu.VMEM((m2, 9 * c), jnp.float32),                    # patches 2
            pltpu.VMEM((n, (h1 + 2) // 2, w1 + 2, c), jnp.float32),  # pool2
            pltpu.VMEM((n, h2 + 2, w2e + 2, c), jnp.float32),        # pad3
            pltpu.VMEM((m3, 9 * c), jnp.float32),                    # patches 3
            pltpu.VMEM((n, h3, w2e, c), jnp.float32),                # pool3
        ],
        cost_estimate=pl.CostEstimate(flops=flops, transcendentals=3 * c,
                                      bytes_accessed=bytes_accessed),
    )
    return call


# ------------------------------- wrapper --------------------------------------

@jax.jit
def encoder_cnn_small(x_nchw, params):
    """Forward pass of EncoderCNNSmall (NCHW in, NCHW out), single fused kernel."""
    n, cin, hh, ww = x_nchw.shape
    assert cin == 1
    c = HID
    (w1, _b1, g1, be1), (w2, _b2, g2, be2), (w3, _b3, g3, be3) = params
    # Conv biases are cancelled exactly by training-mode BN mean subtraction
    # and are therefore not passed to the kernel.

    # Stage-1 im2col (cin == 1) built in the wrapper: pure layout plumbing.
    x2 = x_nchw.reshape(n, hh, ww)
    xp = jnp.pad(x2, ((0, 0), (1, 1), (1, 1)))
    taps = [xp[:, dh:dh + hh, dw:dw + ww] for dh in range(3) for dw in range(3)]
    patches1 = jnp.stack(taps, axis=-1).reshape(n * hh * ww, 9).astype(jnp.float32)

    # Packed weights (3, 144, 16): slab 0 = conv_1 (K=9, zero-padded rows),
    # slabs 1/2 = conv_2 / conv_3 im2col weights.
    w1k = jnp.zeros((9 * c, c), jnp.float32).at[:9, :].set(w1.reshape(9, c))
    wpack = jnp.stack([w1k, w2.reshape(9 * c, c), w3.reshape(9 * c, c)], axis=0)

    # Packed BN params (8, 16): rows g1, b1, g2, b2, g3, b3, 0, 0.
    zc = jnp.zeros((c,), jnp.float32)
    bnp = jnp.stack([g1, be1, g2, be2, g3, be3, zc, zc], axis=0)

    call = _build_encoder_call(n, hh, ww)
    out = call(patches1, wpack, bnp)          # (n, h3, w3, c) NHWC
    return jnp.transpose(out, (0, 3, 1, 2))   # NHWC -> NCHW (only 128 elements)


# ----------------------------- params & reference -----------------------------

def init_params(key):
    """Deterministic init matching the module's parameter set."""
    params = []
    stage_channels = [(1, HID), (HID, HID), (HID, HID)]
    for i, (cin, cout) in enumerate(stage_channels):
        k = jax.random.fold_in(key, i)
        kw_key, kb_key = jax.random.split(k)
        bound = (1.0 / (cin * 9)) ** 0.5
        w = jax.random.uniform(kw_key, (3, 3, cin, cout), jnp.float32, -bound, bound)
        b = jax.random.uniform(kb_key, (cout,), jnp.float32, -bound, bound)
        gamma = jnp.ones((cout,), jnp.float32)
        beta = jnp.zeros((cout,), jnp.float32)
        params.append((w, b, gamma, beta))
    return params


def _reference(x_nchw, params):
    """Pure-JAX/XLA reference mirroring the PyTorch forward (training-mode BN)."""
    x = jnp.transpose(x_nchw, (0, 2, 3, 1))
    for (w, b, gamma, beta), pool_pad in zip(params, (0, 1, 0)):
        y = lax.conv_general_dilated(
            x, w, window_strides=(1, 1), padding=((1, 1), (1, 1)),
            dimension_numbers=("NHWC", "HWIO", "NHWC")) + b.reshape(1, 1, 1, -1)
        mean = jnp.mean(y, axis=(0, 1, 2), keepdims=True)
        var = jnp.mean((y - mean) ** 2, axis=(0, 1, 2), keepdims=True)
        y = (y - mean) * (gamma / jnp.sqrt(var + EPS)) + beta
        y = lax.reduce_window(
            y, -jnp.inf, lax.max, (1, 2, 2, 1), (1, 2, 2, 1),
            ((0, 0), (pool_pad, pool_pad), (pool_pad, pool_pad), (0, 0)))
        x = jnp.maximum(y, 0.0)
    return jnp.transpose(x, (0, 3, 1, 2))


if __name__ == "__main__":
    key = jax.random.PRNGKey(0)
    kx, kp = jax.random.split(key)

    # PyTorch-style NCHW input: batch=2, channels=1, spatial=16x16.
    x = jax.random.normal(kx, (2, 1, 16, 16), jnp.float32)
    params = init_params(kp)

    out = jax.block_until_ready(encoder_cnn_small(x, params))
    # Shape trace: 16x16 -> pool 8x8 -> pool(pad=1) 5x5 -> pool 2x2.
    assert out.shape == (2, 16, 2, 2), out.shape
    assert bool(jnp.all(jnp.isfinite(out)))

    ref = jax.block_until_ready(_reference(x, params))
    assert jnp.allclose(out, ref, atol=2e-4, rtol=2e-4), \
        float(jnp.max(jnp.abs(out - ref)))
    print("KERNEL_OK")
</pallas_src>

<mosaic_0001>
module attributes {stable_mosaic.version = 11 : i64} {
  func.func @kernel(%arg0: memref<512x9xf32, #tpu.memory_space<vmem>>, %arg1: memref<3x144x16xf32, #tpu.memory_space<vmem>>, %arg2: memref<8x16xf32, #tpu.memory_space<vmem>>, %arg3: memref<2x2x2x16xf32, #tpu.memory_space<vmem>>, %arg4: memref<2x8x16x16xf32, #tpu.memory_space<vmem>>, %arg5: memref<2x10x10x16xf32, #tpu.memory_space<vmem>>, %arg6: memref<128x144xf32, #tpu.memory_space<vmem>>, %arg7: memref<2x5x10x16xf32, #tpu.memory_space<vmem>>, %arg8: memref<2x7x10x16xf32, #tpu.memory_space<vmem>>, %arg9: memref<80x144xf32, #tpu.memory_space<vmem>>, %arg10: memref<2x2x8x16xf32, #tpu.memory_space<vmem>>) attributes {dimension_semantics = [], scalar_prefetch = 0 : i64, scratch_operands = 7 : i64, tpu.core_type = #tpu.core_type<tc>} {
    %c0 = arith.constant 0 : index
    %c0_0 = arith.constant 0 : index
    %0 = vector.load %arg2[%c0, %c0_0] : memref<8x16xf32, #tpu.memory_space<vmem>>, vector<8x16xf32>
    %c0_1 = arith.constant 0 : index
    %c0_2 = arith.constant 0 : index
    %c0_3 = arith.constant 0 : index
    %1 = vector.load %arg1[%c0_1, %c0_2, %c0_3] : memref<3x144x16xf32, #tpu.memory_space<vmem>>, vector<1x144x16xf32>
    %2 = vector.shape_cast %1 : vector<1x144x16xf32> to vector<144x16xf32>
    %3 = vector.extract_strided_slice %2 {offsets = [0, 0], sizes = [9, 16], strides = [1, 1]} : vector<144x16xf32> to vector<9x16xf32>
    %c0_4 = arith.constant 0 : index
    %c0_5 = arith.constant 0 : index
    %4 = vector.load %arg0[%c0_4, %c0_5] : memref<512x9xf32, #tpu.memory_space<vmem>>, vector<512x9xf32>
    %cst = arith.constant dense<0.000000e+00> : vector<512x16xf32>
    %5 = tpu.matmul %4, %3, %cst {dimension_numbers = #tpu.dot_dimension_numbers<[1], [0], [0], [1], [0, 0, 1, 1], [], []>} : vector<512x9xf32>, vector<9x16xf32>, vector<512x16xf32> -> vector<512x16xf32>
    %6 = vector.extract_strided_slice %0 {offsets = [0, 0], sizes = [1, 16], strides = [1, 1]} : vector<8x16xf32> to vector<1x16xf32>
    %7 = vector.extract_strided_slice %0 {offsets = [1, 0], sizes = [1, 16], strides = [1, 1]} : vector<8x16xf32> to vector<1x16xf32>
    %cst_6 = arith.constant dense<0.000000e+00> : vector<16xf32>
    %8 = vector.multi_reduction <add>, %5, %cst_6 [0] : vector<512x16xf32> to vector<16xf32>
    %cst_7 = arith.constant 0.001953125 : f32
    %9 = vector.broadcast %cst_7 : f32 to vector<16xf32>
    %10 = arith.mulf %8, %9 : vector<16xf32>
    %11 = vector.shape_cast %10 : vector<16xf32> to vector<1x16xf32>
    %12 = vector.broadcast %11 : vector<1x16xf32> to vector<512x16xf32>
    %13 = arith.subf %5, %12 : vector<512x16xf32>
    %14 = arith.mulf %13, %13 : vector<512x16xf32>
    %cst_8 = arith.constant dense<0.000000e+00> : vector<16xf32>
    %15 = vector.multi_reduction <add>, %14, %cst_8 [0] : vector<512x16xf32> to vector<16xf32>
    %cst_9 = arith.constant 0.001953125 : f32
    %16 = vector.broadcast %cst_9 : f32 to vector<16xf32>
    %17 = arith.mulf %15, %16 : vector<16xf32>
    %cst_10 = arith.constant 9.99999974E-6 : f32
    %18 = vector.broadcast %cst_10 : f32 to vector<16xf32>
    %19 = arith.addf %17, %18 : vector<16xf32>
    %20 = math.rsqrt %19 : vector<16xf32>
    %21 = vector.shape_cast %20 : vector<16xf32> to vector<1x16xf32>
    %22 = arith.mulf %6, %21 : vector<1x16xf32>
    %23 = vector.shape_cast %10 : vector<16xf32> to vector<1x16xf32>
    %24 = arith.mulf %23, %22 : vector<1x16xf32>
    %25 = arith.subf %7, %24 : vector<1x16xf32>
    %26 = vector.broadcast %22 : vector<1x16xf32> to vector<512x16xf32>
    %27 = arith.mulf %5, %26 : vector<512x16xf32>
    %28 = vector.broadcast %25 : vector<1x16xf32> to vector<512x16xf32>
    %29 = arith.addf %27, %28 : vector<512x16xf32>
    %cst_11 = arith.constant 0.000000e+00 : f32
    %30 = vector.broadcast %cst_11 : f32 to vector<512x16xf32>
    %31 = arith.maximumf %29, %30 : vector<512x16xf32>
    %32 = vector.shape_cast %31 : vector<512x16xf32> to vector<2x16x16x16xf32>
    %33 = vector.shape_cast %32 : vector<2x16x16x16xf32> to vector<2x8x2x16x16xf32>
    %34 = vector.extract_strided_slice %33 {offsets = [0, 0, 0, 0, 0], sizes = [2, 8, 1, 16, 16], strides = [1, 1, 1, 1, 1]} : vector<2x8x2x16x16xf32> to vector<2x8x1x16x16xf32>
    %35 = vector.shape_cast %34 : vector<2x8x1x16x16xf32> to vector<2x8x16x16xf32>
    %36 = vector.extract_strided_slice %33 {offsets = [0, 0, 1, 0, 0], sizes = [2, 8, 1, 16, 16], strides = [1, 1, 1, 1, 1]} : vector<2x8x2x16x16xf32> to vector<2x8x1x16x16xf32>
    %37 = vector.shape_cast %36 : vector<2x8x1x16x16xf32> to vector<2x8x16x16xf32>
    %38 = arith.maximumf %35, %37 : vector<2x8x16x16xf32>
    %c0_12 = arith.constant 0 : index
    %c0_13 = arith.constant 0 : index
    %c0_14 = arith.constant 0 : index
    %c0_15 = arith.constant 0 : index
    %39 = vector.load %arg4[%c0_12, %c0_13, %c0_14, %c0_15] : memref<2x8x16x16xf32, #tpu.memory_space<vmem>>, vector<2x8x16x16xf32>
    tpu.vector_store %arg4[%c0_12, %c0_13, %c0_14, %c0_15], %38 {strides = array<i32>} : memref<2x8x16x16xf32, #tpu.memory_space<vmem>>, vector<2x8x16x16xf32>,
    %c0_16 = arith.constant 0 : index
    %c0_17 = arith.constant 0 : index
    %c0_18 = arith.constant 0 : index
    %c0_19 = arith.constant 0 : index
    %40 = tpu.strided_load %arg4[%c0_16, %c0_17, %c0_18, %c0_19] {strides = array<i32: 1, 1, 2, 1>} : memref<2x8x16x16xf32, #tpu.memory_space<vmem>>, vector<2x8x8x16xf32>
    %c0_20 = arith.constant 0 : index
    %c0_21 = arith.constant 0 : index
    %c1 = arith.constant 1 : index
    %c0_22 = arith.constant 0 : index
    %41 = tpu.strided_load %arg4[%c0_20, %c0_21, %c1, %c0_22] {strides = array<i32: 1, 1, 2, 1>} : memref<2x8x16x16xf32, #tpu.memory_space<vmem>>, vector<2x8x8x16xf32>
    %42 = arith.maximumf %40, %41 : vector<2x8x8x16xf32>
    %cst_23 = arith.constant 0.000000e+00 : f32
    %43 = vector.broadcast %cst_23 : f32 to vector<2x10x10x16xf32>
    %c0_24 = arith.constant 0 : index
    %c0_25 = arith.constant 0 : index
    %c0_26 = arith.constant 0 : index
    %c0_27 = arith.constant 0 : index
    %44 = vector.load %arg5[%c0_24, %c0_25, %c0_26, %c0_27] : memref<2x10x10x16xf32, #tpu.memory_space<vmem>>, vector<2x10x10x16xf32>
    tpu.vector_store %arg5[%c0_24, %c0_25, %c0_26, %c0_27], %43 {strides = array<i32>} : memref<2x10x10x16xf32, #tpu.memory_space<vmem>>, vector<2x10x10x16xf32>,
    %c0_28 = arith.constant 0 : index
    %c1_29 = arith.constant 1 : index
    %c1_30 = arith.constant 1 : index
    %c0_31 = arith.constant 0 : index
    %45 = vector.load %arg5[%c0_28, %c1_29, %c1_30, %c0_31] : memref<2x10x10x16xf32, #tpu.memory_space<vmem>>, vector<2x8x8x16xf32>
    tpu.vector_store %arg5[%c0_28, %c1_29, %c1_30, %c0_31], %42 {strides = array<i32>} : memref<2x10x10x16xf32, #tpu.memory_space<vmem>>, vector<2x8x8x16xf32>,
    %c0_32 = arith.constant 0 : index
    %c0_33 = arith.constant 0 : index
    %c0_34 = arith.constant 0 : index
    %c0_35 = arith.constant 0 : index
    %46 = vector.load %arg5[%c0_32, %c0_33, %c0_34, %c0_35] : memref<2x10x10x16xf32, #tpu.memory_space<vmem>>, vector<2x8x8x16xf32>
    %47 = vector.shape_cast %46 : vector<2x8x8x16xf32> to vector<128x16xf32>
    %c0_36 = arith.constant 0 : index
    %c0_37 = arith.constant 0 : index
    %48 = vector.load %arg6[%c0_36, %c0_37] : memref<128x144xf32, #tpu.memory_space<vmem>>, vector<128x16xf32>
    tpu.vector_store %arg6[%c0_36, %c0_37], %47 {strides = array<i32>} : memref<128x144xf32, #tpu.memory_space<vmem>>, vector<128x16xf32>,
    %c0_38 = arith.constant 0 : index
    %c0_39 = arith.constant 0 : index
    %c1_40 = arith.constant 1 : index
    %c0_41 = arith.constant 0 : index
    %49 = vector.load %arg5[%c0_38, %c0_39, %c1_40, %c0_41] : memref<2x10x10x16xf32, #tpu.memory_space<vmem>>, vector<2x8x8x16xf32>
    %50 = vector.shape_cast %49 : vector<2x8x8x16xf32> to vector<128x16xf32>
    %c0_42 = arith.constant 0 : index
    %c16 = arith.constant 16 : index
    %51 = vector.load %arg6[%c0_42, %c16] : memref<128x144xf32, #tpu.memory_space<vmem>>, vector<128x16xf32>
    tpu.vector_store %arg6[%c0_42, %c16], %50 {strides = array<i32>} : memref<128x144xf32, #tpu.memory_space<vmem>>, vector<128x16xf32>,
    %c0_43 = arith.constant 0 : index
    %c0_44 = arith.constant 0 : index
    %c2 = arith.constant 2 : index
    %c0_45 = arith.constant 0 : index
    %52 = vector.load %arg5[%c0_43, %c0_44, %c2, %c0_45] : memref<2x10x10x16xf32, #tpu.memory_space<vmem>>, vector<2x8x8x16xf32>
    %53 = vector.shape_cast %52 : vector<2x8x8x16xf32> to vector<128x16xf32>
    %c0_46 = arith.constant 0 : index
    %c32 = arith.constant 32 : index
    %54 = vector.load %arg6[%c0_46, %c32] : memref<128x144xf32, #tpu.memory_space<vmem>>, vector<128x16xf32>
    tpu.vector_store %arg6[%c0_46, %c32], %53 {strides = array<i32>} : memref<128x144xf32, #tpu.memory_space<vmem>>, vector<128x16xf32>,
    %c0_47 = arith.constant 0 : index
    %c1_48 = arith.constant 1 : index
    %c0_49 = arith.constant 0 : index
    %c0_50 = arith.constant 0 : index
    %55 = vector.load %arg5[%c0_47, %c1_48, %c0_49, %c0_50] : memref<2x10x10x16xf32, #tpu.memory_space<vmem>>, vector<2x8x8x16xf32>
    %56 = vector.shape_cast %55 : vector<2x8x8x16xf32> to vector<128x16xf32>
    %c0_51 = arith.constant 0 : index
    %c48 = arith.constant 48 : index
    %57 = vector.load %arg6[%c0_51, %c48] : memref<128x144xf32, #tpu.memory_space<vmem>>, vector<128x16xf32>
    tpu.vector_store %arg6[%c0_51, %c48], %56 {strides = array<i32>} : memref<128x144xf32, #tpu.memory_space<vmem>>, vector<128x16xf32>,
    %c0_52 = arith.constant 0 : index
    %c1_53 = arith.constant 1 : index
    %c1_54 = arith.constant 1 : index
    %c0_55 = arith.constant 0 : index
    %58 = vector.load %arg5[%c0_52, %c1_53, %c1_54, %c0_55] : memref<2x10x10x16xf32, #tpu.memory_space<vmem>>, vector<2x8x8x16xf32>
    %59 = vector.shape_cast %58 : vector<2x8x8x16xf32> to vector<128x16xf32>
    %c0_56 = arith.constant 0 : index
    %c64 = arith.constant 64 : index
    %60 = vector.load %arg6[%c0_56, %c64] : memref<128x144xf32, #tpu.memory_space<vmem>>, vector<128x16xf32>
    tpu.vector_store %arg6[%c0_56, %c64], %59 {strides = array<i32>} : memref<128x144xf32, #tpu.memory_space<vmem>>, vector<128x16xf32>,
    %c0_57 = arith.constant 0 : index
    %c1_58 = arith.constant 1 : index
    %c2_59 = arith.constant 2 : index
    %c0_60 = arith.constant 0 : index
    %61 = vector.load %arg5[%c0_57, %c1_58, %c2_59, %c0_60] : memref<2x10x10x16xf32, #tpu.memory_space<vmem>>, vector<2x8x8x16xf32>
    %62 = vector.shape_cast %61 : vector<2x8x8x16xf32> to vector<128x16xf32>
    %c0_61 = arith.constant 0 : index
    %c80 = arith.constant 80 : index
    %63 = vector.load %arg6[%c0_61, %c80] : memref<128x144xf32, #tpu.memory_space<vmem>>, vector<128x16xf32>
    tpu.vector_store %arg6[%c0_61, %c80], %62 {strides = array<i32>} : memref<128x144xf32, #tpu.memory_space<vmem>>, vector<128x16xf32>,
    %c0_62 = arith.constant 0 : index
    %c2_63 = arith.constant 2 : index
    %c0_64 = arith.constant 0 : index
    %c0_65 = arith.constant 0 : index
    %64 = vector.load %arg5[%c0_62, %c2_63, %c0_64, %c0_65] : memref<2x10x10x16xf32, #tpu.memory_space<vmem>>, vector<2x8x8x16xf32>
    %65 = vector.shape_cast %64 : vector<2x8x8x16xf32> to vector<128x16xf32>
    %c0_66 = arith.constant 0 : index
    %c96 = arith.constant 96 : index
    %66 = vector.load %arg6[%c0_66, %c96] : memref<128x144xf32, #tpu.memory_space<vmem>>, vector<128x16xf32>
    tpu.vector_store %arg6[%c0_66, %c96], %65 {strides = array<i32>} : memref<128x144xf32, #tpu.memory_space<vmem>>, vector<128x16xf32>,
    %c0_67 = arith.constant 0 : index
    %c2_68 = arith.constant 2 : index
    %c1_69 = arith.constant 1 : index
    %c0_70 = arith.constant 0 : index
    %67 = vector.load %arg5[%c0_67, %c2_68, %c1_69, %c0_70] : memref<2x10x10x16xf32, #tpu.memory_space<vmem>>, vector<2x8x8x16xf32>
    %68 = vector.shape_cast %67 : vector<2x8x8x16xf32> to vector<128x16xf32>
    %c0_71 = arith.constant 0 : index
    %c112 = arith.constant 112 : index
    %69 = vector.load %arg6[%c0_71, %c112] : memref<128x144xf32, #tpu.memory_space<vmem>>, vector<128x16xf32>
    tpu.vector_store %arg6[%c0_71, %c112], %68 {strides = array<i32>} : memref<128x144xf32, #tpu.memory_space<vmem>>, vector<128x16xf32>,
    %c0_72 = arith.constant 0 : index
    %c2_73 = arith.constant 2 : index
    %c2_74 = arith.constant 2 : index
    %c0_75 = arith.constant 0 : index
    %70 = vector.load %arg5[%c0_72, %c2_73, %c2_74, %c0_75] : memref<2x10x10x16xf32, #tpu.memory_space<vmem>>, vector<2x8x8x16xf32>
    %71 = vector.shape_cast %70 : vector<2x8x8x16xf32> to vector<128x16xf32>
    %c0_76 = arith.constant 0 : index
    %c128 = arith.constant 128 : index
    %72 = vector.load %arg6[%c0_76, %c128] : memref<128x144xf32, #tpu.memory_space<vmem>>, vector<128x16xf32>
    tpu.vector_store %arg6[%c0_76, %c128], %71 {strides = array<i32>} : memref<128x144xf32, #tpu.memory_space<vmem>>, vector<128x16xf32>,
    %c0_77 = arith.constant 0 : index
    %c0_78 = arith.constant 0 : index
    %73 = vector.load %arg6[%c0_77, %c0_78] : memref<128x144xf32, #tpu.memory_space<vmem>>, vector<128x144xf32>
    %c1_79 = arith.constant 1 : index
    %c0_80 = arith.constant 0 : index
    %c0_81 = arith.constant 0 : index
    %74 = vector.load %arg1[%c1_79, %c0_80, %c0_81] : memref<3x144x16xf32, #tpu.memory_space<vmem>>, vector<1x144x16xf32>
    %75 = vector.shape_cast %74 : vector<1x144x16xf32> to vector<144x16xf32>
    %cst_82 = arith.constant dense<0.000000e+00> : vector<128x16xf32>
    %76 = tpu.matmul %73, %75, %cst_82 {dimension_numbers = #tpu.dot_dimension_numbers<[1], [0], [0], [1], [0, 0, 1, 1], [], []>} : vector<128x144xf32>, vector<144x16xf32>, vector<128x16xf32> -> vector<128x16xf32>
    %77 = vector.extract_strided_slice %0 {offsets = [2, 0], sizes = [1, 16], strides = [1, 1]} : vector<8x16xf32> to vector<1x16xf32>
    %78 = vector.extract_strided_slice %0 {offsets = [3, 0], sizes = [1, 16], strides = [1, 1]} : vector<8x16xf32> to vector<1x16xf32>
    %cst_83 = arith.constant dense<0.000000e+00> : vector<16xf32>
    %79 = vector.multi_reduction <add>, %76, %cst_83 [0] : vector<128x16xf32> to vector<16xf32>
    %cst_84 = arith.constant 7.812500e-03 : f32
    %80 = vector.broadcast %cst_84 : f32 to vector<16xf32>
    %81 = arith.mulf %79, %80 : vector<16xf32>
    %82 = vector.shape_cast %81 : vector<16xf32> to vector<1x16xf32>
    %83 = vector.broadcast %82 : vector<1x16xf32> to vector<128x16xf32>
    %84 = arith.subf %76, %83 : vector<128x16xf32>
    %85 = arith.mulf %84, %84 : vector<128x16xf32>
    %cst_85 = arith.constant dense<0.000000e+00> : vector<16xf32>
    %86 = vector.multi_reduction <add>, %85, %cst_85 [0] : vector<128x16xf32> to vector<16xf32>
    %cst_86 = arith.constant 7.812500e-03 : f32
    %87 = vector.broadcast %cst_86 : f32 to vector<16xf32>
    %88 = arith.mulf %86, %87 : vector<16xf32>
    %cst_87 = arith.constant 9.99999974E-6 : f32
    %89 = vector.broadcast %cst_87 : f32 to vector<16xf32>
    %90 = arith.addf %88, %89 : vector<16xf32>
    %91 = math.rsqrt %90 : vector<16xf32>
    %92 = vector.shape_cast %91 : vector<16xf32> to vector<1x16xf32>
    %93 = arith.mulf %77, %92 : vector<1x16xf32>
    %94 = vector.shape_cast %81 : vector<16xf32> to vector<1x16xf32>
    %95 = arith.mulf %94, %93 : vector<1x16xf32>
    %96 = arith.subf %78, %95 : vector<1x16xf32>
    %97 = vector.broadcast %93 : vector<1x16xf32> to vector<128x16xf32>
    %98 = arith.mulf %76, %97 : vector<128x16xf32>
    %99 = vector.broadcast %96 : vector<1x16xf32> to vector<128x16xf32>
    %100 = arith.addf %98, %99 : vector<128x16xf32>
    %cst_88 = arith.constant 0.000000e+00 : f32
    %101 = vector.broadcast %cst_88 : f32 to vector<128x16xf32>
    %102 = arith.maximumf %100, %101 : vector<128x16xf32>
    %103 = vector.shape_cast %102 : vector<128x16xf32> to vector<2x8x8x16xf32>
    %c0_89 = arith.constant 0 : index
    %c1_90 = arith.constant 1 : index
    %c1_91 = arith.constant 1 : index
    %c0_92 = arith.constant 0 : index
    %104 = vector.load %arg5[%c0_89, %c1_90, %c1_91, %c0_92] : memref<2x10x10x16xf32, #tpu.memory_space<vmem>>, vector<2x8x8x16xf32>
    tpu.vector_store %arg5[%c0_89, %c1_90, %c1_91, %c0_92], %103 {strides = array<i32>} : memref<2x10x10x16xf32, #tpu.memory_space<vmem>>, vector<2x8x8x16xf32>,
    %c0_93 = arith.constant 0 : index
    %c0_94 = arith.constant 0 : index
    %c0_95 = arith.constant 0 : index
    %c0_96 = arith.constant 0 : index
    %105 = vector.load %arg5[%c0_93, %c0_94, %c0_95, %c0_96] : memref<2x10x10x16xf32, #tpu.memory_space<vmem>>, vector<2x10x10x16xf32>
    %106 = vector.shape_cast %105 : vector<2x10x10x16xf32> to vector<2x5x2x10x16xf32>
    %107 = vector.extract_strided_slice %106 {offsets = [0, 0, 0, 0, 0], sizes = [2, 5, 1, 10, 16], strides = [1, 1, 1, 1, 1]} : vector<2x5x2x10x16xf32> to vector<2x5x1x10x16xf32>
    %108 = vector.shape_cast %107 : vector<2x5x1x10x16xf32> to vector<2x5x10x16xf32>
    %109 = vector.extract_strided_slice %106 {offsets = [0, 0, 1, 0, 0], sizes = [2, 5, 1, 10, 16], strides = [1, 1, 1, 1, 1]} : vector<2x5x2x10x16xf32> to vector<2x5x1x10x16xf32>
    %110 = vector.shape_cast %109 : vector<2x5x1x10x16xf32> to vector<2x5x10x16xf32>
    %111 = arith.maximumf %108, %110 : vector<2x5x10x16xf32>
    %c0_97 = arith.constant 0 : index
    %c0_98 = arith.constant 0 : index
    %c0_99 = arith.constant 0 : index
    %c0_100 = arith.constant 0 : index
    %112 = vector.load %arg7[%c0_97, %c0_98, %c0_99, %c0_100] : memref<2x5x10x16xf32, #tpu.memory_space<vmem>>, vector<2x5x10x16xf32>
    tpu.vector_store %arg7[%c0_97, %c0_98, %c0_99, %c0_100], %111 {strides = array<i32>} : memref<2x5x10x16xf32, #tpu.memory_space<vmem>>, vector<2x5x10x16xf32>,
    %c0_101 = arith.constant 0 : index
    %c0_102 = arith.constant 0 : index
    %c0_103 = arith.constant 0 : index
    %c0_104 = arith.constant 0 : index
    %113 = tpu.strided_load %arg7[%c0_101, %c0_102, %c0_103, %c0_104] {strides = array<i32: 1, 1, 2, 1>} : memref<2x5x10x16xf32, #tpu.memory_space<vmem>>, vector<2x5x5x16xf32>
    %c0_105 = arith.constant 0 : index
    %c0_106 = arith.constant 0 : index
    %c1_107 = arith.constant 1 : index
    %c0_108 = arith.constant 0 : index
    %114 = tpu.strided_load %arg7[%c0_105, %c0_106, %c1_107, %c0_108] {strides = array<i32: 1, 1, 2, 1>} : memref<2x5x10x16xf32, #tpu.memory_space<vmem>>, vector<2x5x5x16xf32>
    %115 = arith.maximumf %113, %114 : vector<2x5x5x16xf32>
    %cst_109 = arith.constant 0.000000e+00 : f32
    %116 = vector.broadcast %cst_109 : f32 to vector<2x7x10x16xf32>
    %c0_110 = arith.constant 0 : index
    %c0_111 = arith.constant 0 : index
    %c0_112 = arith.constant 0 : index
    %c0_113 = arith.constant 0 : index
    %117 = vector.load %arg8[%c0_110, %c0_111, %c0_112, %c0_113] : memref<2x7x10x16xf32, #tpu.memory_space<vmem>>, vector<2x7x10x16xf32>
    tpu.vector_store %arg8[%c0_110, %c0_111, %c0_112, %c0_113], %116 {strides = array<i32>} : memref<2x7x10x16xf32, #tpu.memory_space<vmem>>, vector<2x7x10x16xf32>,
    %c0_114 = arith.constant 0 : index
    %c1_115 = arith.constant 1 : index
    %c1_116 = arith.constant 1 : index
    %c0_117 = arith.constant 0 : index
    %118 = vector.load %arg8[%c0_114, %c1_115, %c1_116, %c0_117] : memref<2x7x10x16xf32, #tpu.memory_space<vmem>>, vector<2x5x5x16xf32>
    tpu.vector_store %arg8[%c0_114, %c1_115, %c1_116, %c0_117], %115 {strides = array<i32>} : memref<2x7x10x16xf32, #tpu.memory_space<vmem>>, vector<2x5x5x16xf32>,
    %c0_118 = arith.constant 0 : index
    %c0_119 = arith.constant 0 : index
    %c0_120 = arith.constant 0 : index
    %c0_121 = arith.constant 0 : index
    %119 = vector.load %arg8[%c0_118, %c0_119, %c0_120, %c0_121] : memref<2x7x10x16xf32, #tpu.memory_space<vmem>>, vector<2x5x8x16xf32>
    %120 = vector.shape_cast %119 : vector<2x5x8x16xf32> to vector<80x16xf32>
    %c0_122 = arith.constant 0 : index
    %c0_123 = arith.constant 0 : index
    %121 = vector.load %arg9[%c0_122, %c0_123] : memref<80x144xf32, #tpu.memory_space<vmem>>, vector<80x16xf32>
    tpu.vector_store %arg9[%c0_122, %c0_123], %120 {strides = array<i32>} : memref<80x144xf32, #tpu.memory_space<vmem>>, vector<80x16xf32>,
    %c0_124 = arith.constant 0 : index
    %c0_125 = arith.constant 0 : index
    %c1_126 = arith.constant 1 : index
    %c0_127 = arith.constant 0 : index
    %122 = vector.load %arg8[%c0_124, %c0_125, %c1_126, %c0_127] : memref<2x7x10x16xf32, #tpu.memory_space<vmem>>, vector<2x5x8x16xf32>
    %123 = vector.shape_cast %122 : vector<2x5x8x16xf32> to vector<80x16xf32>
    %c0_128 = arith.constant 0 : index
    %c16_129 = arith.constant 16 : index
    %124 = vector.load %arg9[%c0_128, %c16_129] : memref<80x144xf32, #tpu.memory_space<vmem>>, vector<80x16xf32>
    tpu.vector_store %arg9[%c0_128, %c16_129], %123 {strides = array<i32>} : memref<80x144xf32, #tpu.memory_space<vmem>>, vector<80x16xf32>,
    %c0_130 = arith.constant 0 : index
    %c0_131 = arith.constant 0 : index
    %c2_132 = arith.constant 2 : index
    %c0_133 = arith.constant 0 : index
    %125 = vector.load %arg8[%c0_130, %c0_131, %c2_132, %c0_133] : memref<2x7x10x16xf32, #tpu.memory_space<vmem>>, vector<2x5x8x16xf32>
    %126 = vector.shape_cast %125 : vector<2x5x8x16xf32> to vector<80x16xf32>
    %c0_134 = arith.constant 0 : index
    %c32_135 = arith.constant 32 : index
    %127 = vector.load %arg9[%c0_134, %c32_135] : memref<80x144xf32, #tpu.memory_space<vmem>>, vector<80x16xf32>
    tpu.vector_store %arg9[%c0_134, %c32_135], %126 {strides = array<i32>} : memref<80x144xf32, #tpu.memory_space<vmem>>, vector<80x16xf32>,
    %c0_136 = arith.constant 0 : index
    %c1_137 = arith.constant 1 : index
    %c0_138 = arith.constant 0 : index
    %c0_139 = arith.constant 0 : index
    %128 = vector.load %arg8[%c0_136, %c1_137, %c0_138, %c0_139] : memref<2x7x10x16xf32, #tpu.memory_space<vmem>>, vector<2x5x8x16xf32>
    %129 = vector.shape_cast %128 : vector<2x5x8x16xf32> to vector<80x16xf32>
    %c0_140 = arith.constant 0 : index
    %c48_141 = arith.constant 48 : index
    %130 = vector.load %arg9[%c0_140, %c48_141] : memref<80x144xf32, #tpu.memory_space<vmem>>, vector<80x16xf32>
    tpu.vector_store %arg9[%c0_140, %c48_141], %129 {strides = array<i32>} : memref<80x144xf32, #tpu.memory_space<vmem>>, vector<80x16xf32>,
    %c0_142 = arith.constant 0 : index
    %c1_143 = arith.constant 1 : index
    %c1_144 = arith.constant 1 : index
    %c0_145 = arith.constant 0 : index
    %131 = vector.load %arg8[%c0_142, %c1_143, %c1_144, %c0_145] : memref<2x7x10x16xf32, #tpu.memory_space<vmem>>, vector<2x5x8x16xf32>
    %132 = vector.shape_cast %131 : vector<2x5x8x16xf32> to vector<80x16xf32>
    %c0_146 = arith.constant 0 : index
    %c64_147 = arith.constant 64 : index
    %133 = vector.load %arg9[%c0_146, %c64_147] : memref<80x144xf32, #tpu.memory_space<vmem>>, vector<80x16xf32>
    tpu.vector_store %arg9[%c0_146, %c64_147], %132 {strides = array<i32>} : memref<80x144xf32, #tpu.memory_space<vmem>>, vector<80x16xf32>,
    %c0_148 = arith.constant 0 : index
    %c1_149 = arith.constant 1 : index
    %c2_150 = arith.constant 2 : index
    %c0_151 = arith.constant 0 : index
    %134 = vector.load %arg8[%c0_148, %c1_149, %c2_150, %c0_151] : memref<2x7x10x16xf32, #tpu.memory_space<vmem>>, vector<2x5x8x16xf32>
    %135 = vector.shape_cast %134 : vector<2x5x8x16xf32> to vector<80x16xf32>
    %c0_152 = arith.constant 0 : index
    %c80_153 = arith.constant 80 : index
    %136 = vector.load %arg9[%c0_152, %c80_153] : memref<80x144xf32, #tpu.memory_space<vmem>>, vector<80x16xf32>
    tpu.vector_store %arg9[%c0_152, %c80_153], %135 {strides = array<i32>} : memref<80x144xf32, #tpu.memory_space<vmem>>, vector<80x16xf32>,
    %c0_154 = arith.constant 0 : index
    %c2_155 = arith.constant 2 : index
    %c0_156 = arith.constant 0 : index
    %c0_157 = arith.constant 0 : index
    %137 = vector.load %arg8[%c0_154, %c2_155, %c0_156, %c0_157] : memref<2x7x10x16xf32, #tpu.memory_space<vmem>>, vector<2x5x8x16xf32>
    %138 = vector.shape_cast %137 : vector<2x5x8x16xf32> to vector<80x16xf32>
    %c0_158 = arith.constant 0 : index
    %c96_159 = arith.constant 96 : index
    %139 = vector.load %arg9[%c0_158, %c96_159] : memref<80x144xf32, #tpu.memory_space<vmem>>, vector<80x16xf32>
    tpu.vector_store %arg9[%c0_158, %c96_159], %138 {strides = array<i32>} : memref<80x144xf32, #tpu.memory_space<vmem>>, vector<80x16xf32>,
    %c0_160 = arith.constant 0 : index
    %c2_161 = arith.constant 2 : index
    %c1_162 = arith.constant 1 : index
    %c0_163 = arith.constant 0 : index
    %140 = vector.load %arg8[%c0_160, %c2_161, %c1_162, %c0_163] : memref<2x7x10x16xf32, #tpu.memory_space<vmem>>, vector<2x5x8x16xf32>
    %141 = vector.shape_cast %140 : vector<2x5x8x16xf32> to vector<80x16xf32>
    %c0_164 = arith.constant 0 : index
    %c112_165 = arith.constant 112 : index
    %142 = vector.load %arg9[%c0_164, %c112_165] : memref<80x144xf32, #tpu.memory_space<vmem>>, vector<80x16xf32>
    tpu.vector_store %arg9[%c0_164, %c112_165], %141 {strides = array<i32>} : memref<80x144xf32, #tpu.memory_space<vmem>>, vector<80x16xf32>,
    %c0_166 = arith.constant 0 : index
    %c2_167 = arith.constant 2 : index
    %c2_168 = arith.constant 2 : index
    %c0_169 = arith.constant 0 : index
    %143 = vector.load %arg8[%c0_166, %c2_167, %c2_168, %c0_169] : memref<2x7x10x16xf32, #tpu.memory_space<vmem>>, vector<2x5x8x16xf32>
    %144 = vector.shape_cast %143 : vector<2x5x8x16xf32> to vector<80x16xf32>
    %c0_170 = arith.constant 0 : index
    %c128_171 = arith.constant 128 : index
    %145 = vector.load %arg9[%c0_170, %c128_171] : memref<80x144xf32, #tpu.memory_space<vmem>>, vector<80x16xf32>
    tpu.vector_store %arg9[%c0_170, %c128_171], %144 {strides = array<i32>} : memref<80x144xf32, #tpu.memory_space<vmem>>, vector<80x16xf32>,
    %c0_172 = arith.constant 0 : index
    %c0_173 = arith.constant 0 : index
    %146 = vector.load %arg9[%c0_172, %c0_173] : memref<80x144xf32, #tpu.memory_space<vmem>>, vector<80x144xf32>
    %c2_174 = arith.constant 2 : index
    %c0_175 = arith.constant 0 : index
    %c0_176 = arith.constant 0 : index
    %147 = vector.load %arg1[%c2_174, %c0_175, %c0_176] : memref<3x144x16xf32, #tpu.memory_space<vmem>>, vector<1x144x16xf32>
    %148 = vector.shape_cast %147 : vector<1x144x16xf32> to vector<144x16xf32>
    %cst_177 = arith.constant dense<0.000000e+00> : vector<80x16xf32>
    %149 = tpu.matmul %146, %148, %cst_177 {dimension_numbers = #tpu.dot_dimension_numbers<[1], [0], [0], [1], [0, 0, 1, 1], [], []>} : vector<80x144xf32>, vector<144x16xf32>, vector<80x16xf32> -> vector<80x16xf32>
    %150 = vector.shape_cast %149 : vector<80x16xf32> to vector<2x5x8x16xf32>
    %151 = vector.extract_strided_slice %150 {offsets = [0, 0, 0, 0], sizes = [2, 5, 5, 16], strides = [1, 1, 1, 1]} : vector<2x5x8x16xf32> to vector<2x5x5x16xf32>
    %152 = vector.extract_strided_slice %0 {offsets = [4, 0], sizes = [1, 16], strides = [1, 1]} : vector<8x16xf32> to vector<1x16xf32>
    %153 = vector.extract_strided_slice %0 {offsets = [5, 0], sizes = [1, 16], strides = [1, 1]} : vector<8x16xf32> to vector<1x16xf32>
    %cst_178 = arith.constant dense<0.000000e+00> : vector<5x5x16xf32>
    %154 = vector.multi_reduction <add>, %151, %cst_178 [0] : vector<2x5x5x16xf32> to vector<5x5x16xf32>
    %cst_179 = arith.constant dense<0.000000e+00> : vector<5x16xf32>
    %155 = vector.multi_reduction <add>, %154, %cst_179 [0] : vector<5x5x16xf32> to vector<5x16xf32>
    %cst_180 = arith.constant dense<0.000000e+00> : vector<16xf32>
    %156 = vector.multi_reduction <add>, %155, %cst_180 [0] : vector<5x16xf32> to vector<16xf32>
    %cst_181 = arith.constant 2.000000e-02 : f32
    %157 = vector.broadcast %cst_181 : f32 to vector<16xf32>
    %158 = arith.mulf %156, %157 : vector<16xf32>
    %159 = vector.shape_cast %158 : vector<16xf32> to vector<1x1x1x16xf32>
    %160 = vector.broadcast %159 : vector<1x1x1x16xf32> to vector<2x5x5x16xf32>
    %161 = arith.subf %151, %160 : vector<2x5x5x16xf32>
    %162 = arith.mulf %161, %161 : vector<2x5x5x16xf32>
    %cst_182 = arith.constant dense<0.000000e+00> : vector<5x5x16xf32>
    %163 = vector.multi_reduction <add>, %162, %cst_182 [0] : vector<2x5x5x16xf32> to vector<5x5x16xf32>
    %cst_183 = arith.constant dense<0.000000e+00> : vector<5x16xf32>
    %164 = vector.multi_reduction <add>, %163, %cst_183 [0] : vector<5x5x16xf32> to vector<5x16xf32>
    %cst_184 = arith.constant dense<0.000000e+00> : vector<16xf32>
    %165 = vector.multi_reduction <add>, %164, %cst_184 [0] : vector<5x16xf32> to vector<16xf32>
    %cst_185 = arith.constant 2.000000e-02 : f32
    %166 = vector.broadcast %cst_185 : f32 to vector<16xf32>
    %167 = arith.mulf %165, %166 : vector<16xf32>
    %cst_186 = arith.constant 9.99999974E-6 : f32
    %168 = vector.broadcast %cst_186 : f32 to vector<16xf32>
    %169 = arith.addf %167, %168 : vector<16xf32>
    %170 = math.rsqrt %169 : vector<16xf32>
    %171 = vector.shape_cast %170 : vector<16xf32> to vector<1x16xf32>
    %172 = arith.mulf %152, %171 : vector<1x16xf32>
    %173 = vector.shape_cast %158 : vector<16xf32> to vector<1x16xf32>
    %174 = arith.mulf %173, %172 : vector<1x16xf32>
    %175 = arith.subf %153, %174 : vector<1x16xf32>
    %176 = vector.broadcast %172 : vector<1x16xf32> to vector<80x16xf32>
    %177 = arith.mulf %149, %176 : vector<80x16xf32>
    %178 = vector.broadcast %175 : vector<1x16xf32> to vector<80x16xf32>
    %179 = arith.addf %177, %178 : vector<80x16xf32>
    %cst_187 = arith.constant 0.000000e+00 : f32
    %180 = vector.broadcast %cst_187 : f32 to vector<80x16xf32>
    %181 = arith.maximumf %179, %180 : vector<80x16xf32>
    %182 = vector.shape_cast %181 : vector<80x16xf32> to vector<2x5x8x16xf32>
    %183 = vector.extract_strided_slice %182 {offsets = [0, 0, 0, 0], sizes = [2, 4, 8, 16], strides = [1, 1, 1, 1]} : vector<2x5x8x16xf32> to vector<2x4x8x16xf32>
    %184 = vector.shape_cast %183 : vector<2x4x8x16xf32> to vector<2x2x2x8x16xf32>
    %185 = vector.extract_strided_slice %184 {offsets = [0, 0, 0, 0, 0], sizes = [2, 2, 1, 8, 16], strides = [1, 1, 1, 1, 1]} : vector<2x2x2x8x16xf32> to vector<2x2x1x8x16xf32>
    %186 = vector.shape_cast %185 : vector<2x2x1x8x16xf32> to vector<2x2x8x16xf32>
    %187 = vector.extract_strided_slice %184 {offsets = [0, 0, 1, 0, 0], sizes = [2, 2, 1, 8, 16], strides = [1, 1, 1, 1, 1]} : vector<2x2x2x8x16xf32> to vector<2x2x1x8x16xf32>
    %188 = vector.shape_cast %187 : vector<2x2x1x8x16xf32> to vector<2x2x8x16xf32>
    %189 = arith.maximumf %186, %188 : vector<2x2x8x16xf32>
    %c0_188 = arith.constant 0 : index
    %c0_189 = arith.constant 0 : index
    %c0_190 = arith.constant 0 : index
    %c0_191 = arith.constant 0 : index
    %190 = vector.load %arg10[%c0_188, %c0_189, %c0_190, %c0_191] : memref<2x2x8x16xf32, #tpu.memory_space<vmem>>, vector<2x2x8x16xf32>
    tpu.vector_store %arg10[%c0_188, %c0_189, %c0_190, %c0_191], %189 {strides = array<i32>} : memref<2x2x8x16xf32, #tpu.memory_space<vmem>>, vector<2x2x8x16xf32>,
    %c0_192 = arith.constant 0 : index
    %c0_193 = arith.constant 0 : index
    %c0_194 = arith.constant 0 : index
    %c0_195 = arith.constant 0 : index
    %191 = tpu.strided_load %arg10[%c0_192, %c0_193, %c0_194, %c0_195] {strides = array<i32: 1, 1, 2, 1>} : memref<2x2x8x16xf32, #tpu.memory_space<vmem>>, vector<2x2x2x16xf32>
    %c0_196 = arith.constant 0 : index
    %c0_197 = arith.constant 0 : index
    %c1_198 = arith.constant 1 : index
    %c0_199 = arith.constant 0 : index
    %192 = tpu.strided_load %arg10[%c0_196, %c0_197, %c1_198, %c0_199] {strides = array<i32: 1, 1, 2, 1>} : memref<2x2x8x16xf32, #tpu.memory_space<vmem>>, vector<2x2x2x16xf32>
    %193 = arith.maximumf %191, %192 : vector<2x2x2x16xf32>
    %c0_200 = arith.constant 0 : index
    %c0_201 = arith.constant 0 : index
    %c0_202 = arith.constant 0 : index
    %c0_203 = arith.constant 0 : index
    %194 = vector.load %arg3[%c0_200, %c0_201, %c0_202, %c0_203] : memref<2x2x2x16xf32, #tpu.memory_space<vmem>>, vector<2x2x2x16xf32>
    tpu.vector_store %arg3[%c0_200, %c0_201, %c0_202, %c0_203], %193 {strides = array<i32>} : memref<2x2x2x16xf32, #tpu.memory_space<vmem>>, vector<2x2x2x16xf32>,
    return
  }
}

</mosaic_0001>

<llo_original>
// kernel: encoder_cnn_small.1
$region0: #{encoder_cnn_small.1}
  #allocation0 [shape = 'u32[]', space=smem, size = 0x4, offset = 0x4, fixed_abs, tag = 'smem constant byte address 0x4 - core index']
  #allocation1 [shape = 'u32[72,128]{1,0:T(1,128)}', space=vmem, size = 0x9000, scoped, tag = 'internal scratch']
  #allocation2 [shape = 'f32[2,8,16,16]{3,2,1,0:T(8,128)}', space=vmem, size = 0x20000, scoped, tag = 'scratch operand']
  #allocation3 [shape = 'f32[2,10,10,16]{3,2,1,0:T(8,128)}', space=vmem, size = 0x28000, scoped, tag = 'scratch operand']
  #allocation4 [shape = 'f32[128,144]{1,0:T(8,128)}', space=vmem, size = 0x20000, scoped, tag = 'scratch operand']
  #allocation5 [shape = 'f32[2,5,10,16]{3,2,1,0:T(8,128)}', space=vmem, size = 0x14000, scoped, tag = 'scratch operand']
  #allocation6 [shape = 'f32[2,7,10,16]{3,2,1,0:T(8,128)}', space=vmem, size = 0x1c000, scoped, tag = 'scratch operand']
  #allocation7 [shape = 'f32[80,144]{1,0:T(8,128)}', space=vmem, size = 0x14000, scoped, tag = 'scratch operand']
  #allocation8 [shape = 'f32[2,2,8,16]{3,2,1,0:T(8,128)}', space=vmem, size = 0x4000, scoped, tag = 'scratch operand']
  %s0 = inlined_call_operand.vmem [shape: f32[512,9], index: 0, kind: input, shape index: {}]
  %s1 = inlined_call_operand.vmem [shape: f32[3,144,16], index: 1, kind: input, shape index: {}]
  %s2 = inlined_call_operand.vmem [shape: f32[8,16], index: 2, kind: input, shape index: {}]
  %s3 = inlined_call_operand.hbm [shape: f32[2,2,2,16], index: 3, kind: output, shape index: {}]
  %s4 = sld [smem:[#allocation0]]
  $region22: #{encoder_cnn_small.1} parent=0
    _
  %s6 = ssub.s32 1, %s4
  %s7 = scalar_select 0, %s6, %s4
  $region1: #{encoder_cnn_small.1} parent=0
    #allocation9 [shape = 'u8[4096]{0}', space=vmem, size = 0x1000, scoped, tag = 'output window, operand 0, single buffered']
    #allocation10 [shape = 's32[1]{0}', space=sflag, size = 0x4, scoped, tag = 'scoped memory for encoder_cnn_small.1']
    %8 = vsyncpa [#allocation10], 0
    // Predicated region
    $region2: #{encoder_cnn_small.1} parent=1 // pred_check
      _
    $region3: #{encoder_cnn_small.1} parent=1 // pred_check_branch
      %10 = sbr.rel (0) target = $region5
    $region4: #{encoder_cnn_small.1} parent=1 // pred_region
      _
    $region5: #{encoder_cnn_small.1} parent=1 // pred_fallthru
      _
    // Predicated region
    $region6: #{encoder_cnn_small.1} parent=1 // pred_check
      _
    $region7: #{encoder_cnn_small.1} parent=1 // pred_check_branch
      %12 = sbr.rel (0) target = $region9
    $region8: #{encoder_cnn_small.1} parent=1 // pred_region
      _
    $region9: #{encoder_cnn_small.1} parent=1 // pred_fallthru
      _
    // Predicated region
    $region10: #{encoder_cnn_small.1} parent=1 // pred_check
      _
    $region11: #{encoder_cnn_small.1} parent=1 // pred_check_branch
      %14 = sbr.rel (0) target = $region13
    $region12: #{encoder_cnn_small.1} parent=1 // pred_region
      _
    $region13: #{encoder_cnn_small.1} parent=1 // pred_fallthru
      _
    %v15 = vld [vmem:[%s2] sm:$0xff]
    %v16 = vld [vmem:[%s1] sm:$0xff]
    %v17 = vld [vmem:[%s1 + $0x8] sm:$0xff]
    %v18 = vld [vmem:[%s0] sm:$0xff]
    %v19 = vld [vmem:[%s0 + $0x8] sm:$0xff]
    %v20 = vld [vmem:[%s0 + $0x10] sm:$0xff]
    %v21 = vld [vmem:[%s0 + $0x18] sm:$0xff]
    %v22 = vld [vmem:[%s0 + $0x20] sm:$0xff]
    %v23 = vld [vmem:[%s0 + $0x28] sm:$0xff]
    %v24 = vld [vmem:[%s0 + $0x30] sm:$0xff]
    %v25 = vld [vmem:[%s0 + $0x38] sm:$0xff]
    %v26 = vld [vmem:[%s0 + $0x40] sm:$0xff]
    %v27 = vld [vmem:[%s0 + $0x48] sm:$0xff]
    %v28 = vld [vmem:[%s0 + $0x50] sm:$0xff]
    %v29 = vld [vmem:[%s0 + $0x58] sm:$0xff]
    %v30 = vld [vmem:[%s0 + $0x60] sm:$0xff]
    %v31 = vld [vmem:[%s0 + $0x68] sm:$0xff]
    %v32 = vld [vmem:[%s0 + $0x70] sm:$0xff]
    %v33 = vld [vmem:[%s0 + $0x78] sm:$0xff]
    %v34 = vld [vmem:[%s0 + $0x80] sm:$0xff]
    %v35 = vld [vmem:[%s0 + $0x88] sm:$0xff]
    %v36 = vld [vmem:[%s0 + $0x90] sm:$0xff]
    %v37 = vld [vmem:[%s0 + $0x98] sm:$0xff]
    %v38 = vld [vmem:[%s0 + $0xa0] sm:$0xff]
    %v39 = vld [vmem:[%s0 + $0xa8] sm:$0xff]
    %v40 = vld [vmem:[%s0 + $0xb0] sm:$0xff]
    %v41 = vld [vmem:[%s0 + $0xb8] sm:$0xff]
    %v42 = vld [vmem:[%s0 + $0xc0] sm:$0xff]
    %v43 = vld [vmem:[%s0 + $0xc8] sm:$0xff]
    %v44 = vld [vmem:[%s0 + $0xd0] sm:$0xff]
    %v45 = vld [vmem:[%s0 + $0xd8] sm:$0xff]
    %v46 = vld [vmem:[%s0 + $0xe0] sm:$0xff]
    %v47 = vld [vmem:[%s0 + $0xe8] sm:$0xff]
    %v48 = vld [vmem:[%s0 + $0xf0] sm:$0xff]
    %v49 = vld [vmem:[%s0 + $0xf8] sm:$0xff]
    %v50 = vld [vmem:[%s0 + $0x100] sm:$0xff]
    %v51 = vld [vmem:[%s0 + $0x108] sm:$0xff]
    %v52 = vld [vmem:[%s0 + $0x110] sm:$0xff]
    %v53 = vld [vmem:[%s0 + $0x118] sm:$0xff]
    %v54 = vld [vmem:[%s0 + $0x120] sm:$0xff]
    %v55 = vld [vmem:[%s0 + $0x128] sm:$0xff]
    %v56 = vld [vmem:[%s0 + $0x130] sm:$0xff]
    %v57 = vld [vmem:[%s0 + $0x138] sm:$0xff]
    %v58 = vld [vmem:[%s0 + $0x140] sm:$0xff]
    %v59 = vld [vmem:[%s0 + $0x148] sm:$0xff]
    %v60 = vld [vmem:[%s0 + $0x150] sm:$0xff]
    %v61 = vld [vmem:[%s0 + $0x158] sm:$0xff]
    %v62 = vld [vmem:[%s0 + $0x160] sm:$0xff]
    %v63 = vld [vmem:[%s0 + $0x168] sm:$0xff]
    %v64 = vld [vmem:[%s0 + $0x170] sm:$0xff]
    %v65 = vld [vmem:[%s0 + $0x178] sm:$0xff]
    %v66 = vld [vmem:[%s0 + $0x180] sm:$0xff]
    %v67 = vld [vmem:[%s0 + $0x188] sm:$0xff]
    %v68 = vld [vmem:[%s0 + $0x190] sm:$0xff]
    %v69 = vld [vmem:[%s0 + $0x198] sm:$0xff]
    %v70 = vld [vmem:[%s0 + $0x1a0] sm:$0xff]
    %v71 = vld [vmem:[%s0 + $0x1a8] sm:$0xff]
    %v72 = vld [vmem:[%s0 + $0x1b0] sm:$0xff]
    %v73 = vld [vmem:[%s0 + $0x1b8] sm:$0xff]
    %v74 = vld [vmem:[%s0 + $0x1c0] sm:$0xff]
    %v75 = vld [vmem:[%s0 + $0x1c8] sm:$0xff]
    %v76 = vld [vmem:[%s0 + $0x1d0] sm:$0xff]
    %v77 = vld [vmem:[%s0 + $0x1d8] sm:$0xff]
    %v78 = vld [vmem:[%s0 + $0x1e0] sm:$0xff]
    %v79 = vld [vmem:[%s0 + $0x1e8] sm:$0xff]
    %v80 = vld [vmem:[%s0 + $0x1f0] sm:$0xff]
    %v81 = vld [vmem:[%s0 + $0x1f8] sm:$0xff]
    %vm82 = vcmask 72704
    %v84 = vsel %vm82, %v18, 0
    %v87 = vsel %vm82, %v19, 0
    %v90 = vsel %vm82, %v20, 0
    %v93 = vsel %vm82, %v21, 0
    %v96 = vsel %vm82, %v22, 0
    %v99 = vsel %vm82, %v23, 0
    %v102 = vsel %vm82, %v24, 0
    %v105 = vsel %vm82, %v25, 0
    %v108 = vsel %vm82, %v26, 0
    %v111 = vsel %vm82, %v27, 0
    %v114 = vsel %vm82, %v28, 0
    %v117 = vsel %vm82, %v29, 0
    %v120 = vsel %vm82, %v30, 0
    %v123 = vsel %vm82, %v31, 0
    %v126 = vsel %vm82, %v32, 0
    %v129 = vsel %vm82, %v33, 0
    %v132 = vsel %vm82, %v34, 0
    %v135 = vsel %vm82, %v35, 0
    %v138 = vsel %vm82, %v36, 0
    %v141 = vsel %vm82, %v37, 0
    %v144 = vsel %vm82, %v38, 0
    %v147 = vsel %vm82, %v39, 0
    %v150 = vsel %vm82, %v40, 0
    %v153 = vsel %vm82, %v41, 0
    %v156 = vsel %vm82, %v42, 0
    %v159 = vsel %vm82, %v43, 0
    %v162 = vsel %vm82, %v44, 0
    %v165 = vsel %vm82, %v45, 0
    %v168 = vsel %vm82, %v46, 0
    %v171 = vsel %vm82, %v47, 0
    %v174 = vsel %vm82, %v48, 0
    %v177 = vsel %vm82, %v49, 0
    %v180 = vsel %vm82, %v50, 0
    %v183 = vsel %vm82, %v51, 0
    %v186 = vsel %vm82, %v52, 0
    %v189 = vsel %vm82, %v53, 0
    %v192 = vsel %vm82, %v54, 0
    %v195 = vsel %vm82, %v55, 0
    %v198 = vsel %vm82, %v56, 0
    %v201 = vsel %vm82, %v57, 0
    %v204 = vsel %vm82, %v58, 0
    %v207 = vsel %vm82, %v59, 0
    %v210 = vsel %vm82, %v60, 0
    %v213 = vsel %vm82, %v61, 0
    %v216 = vsel %vm82, %v62, 0
    %v219 = vsel %vm82, %v63, 0
    %v222 = vsel %vm82, %v64, 0
    %v225 = vsel %vm82, %v65, 0
    %v228 = vsel %vm82, %v66, 0
    %v231 = vsel %vm82, %v67, 0
    %v234 = vsel %vm82, %v68, 0
    %v237 = vsel %vm82, %v69, 0
    %v240 = vsel %vm82, %v70, 0
    %v243 = vsel %vm82, %v71, 0
    %v246 = vsel %vm82, %v72, 0
    %v249 = vsel %vm82, %v73, 0
    %v252 = vsel %vm82, %v74, 0
    %v255 = vsel %vm82, %v75, 0
    %v258 = vsel %vm82, %v76, 0
    %v261 = vsel %vm82, %v77, 0
    %v264 = vsel %vm82, %v78, 0
    %v267 = vsel %vm82, %v79, 0
    %v270 = vsel %vm82, %v80, 0
    %v273 = vsel %vm82, %v81, 0
    %vm275 = vcmask 1040384
    %v277 = vsel %vm275, %v17, 0
    %279 = vmatpush.msra.mxu0 0.0
    %280 = vmatpush.msra.mxu0 0.0
    %281 = vmatpush.msra.mxu0 0.0
    %282 = vmatpush.msra.mxu0 0.0
    %283 = vmatpush.msra.mxu0 0.0
    %284 = vmatpush.msra.mxu0 0.0
    %285 = vmatpush.msra.mxu0 0.0
    %286 = vmatpush.msra.mxu0 0.0
    %287 = vmatpush.msra.mxu0 0.0
    %288 = vmatpush.msra.mxu0 0.0
    %289 = vmatpush.msra.mxu0 0.0
    %290 = vmatpush.msra.mxu0 0.0
    %291 = vmatpush.msra.mxu0 0.0
    %292 = vmatpush.msra.mxu0 0.0
    %293 = vmatpush.msra.mxu0 %v277
    %294 = vmatpush.msra.mxu0 %v16
    %295 = vmatmul.f32.gmra.mxu0 %v84
    %v296 = vpop.f32.mrf.mxu0
    %v297 = vadd.f32 0.0, %v296
    %298 = vmatmul.f32.gmra.mxu0 %v87
    %v299 = vpop.f32.mrf.mxu0
    %v300 = vadd.f32 0.0, %v299
    %301 = vmatmul.f32.gmra.mxu0 %v90
    %v302 = vpop.f32.mrf.mxu0
    %v303 = vadd.f32 0.0, %v302
    %304 = vmatmul.f32.gmra.mxu0 %v93
    %v305 = vpop.f32.mrf.mxu0
    %v306 = vadd.f32 0.0, %v305
    %307 = vmatmul.f32.gmra.mxu0 %v96
    %v308 = vpop.f32.mrf.mxu0
    %v309 = vadd.f32 0.0, %v308
    %310 = vmatmul.f32.gmra.mxu0 %v99
    %v311 = vpop.f32.mrf.mxu0
    %v312 = vadd.f32 0.0, %v311
    %313 = vmatmul.f32.gmra.mxu0 %v102
    %v314 = vpop.f32.mrf.mxu0
    %v315 = vadd.f32 0.0, %v314
    %316 = vmatmul.f32.gmra.mxu0 %v105
    %v317 = vpop.f32.mrf.mxu0
    %v318 = vadd.f32 0.0, %v317
    %319 = vmatmul.f32.gmra.mxu0 %v108
    %v320 = vpop.f32.mrf.mxu0
    %v321 = vadd.f32 0.0, %v320
    %322 = vmatmul.f32.gmra.mxu0 %v111
    %v323 = vpop.f32.mrf.mxu0
    %v324 = vadd.f32 0.0, %v323
    %325 = vmatmul.f32.gmra.mxu0 %v114
    %v326 = vpop.f32.mrf.mxu0
    %v327 = vadd.f32 0.0, %v326
    %328 = vmatmul.f32.gmra.mxu0 %v117
    %v329 = vpop.f32.mrf.mxu0
    %v330 = vadd.f32 0.0, %v329
    %331 = vmatmul.f32.gmra.mxu0 %v120
    %v332 = vpop.f32.mrf.mxu0
    %v333 = vadd.f32 0.0, %v332
    %334 = vmatmul.f32.gmra.mxu0 %v123
    %v335 = vpop.f32.mrf.mxu0
    %v336 = vadd.f32 0.0, %v335
    %337 = vmatmul.f32.gmra.mxu0 %v126
    %v338 = vpop.f32.mrf.mxu0
    %v339 = vadd.f32 0.0, %v338
    %340 = vmatmul.f32.gmra.mxu0 %v129
    %v341 = vpop.f32.mrf.mxu0
    %v342 = vadd.f32 0.0, %v341
    %343 = vmatmul.f32.gmra.mxu0 %v132
    %v344 = vpop.f32.mrf.mxu0
    %v345 = vadd.f32 0.0, %v344
    %346 = vmatmul.f32.gmra.mxu0 %v135
    %v347 = vpop.f32.mrf.mxu0
    %v348 = vadd.f32 0.0, %v347
    %349 = vmatmul.f32.gmra.mxu0 %v138
    %v350 = vpop.f32.mrf.mxu0
    %v351 = vadd.f32 0.0, %v350
    %352 = vmatmul.f32.gmra.mxu0 %v141
    %v353 = vpop.f32.mrf.mxu0
    %v354 = vadd.f32 0.0, %v353
    %355 = vmatmul.f32.gmra.mxu0 %v144
    %v356 = vpop.f32.mrf.mxu0
    %v357 = vadd.f32 0.0, %v356
    %358 = vmatmul.f32.gmra.mxu0 %v147
    %v359 = vpop.f32.mrf.mxu0
    %v360 = vadd.f32 0.0, %v359
    %361 = vmatmul.f32.gmra.mxu0 %v150
    %v362 = vpop.f32.mrf.mxu0
    %v363 = vadd.f32 0.0, %v362
    %364 = vmatmul.f32.gmra.mxu0 %v153
    %v365 = vpop.f32.mrf.mxu0
    %v366 = vadd.f32 0.0, %v365
    %367 = vmatmul.f32.gmra.mxu0 %v156
    %v368 = vpop.f32.mrf.mxu0
    %v369 = vadd.f32 0.0, %v368
    %370 = vmatmul.f32.gmra.mxu0 %v159
    %v371 = vpop.f32.mrf.mxu0
    %v372 = vadd.f32 0.0, %v371
    %373 = vmatmul.f32.gmra.mxu0 %v162
    %v374 = vpop.f32.mrf.mxu0
    %v375 = vadd.f32 0.0, %v374
    %376 = vmatmul.f32.gmra.mxu0 %v165
    %v377 = vpop.f32.mrf.mxu0
    %v378 = vadd.f32 0.0, %v377
    %379 = vmatmul.f32.gmra.mxu0 %v168
    %v380 = vpop.f32.mrf.mxu0
    %v381 = vadd.f32 0.0, %v380
    %382 = vmatmul.f32.gmra.mxu0 %v171
    %v383 = vpop.f32.mrf.mxu0
    %v384 = vadd.f32 0.0, %v383
    %385 = vmatmul.f32.gmra.mxu0 %v174
    %v386 = vpop.f32.mrf.mxu0
    %v387 = vadd.f32 0.0, %v386
    %388 = vmatmul.f32.gmra.mxu0 %v177
    %v389 = vpop.f32.mrf.mxu0
    %v390 = vadd.f32 0.0, %v389
    %391 = vmatmul.f32.gmra.mxu0 %v180
    %v392 = vpop.f32.mrf.mxu0
    %v393 = vadd.f32 0.0, %v392
    %394 = vmatmul.f32.gmra.mxu0 %v183
    %v395 = vpop.f32.mrf.mxu0
    %v396 = vadd.f32 0.0, %v395
    %397 = vmatmul.f32.gmra.mxu0 %v186
    %v398 = vpop.f32.mrf.mxu0
    %v399 = vadd.f32 0.0, %v398
    %400 = vmatmul.f32.gmra.mxu0 %v189
    %v401 = vpop.f32.mrf.mxu0
    %v402 = vadd.f32 0.0, %v401
    %403 = vmatmul.f32.gmra.mxu0 %v192
    %v404 = vpop.f32.mrf.mxu0
    %v405 = vadd.f32 0.0, %v404
    %406 = vmatmul.f32.gmra.mxu0 %v195
    %v407 = vpop.f32.mrf.mxu0
    %v408 = vadd.f32 0.0, %v407
    %409 = vmatmul.f32.gmra.mxu0 %v198
    %v410 = vpop.f32.mrf.mxu0
    %v411 = vadd.f32 0.0, %v410
    %412 = vmatmul.f32.gmra.mxu0 %v201
    %v413 = vpop.f32.mrf.mxu0
    %v414 = vadd.f32 0.0, %v413
    %415 = vmatmul.f32.gmra.mxu0 %v204
    %v416 = vpop.f32.mrf.mxu0
    %v417 = vadd.f32 0.0, %v416
    %418 = vmatmul.f32.gmra.mxu0 %v207
    %v419 = vpop.f32.mrf.mxu0
    %v420 = vadd.f32 0.0, %v419
    %421 = vmatmul.f32.gmra.mxu0 %v210
    %v422 = vpop.f32.mrf.mxu0
    %v423 = vadd.f32 0.0, %v422
    %424 = vmatmul.f32.gmra.mxu0 %v213
    %v425 = vpop.f32.mrf.mxu0
    %v426 = vadd.f32 0.0, %v425
    %427 = vmatmul.f32.gmra.mxu0 %v216
    %v428 = vpop.f32.mrf.mxu0
    %v429 = vadd.f32 0.0, %v428
    %430 = vmatmul.f32.gmra.mxu0 %v219
    %v431 = vpop.f32.mrf.mxu0
    %v432 = vadd.f32 0.0, %v431
    %433 = vmatmul.f32.gmra.mxu0 %v222
    %v434 = vpop.f32.mrf.mxu0
    %v435 = vadd.f32 0.0, %v434
    %436 = vmatmul.f32.gmra.mxu0 %v225
    %v437 = vpop.f32.mrf.mxu0
    %v438 = vadd.f32 0.0, %v437
    %439 = vmatmul.f32.gmra.mxu0 %v228
    %v440 = vpop.f32.mrf.mxu0
    %v441 = vadd.f32 0.0, %v440
    %442 = vmatmul.f32.gmra.mxu0 %v231
    %v443 = vpop.f32.mrf.mxu0
    %v444 = vadd.f32 0.0, %v443
    %445 = vmatmul.f32.gmra.mxu0 %v234
    %v446 = vpop.f32.mrf.mxu0
    %v447 = vadd.f32 0.0, %v446
    %448 = vmatmul.f32.gmra.mxu0 %v237
    %v449 = vpop.f32.mrf.mxu0
    %v450 = vadd.f32 0.0, %v449
    %451 = vmatmul.f32.gmra.mxu0 %v240
    %v452 = vpop.f32.mrf.mxu0
    %v453 = vadd.f32 0.0, %v452
    %454 = vmatmul.f32.gmra.mxu0 %v243
    %v455 = vpop.f32.mrf.mxu0
    %v456 = vadd.f32 0.0, %v455
    %457 = vmatmul.f32.gmra.mxu0 %v246
    %v458 = vpop.f32.mrf.mxu0
    %v459 = vadd.f32 0.0, %v458
    %460 = vmatmul.f32.gmra.mxu0 %v249
    %v461 = vpop.f32.mrf.mxu0
    %v462 = vadd.f32 0.0, %v461
    %463 = vmatmul.f32.gmra.mxu0 %v252
    %v464 = vpop.f32.mrf.mxu0
    %v465 = vadd.f32 0.0, %v464
    %466 = vmatmul.f32.gmra.mxu0 %v255
    %v467 = vpop.f32.mrf.mxu0
    %v468 = vadd.f32 0.0, %v467
    %469 = vmatmul.f32.gmra.mxu0 %v258
    %v470 = vpop.f32.mrf.mxu0
    %v471 = vadd.f32 0.0, %v470
    %472 = vmatmul.f32.gmra.mxu0 %v261
    %v473 = vpop.f32.mrf.mxu0
    %v474 = vadd.f32 0.0, %v473
    %475 = vmatmul.f32.gmra.mxu0 %v264
    %v476 = vpop.f32.mrf.mxu0
    %v477 = vadd.f32 0.0, %v476
    %478 = vmatmul.f32.gmra.mxu0 %v267
    %v479 = vpop.f32.mrf.mxu0
    %v480 = vadd.f32 0.0, %v479
    %481 = vmatmul.f32.gmra.mxu0 %v270
    %v482 = vpop.f32.mrf.mxu0
    %v483 = vadd.f32 0.0, %v482
    %484 = vmatmul.f32.gmra.mxu0 %v273
    %v485 = vpop.f32.mrf.mxu0
    %v486 = vadd.f32 0.0, %v485
    %487 = vdwg.mxu0
    %vm488 = vcmask 130048
    %v489 = vsel %vm488, %v297, 0.0
    %v490 = vsel %vm488, %v300, 0.0
    %v491 = vadd.f32 %v489, %v490
    %v492 = vsel %vm488, %v303, 0.0
    %v493 = vadd.f32 %v491, %v492
    %v494 = vsel %vm488, %v306, 0.0
    %v495 = vadd.f32 %v493, %v494
    %v496 = vsel %vm488, %v309, 0.0
    %v497 = vadd.f32 %v495, %v496
    %v498 = vsel %vm488, %v312, 0.0
    %v499 = vadd.f32 %v497, %v498
    %v500 = vsel %vm488, %v315, 0.0
    %v501 = vadd.f32 %v499, %v500
    %v502 = vsel %vm488, %v318, 0.0
    %v503 = vadd.f32 %v501, %v502
    %v504 = vsel %vm488, %v321, 0.0
    %v505 = vadd.f32 %v503, %v504
    %v506 = vsel %vm488, %v324, 0.0
    %v507 = vadd.f32 %v505, %v506
    %v508 = vsel %vm488, %v327, 0.0
    %v509 = vadd.f32 %v507, %v508
    %v510 = vsel %vm488, %v330, 0.0
    %v511 = vadd.f32 %v509, %v510
    %v512 = vsel %vm488, %v333, 0.0
    %v513 = vadd.f32 %v511, %v512
    %v514 = vsel %vm488, %v336, 0.0
    %v515 = vadd.f32 %v513, %v514
    %v516 = vsel %vm488, %v339, 0.0
    %v517 = vadd.f32 %v515, %v516
    %v518 = vsel %vm488, %v342, 0.0
    %v519 = vadd.f32 %v517, %v518
    %v520 = vsel %vm488, %v345, 0.0
    %v521 = vadd.f32 %v519, %v520
    %v522 = vsel %vm488, %v348, 0.0
    %v523 = vadd.f32 %v521, %v522
    %v524 = vsel %vm488, %v351, 0.0
    %v525 = vadd.f32 %v523, %v524
    %v526 = vsel %vm488, %v354, 0.0
    %v527 = vadd.f32 %v525, %v526
    %v528 = vsel %vm488, %v357, 0.0
    %v529 = vadd.f32 %v527, %v528
    %v530 = vsel %vm488, %v360, 0.0
    %v531 = vadd.f32 %v529, %v530
    %v532 = vsel %vm488, %v363, 0.0
    %v533 = vadd.f32 %v531, %v532
    %v534 = vsel %vm488, %v366, 0.0
    %v535 = vadd.f32 %v533, %v534
    %v536 = vsel %vm488, %v369, 0.0
    %v537 = vadd.f32 %v535, %v536
    %v538 = vsel %vm488, %v372, 0.0
    %v539 = vadd.f32 %v537, %v538
    %v540 = vsel %vm488, %v375, 0.0
    %v541 = vadd.f32 %v539, %v540
    %v542 = vsel %vm488, %v378, 0.0
    %v543 = vadd.f32 %v541, %v542
    %v544 = vsel %vm488, %v381, 0.0
    %v545 = vadd.f32 %v543, %v544
    %v546 = vsel %vm488, %v384, 0.0
    %v547 = vadd.f32 %v545, %v546
    %v548 = vsel %vm488, %v387, 0.0
    %v549 = vadd.f32 %v547, %v548
    %v550 = vsel %vm488, %v390, 0.0
    %v551 = vadd.f32 %v549, %v550
    %v552 = vsel %vm488, %v393, 0.0
    %v553 = vadd.f32 %v551, %v552
    %v554 = vsel %vm488, %v396, 0.0
    %v555 = vadd.f32 %v553, %v554
    %v556 = vsel %vm488, %v399, 0.0
    %v557 = vadd.f32 %v555, %v556
    %v558 = vsel %vm488, %v402, 0.0
    %v559 = vadd.f32 %v557, %v558
    %v560 = vsel %vm488, %v405, 0.0
    %v561 = vadd.f32 %v559, %v560
    %v562 = vsel %vm488, %v408, 0.0
    %v563 = vadd.f32 %v561, %v562
    %v564 = vsel %vm488, %v411, 0.0
    %v565 = vadd.f32 %v563, %v564
    %v566 = vsel %vm488, %v414, 0.0
    %v567 = vadd.f32 %v565, %v566
    %v568 = vsel %vm488, %v417, 0.0
    %v569 = vadd.f32 %v567, %v568
    %v570 = vsel %vm488, %v420, 0.0
    %v571 = vadd.f32 %v569, %v570
    %v572 = vsel %vm488, %v423, 0.0
    %v573 = vadd.f32 %v571, %v572
    %v574 = vsel %vm488, %v426, 0.0
    %v575 = vadd.f32 %v573, %v574
    %v576 = vsel %vm488, %v429, 0.0
    %v577 = vadd.f32 %v575, %v576
    %v578 = vsel %vm488, %v432, 0.0
    %v579 = vadd.f32 %v577, %v578
    %v580 = vsel %vm488, %v435, 0.0
    %v581 = vadd.f32 %v579, %v580
    %v582 = vsel %vm488, %v438, 0.0
    %v583 = vadd.f32 %v581, %v582
    %v584 = vsel %vm488, %v441, 0.0
    %v585 = vadd.f32 %v583, %v584
    %v586 = vsel %vm488, %v444, 0.0
    %v587 = vadd.f32 %v585, %v586
    %v588 = vsel %vm488, %v447, 0.0
    %v589 = vadd.f32 %v587, %v588
    %v590 = vsel %vm488, %v450, 0.0
    %v591 = vadd.f32 %v589, %v590
    %v592 = vsel %vm488, %v453, 0.0
    %v593 = vadd.f32 %v591, %v592
    %v594 = vsel %vm488, %v456, 0.0
    %v595 = vadd.f32 %v593, %v594
    %v596 = vsel %vm488, %v459, 0.0
    %v597 = vadd.f32 %v595, %v596
    %v598 = vsel %vm488, %v462, 0.0
    %v599 = vadd.f32 %v597, %v598
    %v600 = vsel %vm488, %v465, 0.0
    %v601 = vadd.f32 %v599, %v600
    %v602 = vsel %vm488, %v468, 0.0
    %v603 = vadd.f32 %v601, %v602
    %v604 = vsel %vm488, %v471, 0.0
    %v605 = vadd.f32 %v603, %v604
    %v606 = vsel %vm488, %v474, 0.0
    %v607 = vadd.f32 %v605, %v606
    %v608 = vsel %vm488, %v477, 0.0
    %v609 = vadd.f32 %v607, %v608
    %v610 = vsel %vm488, %v480, 0.0
    %v611 = vadd.f32 %v609, %v610
    %v612 = vsel %vm488, %v483, 0.0
    %v613 = vadd.f32 %v611, %v612
    %v614 = vsel %vm488, %v486, 0.0
    %v615 = vadd.f32 %v613, %v614
    %v616 = vrot.slane %v615, 4
    %v617 = vadd.f32 %v615, %v616
    %v618 = vrot.slane %v617, 2
    %v619 = vadd.f32 %v617, %v618
    %v620 = vrot.slane %v619, 1
    %v621 = vadd.f32 %v619, %v620
    %v622 = vmul.f32 %v621, 0.001953125
    %v623 = vsub.f32 %v297, %v622
    %v624 = vsub.f32 %v300, %v622
    %v625 = vsub.f32 %v303, %v622
    %v626 = vsub.f32 %v306, %v622
    %v627 = vsub.f32 %v309, %v622
    %v628 = vsub.f32 %v312, %v622
    %v629 = vsub.f32 %v315, %v622
    %v630 = vsub.f32 %v318, %v622
    %v631 = vsub.f32 %v321, %v622
    %v632 = vsub.f32 %v324, %v622
    %v633 = vsub.f32 %v327, %v622
    %v634 = vsub.f32 %v330, %v622
    %v635 = vsub.f32 %v333, %v622
    %v636 = vsub.f32 %v336, %v622
    %v637 = vsub.f32 %v339, %v622
    %v638 = vsub.f32 %v342, %v622
    %v639 = vsub.f32 %v345, %v622
    %v640 = vsub.f32 %v348, %v622
    %v641 = vsub.f32 %v351, %v622
    %v642 = vsub.f32 %v354, %v622
    %v643 = vsub.f32 %v357, %v622
    %v644 = vsub.f32 %v360, %v622
    %v645 = vsub.f32 %v363, %v622
    %v646 = vsub.f32 %v366, %v622
    %v647 = vsub.f32 %v369, %v622
    %v648 = vsub.f32 %v372, %v622
    %v649 = vsub.f32 %v375, %v622
    %v650 = vsub.f32 %v378, %v622
    %v651 = vsub.f32 %v381, %v622
    %v652 = vsub.f32 %v384, %v622
    %v653 = vsub.f32 %v387, %v622
    %v654 = vsub.f32 %v390, %v622
    %v655 = vsub.f32 %v393, %v622
    %v656 = vsub.f32 %v396, %v622
    %v657 = vsub.f32 %v399, %v622
    %v658 = vsub.f32 %v402, %v622
    %v659 = vsub.f32 %v405, %v622
    %v660 = vsub.f32 %v408, %v622
    %v661 = vsub.f32 %v411, %v622
    %v662 = vsub.f32 %v414, %v622
    %v663 = vsub.f32 %v417, %v622
    %v664 = vsub.f32 %v420, %v622
    %v665 = vsub.f32 %v423, %v622
    %v666 = vsub.f32 %v426, %v622
    %v667 = vsub.f32 %v429, %v622
    %v668 = vsub.f32 %v432, %v622
    %v669 = vsub.f32 %v435, %v622
    %v670 = vsub.f32 %v438, %v622
    %v671 = vsub.f32 %v441, %v622
    %v672 = vsub.f32 %v444, %v622
    %v673 = vsub.f32 %v447, %v622
    %v674 = vsub.f32 %v450, %v622
    %v675 = vsub.f32 %v453, %v622
    %v676 = vsub.f32 %v456, %v622
    %v677 = vsub.f32 %v459, %v622
    %v678 = vsub.f32 %v462, %v622
    %v679 = vsub.f32 %v465, %v622
    %v680 = vsub.f32 %v468, %v622
    %v681 = vsub.f32 %v471, %v622
    %v682 = vsub.f32 %v474, %v622
    %v683 = vsub.f32 %v477, %v622
    %v684 = vsub.f32 %v480, %v622
    %v685 = vsub.f32 %v483, %v622
    %v686 = vsub.f32 %v486, %v622
    %v687 = vmul.f32 %v623, %v623
    %v688 = vmul.f32 %v624, %v624
    %v689 = vmul.f32 %v625, %v625
    %v690 = vmul.f32 %v626, %v626
    %v691 = vmul.f32 %v627, %v627
    %v692 = vmul.f32 %v628, %v628
    %v693 = vmul.f32 %v629, %v629
    %v694 = vmul.f32 %v630, %v630
    %v695 = vmul.f32 %v631, %v631
    %v696 = vmul.f32 %v632, %v632
    %v697 = vmul.f32 %v633, %v633
    %v698 = vmul.f32 %v634, %v634
    %v699 = vmul.f32 %v635, %v635
    %v700 = vmul.f32 %v636, %v636
    %v701 = vmul.f32 %v637, %v637
    %v702 = vmul.f32 %v638, %v638
    %v703 = vmul.f32 %v639, %v639
    %v704 = vmul.f32 %v640, %v640
    %v705 = vmul.f32 %v641, %v641
    %v706 = vmul.f32 %v642, %v642
    %v707 = vmul.f32 %v643, %v643
    %v708 = vmul.f32 %v644, %v644
    %v709 = vmul.f32 %v645, %v645
    %v710 = vmul.f32 %v646, %v646
    %v711 = vmul.f32 %v647, %v647
    %v712 = vmul.f32 %v648, %v648
    %v713 = vmul.f32 %v649, %v649
    %v714 = vmul.f32 %v650, %v650
    %v715 = vmul.f32 %v651, %v651
    %v716 = vmul.f32 %v652, %v652
    %v717 = vmul.f32 %v653, %v653
    %v718 = vmul.f32 %v654, %v654
    %v719 = vmul.f32 %v655, %v655
    %v720 = vmul.f32 %v656, %v656
    %v721 = vmul.f32 %v657, %v657
    %v722 = vmul.f32 %v658, %v658
    %v723 = vmul.f32 %v659, %v659
    %v724 = vmul.f32 %v660, %v660
    %v725 = vmul.f32 %v661, %v661
    %v726 = vmul.f32 %v662, %v662
    %v727 = vmul.f32 %v663, %v663
    %v728 = vmul.f32 %v664, %v664
    %v729 = vmul.f32 %v665, %v665
    %v730 = vmul.f32 %v666, %v666
    %v731 = vmul.f32 %v667, %v667
    %v732 = vmul.f32 %v668, %v668
    %v733 = vmul.f32 %v669, %v669
    %v734 = vmul.f32 %v670, %v670
    %v735 = vmul.f32 %v671, %v671
    %v736 = vmul.f32 %v672, %v672
    %v737 = vmul.f32 %v673, %v673
    %v738 = vmul.f32 %v674, %v674
    %v739 = vmul.f32 %v675, %v675
    %v740 = vmul.f32 %v676, %v676
    %v741 = vmul.f32 %v677, %v677
    %v742 = vmul.f32 %v678, %v678
    %v743 = vmul.f32 %v679, %v679
    %v744 = vmul.f32 %v680, %v680
    %v745 = vmul.f32 %v681, %v681
    %v746 = vmul.f32 %v682, %v682
    %v747 = vmul.f32 %v683, %v683
    %v748 = vmul.f32 %v684, %v684
    %v749 = vmul.f32 %v685, %v685
    %v750 = vmul.f32 %v686, %v686
    %v751 = vsel %vm488, %v687, 0.0
    %v752 = vsel %vm488, %v688, 0.0
    %v753 = vadd.f32 %v751, %v752
    %v754 = vsel %vm488, %v689, 0.0
    %v755 = vadd.f32 %v753, %v754
    %v756 = vsel %vm488, %v690, 0.0
    %v757 = vadd.f32 %v755, %v756
    %v758 = vsel %vm488, %v691, 0.0
    %v759 = vadd.f32 %v757, %v758
    %v760 = vsel %vm488, %v692, 0.0
    %v761 = vadd.f32 %v759, %v760
    %v762 = vsel %vm488, %v693, 0.0
    %v763 = vadd.f32 %v761, %v762
    %v764 = vsel %vm488, %v694, 0.0
    %v765 = vadd.f32 %v763, %v764
    %v766 = vsel %vm488, %v695, 0.0
    %v767 = vadd.f32 %v765, %v766
    %v768 = vsel %vm488, %v696, 0.0
    %v769 = vadd.f32 %v767, %v768
    %v770 = vsel %vm488, %v697, 0.0
    %v771 = vadd.f32 %v769, %v770
    %v772 = vsel %vm488, %v698, 0.0
    %v773 = vadd.f32 %v771, %v772
    %v774 = vsel %vm488, %v699, 0.0
    %v775 = vadd.f32 %v773, %v774
    %v776 = vsel %vm488, %v700, 0.0
    %v777 = vadd.f32 %v775, %v776
    %v778 = vsel %vm488, %v701, 0.0
    %v779 = vadd.f32 %v777, %v778
    %v780 = vsel %vm488, %v702, 0.0
    %v781 = vadd.f32 %v779, %v780
    %v782 = vsel %vm488, %v703, 0.0
    %v783 = vadd.f32 %v781, %v782
    %v784 = vsel %vm488, %v704, 0.0
    %v785 = vadd.f32 %v783, %v784
    %v786 = vsel %vm488, %v705, 0.0
    %v787 = vadd.f32 %v785, %v786
    %v788 = vsel %vm488, %v706, 0.0
    %v789 = vadd.f32 %v787, %v788
    %v790 = vsel %vm488, %v707, 0.0
    %v791 = vadd.f32 %v789, %v790
    %v792 = vsel %vm488, %v708, 0.0
    %v793 = vadd.f32 %v791, %v792
    %v794 = vsel %vm488, %v709, 0.0
    %v795 = vadd.f32 %v793, %v794
    %v796 = vsel %vm488, %v710, 0.0
    %v797 = vadd.f32 %v795, %v796
    %v798 = vsel %vm488, %v711, 0.0
    %v799 = vadd.f32 %v797, %v798
    %v800 = vsel %vm488, %v712, 0.0
    %v801 = vadd.f32 %v799, %v800
    %v802 = vsel %vm488, %v713, 0.0
    %v803 = vadd.f32 %v801, %v802
    %v804 = vsel %vm488, %v714, 0.0
    %v805 = vadd.f32 %v803, %v804
    %v806 = vsel %vm488, %v715, 0.0
    %v807 = vadd.f32 %v805, %v806
    %v808 = vsel %vm488, %v716, 0.0
    %v809 = vadd.f32 %v807, %v808
    %v810 = vsel %vm488, %v717, 0.0
    %v811 = vadd.f32 %v809, %v810
    %v812 = vsel %vm488, %v718, 0.0
    %v813 = vadd.f32 %v811, %v812
    %v814 = vsel %vm488, %v719, 0.0
    %v815 = vadd.f32 %v813, %v814
    %v816 = vsel %vm488, %v720, 0.0
    %v817 = vadd.f32 %v815, %v816
    %v818 = vsel %vm488, %v721, 0.0
    %v819 = vadd.f32 %v817, %v818
    %v820 = vsel %vm488, %v722, 0.0
    %v821 = vadd.f32 %v819, %v820
    %v822 = vsel %vm488, %v723, 0.0
    %v823 = vadd.f32 %v821, %v822
    %v824 = vsel %vm488, %v724, 0.0
    %v825 = vadd.f32 %v823, %v824
    %v826 = vsel %vm488, %v725, 0.0
    %v827 = vadd.f32 %v825, %v826
    %v828 = vsel %vm488, %v726, 0.0
    %v829 = vadd.f32 %v827, %v828
    %v830 = vsel %vm488, %v727, 0.0
    %v831 = vadd.f32 %v829, %v830
    %v832 = vsel %vm488, %v728, 0.0
    %v833 = vadd.f32 %v831, %v832
    %v834 = vsel %vm488, %v729, 0.0
    %v835 = vadd.f32 %v833, %v834
    %v836 = vsel %vm488, %v730, 0.0
    %v837 = vadd.f32 %v835, %v836
    %v838 = vsel %vm488, %v731, 0.0
    %v839 = vadd.f32 %v837, %v838
    %v840 = vsel %vm488, %v732, 0.0
    %v841 = vadd.f32 %v839, %v840
    %v842 = vsel %vm488, %v733, 0.0
    %v843 = vadd.f32 %v841, %v842
    %v844 = vsel %vm488, %v734, 0.0
    %v845 = vadd.f32 %v843, %v844
    %v846 = vsel %vm488, %v735, 0.0
    %v847 = vadd.f32 %v845, %v846
    %v848 = vsel %vm488, %v736, 0.0
    %v849 = vadd.f32 %v847, %v848
    %v850 = vsel %vm488, %v737, 0.0
    %v851 = vadd.f32 %v849, %v850
    %v852 = vsel %vm488, %v738, 0.0
    %v853 = vadd.f32 %v851, %v852
    %v854 = vsel %vm488, %v739, 0.0
    %v855 = vadd.f32 %v853, %v854
    %v856 = vsel %vm488, %v740, 0.0
    %v857 = vadd.f32 %v855, %v856
    %v858 = vsel %vm488, %v741, 0.0
    %v859 = vadd.f32 %v857, %v858
    %v860 = vsel %vm488, %v742, 0.0
    %v861 = vadd.f32 %v859, %v860
    %v862 = vsel %vm488, %v743, 0.0
    %v863 = vadd.f32 %v861, %v862
    %v864 = vsel %vm488, %v744, 0.0
    %v865 = vadd.f32 %v863, %v864
    %v866 = vsel %vm488, %v745, 0.0
    %v867 = vadd.f32 %v865, %v866
    %v868 = vsel %vm488, %v746, 0.0
    %v869 = vadd.f32 %v867, %v868
    %v870 = vsel %vm488, %v747, 0.0
    %v871 = vadd.f32 %v869, %v870
    %v872 = vsel %vm488, %v748, 0.0
    %v873 = vadd.f32 %v871, %v872
    %v874 = vsel %vm488, %v749, 0.0
    %v875 = vadd.f32 %v873, %v874
    %v876 = vsel %vm488, %v750, 0.0
    %v877 = vadd.f32 %v875, %v876
    %v878 = vrot.slane %v877, 4
    %v879 = vadd.f32 %v877, %v878
    %v880 = vrot.slane %v879, 2
    %v881 = vadd.f32 %v879, %v880
    %v882 = vrot.slane %v881, 1
    %v883 = vadd.f32 %v881, %v882
    %v884 = vmul.f32 %v883, 0.001953125
    %v885 = vadd.f32 %v884, 1e-05
    %v886 = vrsqrt.pop %v885
    %v887 = vmul.f32 %v886, %v885
    %v888 = vmul.f32 %v887, %v886
    %v889 = vmul.f32 0.5, %v888
    %v890 = vsub.f32 1.5, %v889
    %v891 = vmul.f32 %v886, %v890
    %vm892 = vweird.f32 %v885
    %vm893 = vweird.f32 %v886
    %vm894 = vmor %vm892, %vm893
    %v895 = vsel %vm894, %v886, %v891
    %v896 = vmul.f32 %v15, %v895
    %v897 = vmul.f32 %v622, %v896
    %v899 = vrot.slane %v897, 7
    %v901 = vsub.f32 %v15, %v899
    %v902 = vperm.slane %v896, 0
    %v903 = vmul.f32 %v297, %v902
    %v904 = vmul.f32 %v300, %v902
    %v905 = vmul.f32 %v303, %v902
    %v906 = vmul.f32 %v306, %v902
    %v907 = vmul.f32 %v309, %v902
    %v908 = vmul.f32 %v312, %v902
    %v909 = vmul.f32 %v315, %v902
    %v910 = vmul.f32 %v318, %v902
    %v911 = vmul.f32 %v321, %v902
    %v912 = vmul.f32 %v324, %v902
    %v913 = vmul.f32 %v327, %v902
    %v914 = vmul.f32 %v330, %v902
    %v915 = vmul.f32 %v333, %v902
    %v916 = vmul.f32 %v336, %v902
    %v917 = vmul.f32 %v339, %v902
    %v918 = vmul.f32 %v342, %v902
    %v919 = vmul.f32 %v345, %v902
    %v920 = vmul.f32 %v348, %v902
    %v921 = vmul.f32 %v351, %v902
    %v922 = vmul.f32 %v354, %v902
    %v923 = vmul.f32 %v357, %v902
    %v924 = vmul.f32 %v360, %v902
    %v925 = vmul.f32 %v363, %v902
    %v926 = vmul.f32 %v366, %v902
    %v927 = vmul.f32 %v369, %v902
    %v928 = vmul.f32 %v372, %v902
    %v929 = vmul.f32 %v375, %v902
    %v930 = vmul.f32 %v378, %v902
    %v931 = vmul.f32 %v381, %v902
    %v932 = vmul.f32 %v384, %v902
    %v933 = vmul.f32 %v387, %v902
    %v934 = vmul.f32 %v390, %v902
    %v935 = vmul.f32 %v393, %v902
    %v936 = vmul.f32 %v396, %v902
    %v937 = vmul.f32 %v399, %v902
    %v938 = vmul.f32 %v402, %v902
    %v939 = vmul.f32 %v405, %v902
    %v940 = vmul.f32 %v408, %v902
    %v941 = vmul.f32 %v411, %v902
    %v942 = vmul.f32 %v414, %v902
    %v943 = vmul.f32 %v417, %v902
    %v944 = vmul.f32 %v420, %v902
    %v945 = vmul.f32 %v423, %v902
    %v946 = vmul.f32 %v426, %v902
    %v947 = vmul.f32 %v429, %v902
    %v948 = vmul.f32 %v432, %v902
    %v949 = vmul.f32 %v435, %v902
    %v950 = vmul.f32 %v438, %v902
    %v951 = vmul.f32 %v441, %v902
    %v952 = vmul.f32 %v444, %v902
    %v953 = vmul.f32 %v447, %v902
    %v954 = vmul.f32 %v450, %v902
    %v955 = vmul.f32 %v453, %v902
    %v956 = vmul.f32 %v456, %v902
    %v957 = vmul.f32 %v459, %v902
    %v958 = vmul.f32 %v462, %v902
    %v959 = vmul.f32 %v465, %v902
    %v960 = vmul.f32 %v468, %v902
    %v961 = vmul.f32 %v471, %v902
    %v962 = vmul.f32 %v474, %v902
    %v963 = vmul.f32 %v477, %v902
    %v964 = vmul.f32 %v480, %v902
    %v965 = vmul.f32 %v483, %v902
    %v966 = vmul.f32 %v486, %v902
    %v967 = vperm.slane %v901, 1
    %v968 = vadd.f32 %v903, %v967
    %v969 = vadd.f32 %v904, %v967
    %v970 = vadd.f32 %v905, %v967
    %v971 = vadd.f32 %v906, %v967
    %v972 = vadd.f32 %v907, %v967
    %v973 = vadd.f32 %v908, %v967
    %v974 = vadd.f32 %v909, %v967
    %v975 = vadd.f32 %v910, %v967
    %v976 = vadd.f32 %v911, %v967
    %v977 = vadd.f32 %v912, %v967
    %v978 = vadd.f32 %v913, %v967
    %v979 = vadd.f32 %v914, %v967
    %v980 = vadd.f32 %v915, %v967
    %v981 = vadd.f32 %v916, %v967
    %v982 = vadd.f32 %v917, %v967
    %v983 = vadd.f32 %v918, %v967
    %v984 = vadd.f32 %v919, %v967
    %v985 = vadd.f32 %v920, %v967
    %v986 = vadd.f32 %v921, %v967
    %v987 = vadd.f32 %v922, %v967
    %v988 = vadd.f32 %v923, %v967
    %v989 = vadd.f32 %v924, %v967
    %v990 = vadd.f32 %v925, %v967
    %v991 = vadd.f32 %v926, %v967
    %v992 = vadd.f32 %v927, %v967
    %v993 = vadd.f32 %v928, %v967
    %v994 = vadd.f32 %v929, %v967
    %v995 = vadd.f32 %v930, %v967
    %v996 = vadd.f32 %v931, %v967
    %v997 = vadd.f32 %v932, %v967
    %v998 = vadd.f32 %v933, %v967
    %v999 = vadd.f32 %v934, %v967
    %v1000 = vadd.f32 %v935, %v967
    %v1001 = vadd.f32 %v936, %v967
    %v1002 = vadd.f32 %v937, %v967
    %v1003 = vadd.f32 %v938, %v967
    %v1004 = vadd.f32 %v939, %v967
    %v1005 = vadd.f32 %v940, %v967
    %v1006 = vadd.f32 %v941, %v967
    %v1007 = vadd.f32 %v942, %v967
    %v1008 = vadd.f32 %v943, %v967
    %v1009 = vadd.f32 %v944, %v967
    %v1010 = vadd.f32 %v945, %v967
    %v1011 = vadd.f32 %v946, %v967
    %v1012 = vadd.f32 %v947, %v967
    %v1013 = vadd.f32 %v948, %v967
    %v1014 = vadd.f32 %v949, %v967
    %v1015 = vadd.f32 %v950, %v967
    %v1016 = vadd.f32 %v951, %v967
    %v1017 = vadd.f32 %v952, %v967
    %v1018 = vadd.f32 %v953, %v967
    %v1019 = vadd.f32 %v954, %v967
    %v1020 = vadd.f32 %v955, %v967
    %v1021 = vadd.f32 %v956, %v967
    %v1022 = vadd.f32 %v957, %v967
    %v1023 = vadd.f32 %v958, %v967
    %v1024 = vadd.f32 %v959, %v967
    %v1025 = vadd.f32 %v960, %v967
    %v1026 = vadd.f32 %v961, %v967
    %v1027 = vadd.f32 %v962, %v967
    %v1028 = vadd.f32 %v963, %v967
    %v1029 = vadd.f32 %v964, %v967
    %v1030 = vadd.f32 %v965, %v967
    %v1031 = vadd.f32 %v966, %v967
    %v1032 = vmax.f32 %v968, 0.0
    %v1033 = vmax.f32 %v969, 0.0
    %v1034 = vmax.f32 %v970, 0.0
    %v1035 = vmax.f32 %v971, 0.0
    %v1036 = vmax.f32 %v972, 0.0
    %v1037 = vmax.f32 %v973, 0.0
    %v1038 = vmax.f32 %v974, 0.0
    %v1039 = vmax.f32 %v975, 0.0
    %v1040 = vmax.f32 %v976, 0.0
    %v1041 = vmax.f32 %v977, 0.0
    %v1042 = vmax.f32 %v978, 0.0
    %v1043 = vmax.f32 %v979, 0.0
    %v1044 = vmax.f32 %v980, 0.0
    %v1045 = vmax.f32 %v981, 0.0
    %v1046 = vmax.f32 %v982, 0.0
    %v1047 = vmax.f32 %v983, 0.0
    %v1048 = vmax.f32 %v984, 0.0
    %v1049 = vmax.f32 %v985, 0.0
    %v1050 = vmax.f32 %v986, 0.0
    %v1051 = vmax.f32 %v987, 0.0
    %v1052 = vmax.f32 %v988, 0.0
    %v1053 = vmax.f32 %v989, 0.0
    %v1054 = vmax.f32 %v990, 0.0
    %v1055 = vmax.f32 %v991, 0.0
    %v1056 = vmax.f32 %v992, 0.0
    %v1057 = vmax.f32 %v993, 0.0
    %v1058 = vmax.f32 %v994, 0.0
    %v1059 = vmax.f32 %v995, 0.0
    %v1060 = vmax.f32 %v996, 0.0
    %v1061 = vmax.f32 %v997, 0.0
    %v1062 = vmax.f32 %v998, 0.0
    %v1063 = vmax.f32 %v999, 0.0
    %v1064 = vmax.f32 %v1000, 0.0
    %v1065 = vmax.f32 %v1001, 0.0
    %v1066 = vmax.f32 %v1002, 0.0
    %v1067 = vmax.f32 %v1003, 0.0
    %v1068 = vmax.f32 %v1004, 0.0
    %v1069 = vmax.f32 %v1005, 0.0
    %v1070 = vmax.f32 %v1006, 0.0
    %v1071 = vmax.f32 %v1007, 0.0
    %v1072 = vmax.f32 %v1008, 0.0
    %v1073 = vmax.f32 %v1009, 0.0
    %v1074 = vmax.f32 %v1010, 0.0
    %v1075 = vmax.f32 %v1011, 0.0
    %v1076 = vmax.f32 %v1012, 0.0
    %v1077 = vmax.f32 %v1013, 0.0
    %v1078 = vmax.f32 %v1014, 0.0
    %v1079 = vmax.f32 %v1015, 0.0
    %v1080 = vmax.f32 %v1016, 0.0
    %v1081 = vmax.f32 %v1017, 0.0
    %v1082 = vmax.f32 %v1018, 0.0
    %v1083 = vmax.f32 %v1019, 0.0
    %v1084 = vmax.f32 %v1020, 0.0
    %v1085 = vmax.f32 %v1021, 0.0
    %v1086 = vmax.f32 %v1022, 0.0
    %v1087 = vmax.f32 %v1023, 0.0
    %v1088 = vmax.f32 %v1024, 0.0
    %v1089 = vmax.f32 %v1025, 0.0
    %v1090 = vmax.f32 %v1026, 0.0
    %v1091 = vmax.f32 %v1027, 0.0
    %v1092 = vmax.f32 %v1028, 0.0
    %v1093 = vmax.f32 %v1029, 0.0
    %v1094 = vmax.f32 %v1030, 0.0
    %v1095 = vmax.f32 %v1031, 0.0
    %v1096 = vmax.f32 %v1032, %v1034
    %v1097 = vmax.f32 %v1033, %v1035
    %v1098 = vmax.f32 %v1036, %v1038
    %v1099 = vmax.f32 %v1037, %v1039
    %v1100 = vmax.f32 %v1040, %v1042
    %v1101 = vmax.f32 %v1041, %v1043
    %v1102 = vmax.f32 %v1044, %v1046
    %v1103 = vmax.f32 %v1045, %v1047
    %v1104 = vmax.f32 %v1048, %v1050
    %v1105 = vmax.f32 %v1049, %v1051
    %v1106 = vmax.f32 %v1052, %v1054
    %v1107 = vmax.f32 %v1053, %v1055
    %v1108 = vmax.f32 %v1056, %v1058
    %v1109 = vmax.f32 %v1057, %v1059
    %v1110 = vmax.f32 %v1060, %v1062
    %v1111 = vmax.f32 %v1061, %v1063
    %v1112 = vmax.f32 %v1064, %v1066
    %v1113 = vmax.f32 %v1065, %v1067
    %v1114 = vmax.f32 %v1068, %v1070
    %v1115 = vmax.f32 %v1069, %v1071
    %v1116 = vmax.f32 %v1072, %v1074
    %v1117 = vmax.f32 %v1073, %v1075
    %v1118 = vmax.f32 %v1076, %v1078
    %v1119 = vmax.f32 %v1077, %v1079
    %v1120 = vmax.f32 %v1080, %v1082
    %v1121 = vmax.f32 %v1081, %v1083
    %v1122 = vmax.f32 %v1084, %v1086
    %v1123 = vmax.f32 %v1085, %v1087
    %v1124 = vmax.f32 %v1088, %v1090
    %v1125 = vmax.f32 %v1089, %v1091
    %v1126 = vmax.f32 %v1092, %v1094
    %v1127 = vmax.f32 %v1093, %v1095
    %1128 = vst.msk [vmem:[#allocation2] sm:$0xff] %vm488, %v1096
    %1129 = vst.msk [vmem:[#allocation2 + $0x8] sm:$0xff] %vm488, %v1097
    %1130 = vst.msk [vmem:[#allocation2 + $0x10] sm:$0xff] %vm488, %v1098
    %1131 = vst.msk [vmem:[#allocation2 + $0x18] sm:$0xff] %vm488, %v1099
    %1132 = vst.msk [vmem:[#allocation2 + $0x20] sm:$0xff] %vm488, %v1100
    %1133 = vst.msk [vmem:[#allocation2 + $0x28] sm:$0xff] %vm488, %v1101
    %1134 = vst.msk [vmem:[#allocation2 + $0x30] sm:$0xff] %vm488, %v1102
    %1135 = vst.msk [vmem:[#allocation2 + $0x38] sm:$0xff] %vm488, %v1103
    %1136 = vst.msk [vmem:[#allocation2 + $0x40] sm:$0xff] %vm488, %v1104
    %1137 = vst.msk [vmem:[#allocation2 + $0x48] sm:$0xff] %vm488, %v1105
    %1138 = vst.msk [vmem:[#allocation2 + $0x50] sm:$0xff] %vm488, %v1106
    %1139 = vst.msk [vmem:[#allocation2 + $0x58] sm:$0xff] %vm488, %v1107
    %1140 = vst.msk [vmem:[#allocation2 + $0x60] sm:$0xff] %vm488, %v1108
    %1141 = vst.msk [vmem:[#allocation2 + $0x68] sm:$0xff] %vm488, %v1109
    %1142 = vst.msk [vmem:[#allocation2 + $0x70] sm:$0xff] %vm488, %v1110
    %1143 = vst.msk [vmem:[#allocation2 + $0x78] sm:$0xff] %vm488, %v1111
    %1144 = vst.msk [vmem:[#allocation2 + $0x80] sm:$0xff] %vm488, %v1112
    %1145 = vst.msk [vmem:[#allocation2 + $0x88] sm:$0xff] %vm488, %v1113
    %1146 = vst.msk [vmem:[#allocation2 + $0x90] sm:$0xff] %vm488, %v1114
    %1147 = vst.msk [vmem:[#allocation2 + $0x98] sm:$0xff] %vm488, %v1115
    %1148 = vst.msk [vmem:[#allocation2 + $0xa0] sm:$0xff] %vm488, %v1116
    %1149 = vst.msk [vmem:[#allocation2 + $0xa8] sm:$0xff] %vm488, %v1117
    %1150 = vst.msk [vmem:[#allocation2 + $0xb0] sm:$0xff] %vm488, %v1118
    %1151 = vst.msk [vmem:[#allocation2 + $0xb8] sm:$0xff] %vm488, %v1119
    %1152 = vst.msk [vmem:[#allocation2 + $0xc0] sm:$0xff] %vm488, %v1120
    %1153 = vst.msk [vmem:[#allocation2 + $0xc8] sm:$0xff] %vm488, %v1121
    %1154 = vst.msk [vmem:[#allocation2 + $0xd0] sm:$0xff] %vm488, %v1122
    %1155 = vst.msk [vmem:[#allocation2 + $0xd8] sm:$0xff] %vm488, %v1123
    %1156 = vst.msk [vmem:[#allocation2 + $0xe0] sm:$0xff] %vm488, %v1124
    %1157 = vst.msk [vmem:[#allocation2 + $0xe8] sm:$0xff] %vm488, %v1125
    %1158 = vst.msk [vmem:[#allocation2 + $0xf0] sm:$0xff] %vm488, %v1126
    %1159 = vst.msk [vmem:[#allocation2 + $0xf8] sm:$0xff] %vm488, %v1127
    %v1160 = vld [vmem:[#allocation2] ss:$2 sm:$0xff]
    %s1161 = scalar_lea.vmem [#allocation2], 16
    %v1162 = vld [vmem:[%s1161] ss:$2 sm:$0xff]
    %s1163 = scalar_lea.vmem [#allocation2], 32
    %v1164 = vld [vmem:[%s1163] ss:$2 sm:$0xff]
    %s1165 = scalar_lea.vmem [#allocation2], 48
    %v1166 = vld [vmem:[%s1165] ss:$2 sm:$0xff]
    %s1167 = scalar_lea.vmem [#allocation2], 64
    %v1168 = vld [vmem:[%s1167] ss:$2 sm:$0xff]
    %s1169 = scalar_lea.vmem [#allocation2], 80
    %v1170 = vld [vmem:[%s1169] ss:$2 sm:$0xff]
    %s1171 = scalar_lea.vmem [#allocation2], 96
    %v1172 = vld [vmem:[%s1171] ss:$2 sm:$0xff]
    %s1173 = scalar_lea.vmem [#allocation2], 112
    %v1174 = vld [vmem:[%s1173] ss:$2 sm:$0xff]
    %s1175 = scalar_lea.vmem [#allocation2], 128
    %v1176 = vld [vmem:[%s1175] ss:$2 sm:$0xff]
    %s1177 = scalar_lea.vmem [#allocation2], 144
    %v1178 = vld [vmem:[%s1177] ss:$2 sm:$0xff]
    %s1179 = scalar_lea.vmem [#allocation2], 160
    %v1180 = vld [vmem:[%s1179] ss:$2 sm:$0xff]
    %s1181 = scalar_lea.vmem [#allocation2], 176
    %v1182 = vld [vmem:[%s1181] ss:$2 sm:$0xff]
    %s1183 = scalar_lea.vmem [#allocation2], 192
    %v1184 = vld [vmem:[%s1183] ss:$2 sm:$0xff]
    %s1185 = scalar_lea.vmem [#allocation2], 208
    %v1186 = vld [vmem:[%s1185] ss:$2 sm:$0xff]
    %s1187 = scalar_lea.vmem [#allocation2], 224
    %v1188 = vld [vmem:[%s1187] ss:$2 sm:$0xff]
    %s1189 = scalar_lea.vmem [#allocation2], 240
    %v1190 = vld [vmem:[%s1189] ss:$2 sm:$0xff]
    %s1191 = scalar_lea.vmem [#allocation2], 1
    %v1192 = vld [vmem:[%s1191] ss:$2 sm:$0xff]
    %s1193 = scalar_lea.vmem [#allocation2], 17
    %v1194 = vld [vmem:[%s1193] ss:$2 sm:$0xff]
    %s1195 = scalar_lea.vmem [#allocation2], 33
    %v1196 = vld [vmem:[%s1195] ss:$2 sm:$0xff]
    %s1197 = scalar_lea.vmem [#allocation2], 49
    %v1198 = vld [vmem:[%s1197] ss:$2 sm:$0xff]
    %s1199 = scalar_lea.vmem [#allocation2], 65
    %v1200 = vld [vmem:[%s1199] ss:$2 sm:$0xff]
    %s1201 = scalar_lea.vmem [#allocation2], 81
    %v1202 = vld [vmem:[%s1201] ss:$2 sm:$0xff]
    %s1203 = scalar_lea.vmem [#allocation2], 97
    %v1204 = vld [vmem:[%s1203] ss:$2 sm:$0xff]
    %s1205 = scalar_lea.vmem [#allocation2], 113
    %v1206 = vld [vmem:[%s1205] ss:$2 sm:$0xff]
    %s1207 = scalar_lea.vmem [#allocation2], 129
    %v1208 = vld [vmem:[%s1207] ss:$2 sm:$0xff]
    %s1209 = scalar_lea.vmem [#allocation2], 145
    %v1210 = vld [vmem:[%s1209] ss:$2 sm:$0xff]
    %s1211 = scalar_lea.vmem [#allocation2], 161
    %v1212 = vld [vmem:[%s1211] ss:$2 sm:$0xff]
    %s1213 = scalar_lea.vmem [#allocation2], 177
    %v1214 = vld [vmem:[%s1213] ss:$2 sm:$0xff]
    %s1215 = scalar_lea.vmem [#allocation2], 193
    %v1216 = vld [vmem:[%s1215] ss:$2 sm:$0xff]
    %s1217 = scalar_lea.vmem [#allocation2], 209
    %v1218 = vld [vmem:[%s1217] ss:$2 sm:$0xff]
    %s1219 = scalar_lea.vmem [#allocation2], 225
    %v1220 = vld [vmem:[%s1219] ss:$2 sm:$0xff]
    %s1221 = scalar_lea.vmem [#allocation2], 241
    %v1222 = vld [vmem:[%s1221] ss:$2 sm:$0xff]
    %v1223 = vmax.f32 %v1160, %v1192
    %v1224 = vmax.f32 %v1162, %v1194
    %v1225 = vmax.f32 %v1164, %v1196
    %v1226 = vmax.f32 %v1166, %v1198
    %v1227 = vmax.f32 %v1168, %v1200
    %v1228 = vmax.f32 %v1170, %v1202
    %v1229 = vmax.f32 %v1172, %v1204
    %v1230 = vmax.f32 %v1174, %v1206
    %v1231 = vmax.f32 %v1176, %v1208
    %v1232 = vmax.f32 %v1178, %v1210
    %v1233 = vmax.f32 %v1180, %v1212
    %v1234 = vmax.f32 %v1182, %v1214
    %v1235 = vmax.f32 %v1184, %v1216
    %v1236 = vmax.f32 %v1186, %v1218
    %v1237 = vmax.f32 %v1188, %v1220
    %v1238 = vmax.f32 %v1190, %v1222
    %1239 = vst.msk [vmem:[#allocation3] sm:$0xff] %vm488, 0.0
    %vm1240 = vcmask 123904
    %1241 = vst.msk [vmem:[#allocation3 + $0x8] sm:$0x3] %vm1240, 0.0
    %1242 = vst.msk [vmem:[#allocation3 + $0x10] sm:$0xff] %vm488, 0.0
    %1243 = vst.msk [vmem:[#allocation3 + $0x18] sm:$0x3] %vm1240, 0.0
    %1244 = vst.msk [vmem:[#allocation3 + $0x20] sm:$0xff] %vm488, 0.0
    %1245 = vst.msk [vmem:[#allocation3 + $0x28] sm:$0x3] %vm1240, 0.0
    %1246 = vst.msk [vmem:[#allocation3 + $0x30] sm:$0xff] %vm488, 0.0
    %1247 = vst.msk [vmem:[#allocation3 + $0x38] sm:$0x3] %vm1240, 0.0
    %1248 = vst.msk [vmem:[#allocation3 + $0x40] sm:$0xff] %vm488, 0.0
    %1249 = vst.msk [vmem:[#allocation3 + $0x48] sm:$0x3] %vm1240, 0.0
    %1250 = vst.msk [vmem:[#allocation3 + $0x50] sm:$0xff] %vm488, 0.0
    %1251 = vst.msk [vmem:[#allocation3 + $0x58] sm:$0x3] %vm1240, 0.0
    %1252 = vst.msk [vmem:[#allocation3 + $0x60] sm:$0xff] %vm488, 0.0
    %1253 = vst.msk [vmem:[#allocation3 + $0x68] sm:$0x3] %vm1240, 0.0
    %1254 = vst.msk [vmem:[#allocation3 + $0x70] sm:$0xff] %vm488, 0.0
    %1255 = vst.msk [vmem:[#allocation3 + $0x78] sm:$0x3] %vm1240, 0.0
    %1256 = vst.msk [vmem:[#allocation3 + $0x80] sm:$0xff] %vm488, 0.0
    %1257 = vst.msk [vmem:[#allocation3 + $0x88] sm:$0x3] %vm1240, 0.0
    %1258 = vst.msk [vmem:[#allocation3 + $0x90] sm:$0xff] %vm488, 0.0
    %1259 = vst.msk [vmem:[#allocation3 + $0x98] sm:$0x3] %vm1240, 0.0
    %1260 = vst.msk [vmem:[#allocation3 + $0xa0] sm:$0xff] %vm488, 0.0
    %1261 = vst.msk [vmem:[#allocation3 + $0xa8] sm:$0x3] %vm1240, 0.0
    %1262 = vst.msk [vmem:[#allocation3 + $0xb0] sm:$0xff] %vm488, 0.0
    %1263 = vst.msk [vmem:[#allocation3 + $0xb8] sm:$0x3] %vm1240, 0.0
    %1264 = vst.msk [vmem:[#allocation3 + $0xc0] sm:$0xff] %vm488, 0.0
    %1265 = vst.msk [vmem:[#allocation3 + $0xc8] sm:$0x3] %vm1240, 0.0
    %1266 = vst.msk [vmem:[#allocation3 + $0xd0] sm:$0xff] %vm488, 0.0
    %1267 = vst.msk [vmem:[#allocation3 + $0xd8] sm:$0x3] %vm1240, 0.0
    %1268 = vst.msk [vmem:[#allocation3 + $0xe0] sm:$0xff] %vm488, 0.0
    %1269 = vst.msk [vmem:[#allocation3 + $0xe8] sm:$0x3] %vm1240, 0.0
    %1270 = vst.msk [vmem:[#allocation3 + $0xf0] sm:$0xff] %vm488, 0.0
    %1271 = vst.msk [vmem:[#allocation3 + $0xf8] sm:$0x3] %vm1240, 0.0
    %1272 = vst.msk [vmem:[#allocation3 + $0x100] sm:$0xff] %vm488, 0.0
    %1273 = vst.msk [vmem:[#allocation3 + $0x108] sm:$0x3] %vm1240, 0.0
    %1274 = vst.msk [vmem:[#allocation3 + $0x110] sm:$0xff] %vm488, 0.0
    %1275 = vst.msk [vmem:[#allocation3 + $0x118] sm:$0x3] %vm1240, 0.0
    %1276 = vst.msk [vmem:[#allocation3 + $0x120] sm:$0xff] %vm488, 0.0
    %1277 = vst.msk [vmem:[#allocation3 + $0x128] sm:$0x3] %vm1240, 0.0
    %1278 = vst.msk [vmem:[#allocation3 + $0x130] sm:$0xff] %vm488, 0.0
    %1279 = vst.msk [vmem:[#allocation3 + $0x138] sm:$0x3] %vm1240, 0.0
    %s1280 = scalar_lea.vmem [#allocation3], 16
    %1281 = vst.msk [vmem:[%s1280 + $0x1] sm:$0xff] %vm488, %v1223
    %1282 = vst.msk [vmem:[%s1280 + $0x11] sm:$0xff] %vm488, %v1224
    %1283 = vst.msk [vmem:[%s1280 + $0x21] sm:$0xff] %vm488, %v1225
    %1284 = vst.msk [vmem:[%s1280 + $0x31] sm:$0xff] %vm488, %v1226
    %1285 = vst.msk [vmem:[%s1280 + $0x41] sm:$0xff] %vm488, %v1227
    %1286 = vst.msk [vmem:[%s1280 + $0x51] sm:$0xff] %vm488, %v1228
    %1287 = vst.msk [vmem:[%s1280 + $0x61] sm:$0xff] %vm488, %v1229
    %1288 = vst.msk [vmem:[%s1280 + $0x71] sm:$0xff] %vm488, %v1230
    %1289 = vst.msk [vmem:[%s1280 + $0xa1] sm:$0xff] %vm488, %v1231
    %1290 = vst.msk [vmem:[%s1280 + $0xb1] sm:$0xff] %vm488, %v1232
    %1291 = vst.msk [vmem:[%s1280 + $0xc1] sm:$0xff] %vm488, %v1233
    %1292 = vst.msk [vmem:[%s1280 + $0xd1] sm:$0xff] %vm488, %v1234
    %1293 = vst.msk [vmem:[%s1280 + $0xe1] sm:$0xff] %vm488, %v1235
    %1294 = vst.msk [vmem:[%s1280 + $0xf1] sm:$0xff] %vm488, %v1236
    %1295 = vst.msk [vmem:[%s1280 + $0x101] sm:$0xff] %vm488, %v1237
    %1296 = vst.msk [vmem:[%s1280 + $0x111] sm:$0xff] %vm488, %v1238
    %v1297 = vld [vmem:[#allocation3] sm:$0xff]
    %v1298 = vld [vmem:[#allocation3 + $0x10] sm:$0xff]
    %v1299 = vld [vmem:[#allocation3 + $0x20] sm:$0xff]
    %v1300 = vld [vmem:[#allocation3 + $0x30] sm:$0xff]
    %v1301 = vld [vmem:[#allocation3 + $0x40] sm:$0xff]
    %v1302 = vld [vmem:[#allocation3 + $0x50] sm:$0xff]
    %v1303 = vld [vmem:[#allocation3 + $0x60] sm:$0xff]
    %v1304 = vld [vmem:[#allocation3 + $0x70] sm:$0xff]
    %v1305 = vld [vmem:[#allocation3 + $0xa0] sm:$0xff]
    %v1306 = vld [vmem:[#allocation3 + $0xb0] sm:$0xff]
    %v1307 = vld [vmem:[#allocation3 + $0xc0] sm:$0xff]
    %v1308 = vld [vmem:[#allocation3 + $0xd0] sm:$0xff]
    %v1309 = vld [vmem:[#allocation3 + $0xe0] sm:$0xff]
    %v1310 = vld [vmem:[#allocation3 + $0xf0] sm:$0xff]
    %v1311 = vld [vmem:[#allocation3 + $0x100] sm:$0xff]
    %v1312 = vld [vmem:[#allocation3 + $0x110] sm:$0xff]
    %1313 = vst.msk [vmem:[#allocation4] sm:$0xff] %vm488, %v1297
    %1314 = vst.msk [vmem:[#allocation4 + $0x10] sm:$0xff] %vm488, %v1298
    %1315 = vst.msk [vmem:[#allocation4 + $0x20] sm:$0xff] %vm488, %v1299
    %1316 = vst.msk [vmem:[#allocation4 + $0x30] sm:$0xff] %vm488, %v1300
    %1317 = vst.msk [vmem:[#allocation4 + $0x40] sm:$0xff] %vm488, %v1301
    %1318 = vst.msk [vmem:[#allocation4 + $0x50] sm:$0xff] %vm488, %v1302
    %1319 = vst.msk [vmem:[#allocation4 + $0x60] sm:$0xff] %vm488, %v1303
    %1320 = vst.msk [vmem:[#allocation4 + $0x70] sm:$0xff] %vm488, %v1304
    %1321 = vst.msk [vmem:[#allocation4 + $0x80] sm:$0xff] %vm488, %v1305
    %1322 = vst.msk [vmem:[#allocation4 + $0x90] sm:$0xff] %vm488, %v1306
    %1323 = vst.msk [vmem:[#allocation4 + $0xa0] sm:$0xff] %vm488, %v1307
    %1324 = vst.msk [vmem:[#allocation4 + $0xb0] sm:$0xff] %vm488, %v1308
    %1325 = vst.msk [vmem:[#allocation4 + $0xc0] sm:$0xff] %vm488, %v1309
    %1326 = vst.msk [vmem:[#allocation4 + $0xd0] sm:$0xff] %vm488, %v1310
    %1327 = vst.msk [vmem:[#allocation4 + $0xe0] sm:$0xff] %vm488, %v1311
    %1328 = vst.msk [vmem:[#allocation4 + $0xf0] sm:$0xff] %vm488, %v1312
    %v1329 = vld [vmem:[#allocation3 + $0x1] sm:$0xff]
    %v1330 = vld [vmem:[#allocation3 + $0x11] sm:$0xff]
    %v1331 = vld [vmem:[#allocation3 + $0x21] sm:$0xff]
    %v1332 = vld [vmem:[#allocation3 + $0x31] sm:$0xff]
    %v1333 = vld [vmem:[#allocation3 + $0x41] sm:$0xff]
    %v1334 = vld [vmem:[#allocation3 + $0x51] sm:$0xff]
    %v1335 = vld [vmem:[#allocation3 + $0x61] sm:$0xff]
    %v1336 = vld [vmem:[#allocation3 + $0x71] sm:$0xff]
    %v1337 = vld [vmem:[#allocation3 + $0xa1] sm:$0xff]
    %v1338 = vld [vmem:[#allocation3 + $0xb1] sm:$0xff]
    %v1339 = vld [vmem:[#allocation3 + $0xc1] sm:$0xff]
    %v1340 = vld [vmem:[#allocation3 + $0xd1] sm:$0xff]
    %v1341 = vld [vmem:[#allocation3 + $0xe1] sm:$0xff]
    %v1342 = vld [vmem:[#allocation3 + $0xf1] sm:$0xff]
    %v1343 = vld [vmem:[#allocation3 + $0x101] sm:$0xff]
    %v1344 = vld [vmem:[#allocation3 + $0x111] sm:$0xff]
    %1361 = vrot.lane.b32.xlu0 %v1329, 16
    %v1362 = vpop.permute.xlu0 %1361
    %1363 = vrot.lane.b32.xlu0 %v1330, 16
    %v1364 = vpop.permute.xlu0 %1363
    %1365 = vrot.lane.b32.xlu0 %v1331, 16
    %v1366 = vpop.permute.xlu0 %1365
    %1367 = vrot.lane.b32.xlu0 %v1332, 16
    %v1368 = vpop.permute.xlu0 %1367
    %1369 = vrot.lane.b32.xlu0 %v1333, 16
    %v1370 = vpop.permute.xlu0 %1369
    %1371 = vrot.lane.b32.xlu0 %v1334, 16
    %v1372 = vpop.permute.xlu0 %1371
    %1373 = vrot.lane.b32.xlu0 %v1335, 16
    %v1374 = vpop.permute.xlu0 %1373
    %1375 = vrot.lane.b32.xlu0 %v1336, 16
    %v1376 = vpop.permute.xlu0 %1375
    %1377 = vrot.lane.b32.xlu0 %v1337, 16
    %v1378 = vpop.permute.xlu0 %1377
    %1379 = vrot.lane.b32.xlu0 %v1338, 16
    %v1380 = vpop.permute.xlu0 %1379
    %1381 = vrot.lane.b32.xlu0 %v1339, 16
    %v1382 = vpop.permute.xlu0 %1381
    %1383 = vrot.lane.b32.xlu0 %v1340, 16
    %v1384 = vpop.permute.xlu0 %1383
    %1385 = vrot.lane.b32.xlu0 %v1341, 16
    %v1386 = vpop.permute.xlu0 %1385
    %1387 = vrot.lane.b32.xlu0 %v1342, 16
    %v1388 = vpop.permute.xlu0 %1387
    %1389 = vrot.lane.b32.xlu0 %v1343, 16
    %v1390 = vpop.permute.xlu0 %1389
    %1391 = vrot.lane.b32.xlu0 %v1344, 16
    %v1392 = vpop.permute.xlu0 %1391
    %vm1409 = vcmask 261248
    %1410 = vst.msk [vmem:[#allocation4] sm:$0xff] %vm1409, %v1362
    %1411 = vst.msk [vmem:[#allocation4 + $0x10] sm:$0xff] %vm1409, %v1364
    %1412 = vst.msk [vmem:[#allocation4 + $0x20] sm:$0xff] %vm1409, %v1366
    %1413 = vst.msk [vmem:[#allocation4 + $0x30] sm:$0xff] %vm1409, %v1368
    %1414 = vst.msk [vmem:[#allocation4 + $0x40] sm:$0xff] %vm1409, %v1370
    %1415 = vst.msk [vmem:[#allocation4 + $0x50] sm:$0xff] %vm1409, %v1372
    %1416 = vst.msk [vmem:[#allocation4 + $0x60] sm:$0xff] %vm1409, %v1374
    %1417 = vst.msk [vmem:[#allocation4 + $0x70] sm:$0xff] %vm1409, %v1376
    %1418 = vst.msk [vmem:[#allocation4 + $0x80] sm:$0xff] %vm1409, %v1378
    %1419 = vst.msk [vmem:[#allocation4 + $0x90] sm:$0xff] %vm1409, %v1380
    %1420 = vst.msk [vmem:[#allocation4 + $0xa0] sm:$0xff] %vm1409, %v1382
    %1421 = vst.msk [vmem:[#allocation4 + $0xb0] sm:$0xff] %vm1409, %v1384
    %1422 = vst.msk [vmem:[#allocation4 + $0xc0] sm:$0xff] %vm1409, %v1386
    %1423 = vst.msk [vmem:[#allocation4 + $0xd0] sm:$0xff] %vm1409, %v1388
    %1424 = vst.msk [vmem:[#allocation4 + $0xe0] sm:$0xff] %vm1409, %v1390
    %1425 = vst.msk [vmem:[#allocation4 + $0xf0] sm:$0xff] %vm1409, %v1392
    %v1426 = vld [vmem:[#allocation3 + $0x2] sm:$0xff]
    %v1427 = vld [vmem:[#allocation3 + $0x12] sm:$0xff]
    %v1428 = vld [vmem:[#allocation3 + $0x22] sm:$0xff]
    %v1429 = vld [vmem:[#allocation3 + $0x32] sm:$0xff]
    %v1430 = vld [vmem:[#allocation3 + $0x42] sm:$0xff]
    %v1431 = vld [vmem:[#allocation3 + $0x52] sm:$0xff]
    %v1432 = vld [vmem:[#allocation3 + $0x62] sm:$0xff]
    %v1433 = vld [vmem:[#allocation3 + $0x72] sm:$0xff]
    %v1434 = vld [vmem:[#allocation3 + $0xa2] sm:$0xff]
    %v1435 = vld [vmem:[#allocation3 + $0xb2] sm:$0xff]
    %v1436 = vld [vmem:[#allocation3 + $0xc2] sm:$0xff]
    %v1437 = vld [vmem:[#allocation3 + $0xd2] sm:$0xff]
    %v1438 = vld [vmem:[#allocation3 + $0xe2] sm:$0xff]
    %v1439 = vld [vmem:[#allocation3 + $0xf2] sm:$0xff]
    %v1440 = vld [vmem:[#allocation3 + $0x102] sm:$0xff]
    %v1441 = vld [vmem:[#allocation3 + $0x112] sm:$0xff]
    %1458 = vrot.lane.b32.xlu0 %v1426, 32
    %v1459 = vpop.permute.xlu0 %1458
    %1460 = vrot.lane.b32.xlu0 %v1427, 32
    %v1461 = vpop.permute.xlu0 %1460
    %1462 = vrot.lane.b32.xlu0 %v1428, 32
    %v1463 = vpop.permute.xlu0 %1462
    %1464 = vrot.lane.b32.xlu0 %v1429, 32
    %v1465 = vpop.permute.xlu0 %1464
    %1466 = vrot.lane.b32.xlu0 %v1430, 32
    %v1467 = vpop.permute.xlu0 %1466
    %1468 = vrot.lane.b32.xlu0 %v1431, 32
    %v1469 = vpop.permute.xlu0 %1468
    %1470 = vrot.lane.b32.xlu0 %v1432, 32
    %v1471 = vpop.permute.xlu0 %1470
    %1472 = vrot.lane.b32.xlu0 %v1433, 32
    %v1473 = vpop.permute.xlu0 %1472
    %1474 = vrot.lane.b32.xlu0 %v1434, 32
    %v1475 = vpop.permute.xlu0 %1474
    %1476 = vrot.lane.b32.xlu0 %v1435, 32
    %v1477 = vpop.permute.xlu0 %1476
    %1478 = vrot.lane.b32.xlu0 %v1436, 32
    %v1479 = vpop.permute.xlu0 %1478
    %1480 = vrot.lane.b32.xlu0 %v1437, 32
    %v1481 = vpop.permute.xlu0 %1480
    %1482 = vrot.lane.b32.xlu0 %v1438, 32
    %v1483 = vpop.permute.xlu0 %1482
    %1484 = vrot.lane.b32.xlu0 %v1439, 32
    %v1485 = vpop.permute.xlu0 %1484
    %1486 = vrot.lane.b32.xlu0 %v1440, 32
    %v1487 = vpop.permute.xlu0 %1486
    %1488 = vrot.lane.b32.xlu0 %v1441, 32
    %v1489 = vpop.permute.xlu0 %1488
    %vm1506 = vcmask 392448
    %1507 = vst.msk [vmem:[#allocation4] sm:$0xff] %vm1506, %v1459
    %1508 = vst.msk [vmem:[#allocation4 + $0x10] sm:$0xff] %vm1506, %v1461
    %1509 = vst.msk [vmem:[#allocation4 + $0x20] sm:$0xff] %vm1506, %v1463
    %1510 = vst.msk [vmem:[#allocation4 + $0x30] sm:$0xff] %vm1506, %v1465
    %1511 = vst.msk [vmem:[#allocation4 + $0x40] sm:$0xff] %vm1506, %v1467
    %1512 = vst.msk [vmem:[#allocation4 + $0x50] sm:$0xff] %vm1506, %v1469
    %1513 = vst.msk [vmem:[#allocation4 + $0x60] sm:$0xff] %vm1506, %v1471
    %1514 = vst.msk [vmem:[#allocation4 + $0x70] sm:$0xff] %vm1506, %v1473
    %1515 = vst.msk [vmem:[#allocation4 + $0x80] sm:$0xff] %vm1506, %v1475
    %1516 = vst.msk [vmem:[#allocation4 + $0x90] sm:$0xff] %vm1506, %v1477
    %1517 = vst.msk [vmem:[#allocation4 + $0xa0] sm:$0xff] %vm1506, %v1479
    %1518 = vst.msk [vmem:[#allocation4 + $0xb0] sm:$0xff] %vm1506, %v1481
    %1519 = vst.msk [vmem:[#allocation4 + $0xc0] sm:$0xff] %vm1506, %v1483
    %1520 = vst.msk [vmem:[#allocation4 + $0xd0] sm:$0xff] %vm1506, %v1485
    %1521 = vst.msk [vmem:[#allocation4 + $0xe0] sm:$0xff] %vm1506, %v1487
    %1522 = vst.msk [vmem:[#allocation4 + $0xf0] sm:$0xff] %vm1506, %v1489
    %v1523 = vld [vmem:[%s1280] sm:$0xff]
    %v1524 = vld [vmem:[%s1280 + $0x10] sm:$0xff]
    %v1525 = vld [vmem:[%s1280 + $0x20] sm:$0xff]
    %v1526 = vld [vmem:[%s1280 + $0x30] sm:$0xff]
    %v1527 = vld [vmem:[%s1280 + $0x40] sm:$0xff]
    %v1528 = vld [vmem:[%s1280 + $0x50] sm:$0xff]
    %v1529 = vld [vmem:[%s1280 + $0x60] sm:$0xff]
    %v1530 = vld [vmem:[%s1280 + $0x70] sm:$0xff]
    %v1531 = vld [vmem:[%s1280 + $0xa0] sm:$0xff]
    %v1532 = vld [vmem:[%s1280 + $0xb0] sm:$0xff]
    %v1533 = vld [vmem:[%s1280 + $0xc0] sm:$0xff]
    %v1534 = vld [vmem:[%s1280 + $0xd0] sm:$0xff]
    %v1535 = vld [vmem:[%s1280 + $0xe0] sm:$0xff]
    %v1536 = vld [vmem:[%s1280 + $0xf0] sm:$0xff]
    %v1537 = vld [vmem:[%s1280 + $0x100] sm:$0xff]
    %v1538 = vld [vmem:[%s1280 + $0x110] sm:$0xff]
    %1555 = vrot.lane.b32.xlu0 %v1523, 48
    %v1556 = vpop.permute.xlu0 %1555
    %1557 = vrot.lane.b32.xlu0 %v1524, 48
    %v1558 = vpop.permute.xlu0 %1557
    %1559 = vrot.lane.b32.xlu0 %v1525, 48
    %v1560 = vpop.permute.xlu0 %1559
    %1561 = vrot.lane.b32.xlu0 %v1526, 48
    %v1562 = vpop.permute.xlu0 %1561
    %1563 = vrot.lane.b32.xlu0 %v1527, 48
    %v1564 = vpop.permute.xlu0 %1563
    %1565 = vrot.lane.b32.xlu0 %v1528, 48
    %v1566 = vpop.permute.xlu0 %1565
    %1567 = vrot.lane.b32.xlu0 %v1529, 48
    %v1568 = vpop.permute.xlu0 %1567
    %1569 = vrot.lane.b32.xlu0 %v1530, 48
    %v1570 = vpop.permute.xlu0 %1569
    %1571 = vrot.lane.b32.xlu0 %v1531, 48
    %v1572 = vpop.permute.xlu0 %1571
    %1573 = vrot.lane.b32.xlu0 %v1532, 48
    %v1574 = vpop.permute.xlu0 %1573
    %1575 = vrot.lane.b32.xlu0 %v1533, 48
    %v1576 = vpop.permute.xlu0 %1575
    %1577 = vrot.lane.b32.xlu0 %v1534, 48
    %v1578 = vpop.permute.xlu0 %1577
    %1579 = vrot.lane.b32.xlu0 %v1535, 48
    %v1580 = vpop.permute.xlu0 %1579
    %1581 = vrot.lane.b32.xlu0 %v1536, 48
    %v1582 = vpop.permute.xlu0 %1581
    %1583 = vrot.lane.b32.xlu0 %v1537, 48
    %v1584 = vpop.permute.xlu0 %1583
    %1585 = vrot.lane.b32.xlu0 %v1538, 48
    %v1586 = vpop.permute.xlu0 %1585
    %vm1603 = vcmask 523648
    %1604 = vst.msk [vmem:[#allocation4] sm:$0xff] %vm1603, %v1556
    %1605 = vst.msk [vmem:[#allocation4 + $0x10] sm:$0xff] %vm1603, %v1558
    %1606 = vst.msk [vmem:[#allocation4 + $0x20] sm:$0xff] %vm1603, %v1560
    %1607 = vst.msk [vmem:[#allocation4 + $0x30] sm:$0xff] %vm1603, %v1562
    %1608 = vst.msk [vmem:[#allocation4 + $0x40] sm:$0xff] %vm1603, %v1564
    %1609 = vst.msk [vmem:[#allocation4 + $0x50] sm:$0xff] %vm1603, %v1566
    %1610 = vst.msk [vmem:[#allocation4 + $0x60] sm:$0xff] %vm1603, %v1568
    %1611 = vst.msk [vmem:[#allocation4 + $0x70] sm:$0xff] %vm1603, %v1570
    %1612 = vst.msk [vmem:[#allocation4 + $0x80] sm:$0xff] %vm1603, %v1572
    %1613 = vst.msk [vmem:[#allocation4 + $0x90] sm:$0xff] %vm1603, %v1574
    %1614 = vst.msk [vmem:[#allocation4 + $0xa0] sm:$0xff] %vm1603, %v1576
    %1615 = vst.msk [vmem:[#allocation4 + $0xb0] sm:$0xff] %vm1603, %v1578
    %1616 = vst.msk [vmem:[#allocation4 + $0xc0] sm:$0xff] %vm1603, %v1580
    %1617 = vst.msk [vmem:[#allocation4 + $0xd0] sm:$0xff] %vm1603, %v1582
    %1618 = vst.msk [vmem:[#allocation4 + $0xe0] sm:$0xff] %vm1603, %v1584
    %1619 = vst.msk [vmem:[#allocation4 + $0xf0] sm:$0xff] %vm1603, %v1586
    %v1620 = vld [vmem:[%s1280 + $0x1] sm:$0xff]
    %v1621 = vld [vmem:[%s1280 + $0x11] sm:$0xff]
    %v1622 = vld [vmem:[%s1280 + $0x21] sm:$0xff]
    %v1623 = vld [vmem:[%s1280 + $0x31] sm:$0xff]
    %v1624 = vld [vmem:[%s1280 + $0x41] sm:$0xff]
    %v1625 = vld [vmem:[%s1280 + $0x51] sm:$0xff]
    %v1626 = vld [vmem:[%s1280 + $0x61] sm:$0xff]
    %v1627 = vld [vmem:[%s1280 + $0x71] sm:$0xff]
    %v1628 = vld [vmem:[%s1280 + $0xa1] sm:$0xff]
    %v1629 = vld [vmem:[%s1280 + $0xb1] sm:$0xff]
    %v1630 = vld [vmem:[%s1280 + $0xc1] sm:$0xff]
    %v1631 = vld [vmem:[%s1280 + $0xd1] sm:$0xff]
    %v1632 = vld [vmem:[%s1280 + $0xe1] sm:$0xff]
    %v1633 = vld [vmem:[%s1280 + $0xf1] sm:$0xff]
    %v1634 = vld [vmem:[%s1280 + $0x101] sm:$0xff]
    %v1635 = vld [vmem:[%s1280 + $0x111] sm:$0xff]
    %1652 = vrot.lane.b32.xlu0 %v1620, 64
    %v1653 = vpop.permute.xlu0 %1652
    %1654 = vrot.lane.b32.xlu0 %v1621, 64
    %v1655 = vpop.permute.xlu0 %1654
    %1656 = vrot.lane.b32.xlu0 %v1622, 64
    %v1657 = vpop.permute.xlu0 %1656
    %1658 = vrot.lane.b32.xlu0 %v1623, 64
    %v1659 = vpop.permute.xlu0 %1658
    %1660 = vrot.lane.b32.xlu0 %v1624, 64
    %v1661 = vpop.permute.xlu0 %1660
    %1662 = vrot.lane.b32.xlu0 %v1625, 64
    %v1663 = vpop.permute.xlu0 %1662
    %1664 = vrot.lane.b32.xlu0 %v1626, 64
    %v1665 = vpop.permute.xlu0 %1664
    %1666 = vrot.lane.b32.xlu0 %v1627, 64
    %v1667 = vpop.permute.xlu0 %1666
    %1668 = vrot.lane.b32.xlu0 %v1628, 64
    %v1669 = vpop.permute.xlu0 %1668
    %1670 = vrot.lane.b32.xlu0 %v1629, 64
    %v1671 = vpop.permute.xlu0 %1670
    %1672 = vrot.lane.b32.xlu0 %v1630, 64
    %v1673 = vpop.permute.xlu0 %1672
    %1674 = vrot.lane.b32.xlu0 %v1631, 64
    %v1675 = vpop.permute.xlu0 %1674
    %1676 = vrot.lane.b32.xlu0 %v1632, 64
    %v1677 = vpop.permute.xlu0 %1676
    %1678 = vrot.lane.b32.xlu0 %v1633, 64
    %v1679 = vpop.permute.xlu0 %1678
    %1680 = vrot.lane.b32.xlu0 %v1634, 64
    %v1681 = vpop.permute.xlu0 %1680
    %1682 = vrot.lane.b32.xlu0 %v1635, 64
    %v1683 = vpop.permute.xlu0 %1682
    %vm1700 = vcmask 654848
    %1701 = vst.msk [vmem:[#allocation4] sm:$0xff] %vm1700, %v1653
    %1702 = vst.msk [vmem:[#allocation4 + $0x10] sm:$0xff] %vm1700, %v1655
    %1703 = vst.msk [vmem:[#allocation4 + $0x20] sm:$0xff] %vm1700, %v1657
    %1704 = vst.msk [vmem:[#allocation4 + $0x30] sm:$0xff] %vm1700, %v1659
    %1705 = vst.msk [vmem:[#allocation4 + $0x40] sm:$0xff] %vm1700, %v1661
    %1706 = vst.msk [vmem:[#allocation4 + $0x50] sm:$0xff] %vm1700, %v1663
    %1707 = vst.msk [vmem:[#allocation4 + $0x60] sm:$0xff] %vm1700, %v1665
    %1708 = vst.msk [vmem:[#allocation4 + $0x70] sm:$0xff] %vm1700, %v1667
    %1709 = vst.msk [vmem:[#allocation4 + $0x80] sm:$0xff] %vm1700, %v1669
    %1710 = vst.msk [vmem:[#allocation4 + $0x90] sm:$0xff] %vm1700, %v1671
    %1711 = vst.msk [vmem:[#allocation4 + $0xa0] sm:$0xff] %vm1700, %v1673
    %1712 = vst.msk [vmem:[#allocation4 + $0xb0] sm:$0xff] %vm1700, %v1675
    %1713 = vst.msk [vmem:[#allocation4 + $0xc0] sm:$0xff] %vm1700, %v1677
    %1714 = vst.msk [vmem:[#allocation4 + $0xd0] sm:$0xff] %vm1700, %v1679
    %1715 = vst.msk [vmem:[#allocation4 + $0xe0] sm:$0xff] %vm1700, %v1681
    %1716 = vst.msk [vmem:[#allocation4 + $0xf0] sm:$0xff] %vm1700, %v1683
    %v1717 = vld [vmem:[%s1280 + $0x2] sm:$0xff]
    %v1718 = vld [vmem:[%s1280 + $0x12] sm:$0xff]
    %v1719 = vld [vmem:[%s1280 + $0x22] sm:$0xff]
    %v1720 = vld [vmem:[%s1280 + $0x32] sm:$0xff]
    %v1721 = vld [vmem:[%s1280 + $0x42] sm:$0xff]
    %v1722 = vld [vmem:[%s1280 + $0x52] sm:$0xff]
    %v1723 = vld [vmem:[%s1280 + $0x62] sm:$0xff]
    %v1724 = vld [vmem:[%s1280 + $0x72] sm:$0xff]
    %v1725 = vld [vmem:[%s1280 + $0xa2] sm:$0xff]
    %v1726 = vld [vmem:[%s1280 + $0xb2] sm:$0xff]
    %v1727 = vld [vmem:[%s1280 + $0xc2] sm:$0xff]
    %v1728 = vld [vmem:[%s1280 + $0xd2] sm:$0xff]
    %v1729 = vld [vmem:[%s1280 + $0xe2] sm:$0xff]
    %v1730 = vld [vmem:[%s1280 + $0xf2] sm:$0xff]
    %v1731 = vld [vmem:[%s1280 + $0x102] sm:$0xff]
    %v1732 = vld [vmem:[%s1280 + $0x112] sm:$0xff]
    %1749 = vrot.lane.b32.xlu0 %v1717, 80
    %v1750 = vpop.permute.xlu0 %1749
    %1751 = vrot.lane.b32.xlu0 %v1718, 80
    %v1752 = vpop.permute.xlu0 %1751
    %1753 = vrot.lane.b32.xlu0 %v1719, 80
    %v1754 = vpop.permute.xlu0 %1753
    %1755 = vrot.lane.b32.xlu0 %v1720, 80
    %v1756 = vpop.permute.xlu0 %1755
    %1757 = vrot.lane.b32.xlu0 %v1721, 80
    %v1758 = vpop.permute.xlu0 %1757
    %1759 = vrot.lane.b32.xlu0 %v1722, 80
    %v1760 = vpop.permute.xlu0 %1759
    %1761 = vrot.lane.b32.xlu0 %v1723, 80
    %v1762 = vpop.permute.xlu0 %1761
    %1763 = vrot.lane.b32.xlu0 %v1724, 80
    %v1764 = vpop.permute.xlu0 %1763
    %1765 = vrot.lane.b32.xlu0 %v1725, 80
    %v1766 = vpop.permute.xlu0 %1765
    %1767 = vrot.lane.b32.xlu0 %v1726, 80
    %v1768 = vpop.permute.xlu0 %1767
    %1769 = vrot.lane.b32.xlu0 %v1727, 80
    %v1770 = vpop.permute.xlu0 %1769
    %1771 = vrot.lane.b32.xlu0 %v1728, 80
    %v1772 = vpop.permute.xlu0 %1771
    %1773 = vrot.lane.b32.xlu0 %v1729, 80
    %v1774 = vpop.permute.xlu0 %1773
    %1775 = vrot.lane.b32.xlu0 %v1730, 80
    %v1776 = vpop.permute.xlu0 %1775
    %1777 = vrot.lane.b32.xlu0 %v1731, 80
    %v1778 = vpop.permute.xlu0 %1777
    %1779 = vrot.lane.b32.xlu0 %v1732, 80
    %v1780 = vpop.permute.xlu0 %1779
    %vm1797 = vcmask 786048
    %1798 = vst.msk [vmem:[#allocation4] sm:$0xff] %vm1797, %v1750
    %1799 = vst.msk [vmem:[#allocation4 + $0x10] sm:$0xff] %vm1797, %v1752
    %1800 = vst.msk [vmem:[#allocation4 + $0x20] sm:$0xff] %vm1797, %v1754
    %1801 = vst.msk [vmem:[#allocation4 + $0x30] sm:$0xff] %vm1797, %v1756
    %1802 = vst.msk [vmem:[#allocation4 + $0x40] sm:$0xff] %vm1797, %v1758
    %1803 = vst.msk [vmem:[#allocation4 + $0x50] sm:$0xff] %vm1797, %v1760
    %1804 = vst.msk [vmem:[#allocation4 + $0x60] sm:$0xff] %vm1797, %v1762
    %1805 = vst.msk [vmem:[#allocation4 + $0x70] sm:$0xff] %vm1797, %v1764
    %1806 = vst.msk [vmem:[#allocation4 + $0x80] sm:$0xff] %vm1797, %v1766
    %1807 = vst.msk [vmem:[#allocation4 + $0x90] sm:$0xff] %vm1797, %v1768
    %1808 = vst.msk [vmem:[#allocation4 + $0xa0] sm:$0xff] %vm1797, %v1770
    %1809 = vst.msk [vmem:[#allocation4 + $0xb0] sm:$0xff] %vm1797, %v1772
    %1810 = vst.msk [vmem:[#allocation4 + $0xc0] sm:$0xff] %vm1797, %v1774
    %1811 = vst.msk [vmem:[#allocation4 + $0xd0] sm:$0xff] %vm1797, %v1776
    %1812 = vst.msk [vmem:[#allocation4 + $0xe0] sm:$0xff] %vm1797, %v1778
    %1813 = vst.msk [vmem:[#allocation4 + $0xf0] sm:$0xff] %vm1797, %v1780
    %s1814 = scalar_lea.vmem [#allocation3], 32
    %v1815 = vld [vmem:[%s1814] sm:$0xff]
    %v1816 = vld [vmem:[%s1814 + $0x10] sm:$0xff]
    %v1817 = vld [vmem:[%s1814 + $0x20] sm:$0xff]
    %v1818 = vld [vmem:[%s1814 + $0x30] sm:$0xff]
    %v1819 = vld [vmem:[%s1814 + $0x40] sm:$0xff]
    %v1820 = vld [vmem:[%s1814 + $0x50] sm:$0xff]
    %v1821 = vld [vmem:[%s1814 + $0x60] sm:$0xff]
    %v1822 = vld [vmem:[%s1814 + $0x70] sm:$0xff]
    %v1823 = vld [vmem:[%s1814 + $0xa0] sm:$0xff]
    %v1824 = vld [vmem:[%s1814 + $0xb0] sm:$0xff]
    %v1825 = vld [vmem:[%s1814 + $0xc0] sm:$0xff]
    %v1826 = vld [vmem:[%s1814 + $0xd0] sm:$0xff]
    %v1827 = vld [vmem:[%s1814 + $0xe0] sm:$0xff]
    %v1828 = vld [vmem:[%s1814 + $0xf0] sm:$0xff]
    %v1829 = vld [vmem:[%s1814 + $0x100] sm:$0xff]
    %v1830 = vld [vmem:[%s1814 + $0x110] sm:$0xff]
    %1847 = vrot.lane.b32.xlu0 %v1815, 96
    %v1848 = vpop.permute.xlu0 %1847
    %1849 = vrot.lane.b32.xlu0 %v1816, 96
    %v1850 = vpop.permute.xlu0 %1849
    %1851 = vrot.lane.b32.xlu0 %v1817, 96
    %v1852 = vpop.permute.xlu0 %1851
    %1853 = vrot.lane.b32.xlu0 %v1818, 96
    %v1854 = vpop.permute.xlu0 %1853
    %1855 = vrot.lane.b32.xlu0 %v1819, 96
    %v1856 = vpop.permute.xlu0 %1855
    %1857 = vrot.lane.b32.xlu0 %v1820, 96
    %v1858 = vpop.permute.xlu0 %1857
    %1859 = vrot.lane.b32.xlu0 %v1821, 96
    %v1860 = vpop.permute.xlu0 %1859
    %1861 = vrot.lane.b32.xlu0 %v1822, 96
    %v1862 = vpop.permute.xlu0 %1861
    %1863 = vrot.lane.b32.xlu0 %v1823, 96
    %v1864 = vpop.permute.xlu0 %1863
    %1865 = vrot.lane.b32.xlu0 %v1824, 96
    %v1866 = vpop.permute.xlu0 %1865
    %1867 = vrot.lane.b32.xlu0 %v1825, 96
    %v1868 = vpop.permute.xlu0 %1867
    %1869 = vrot.lane.b32.xlu0 %v1826, 96
    %v1870 = vpop.permute.xlu0 %1869
    %1871 = vrot.lane.b32.xlu0 %v1827, 96
    %v1872 = vpop.permute.xlu0 %1871
    %1873 = vrot.lane.b32.xlu0 %v1828, 96
    %v1874 = vpop.permute.xlu0 %1873
    %1875 = vrot.lane.b32.xlu0 %v1829, 96
    %v1876 = vpop.permute.xlu0 %1875
    %1877 = vrot.lane.b32.xlu0 %v1830, 96
    %v1878 = vpop.permute.xlu0 %1877
    %vm1895 = vcmask 917248
    %1896 = vst.msk [vmem:[#allocation4] sm:$0xff] %vm1895, %v1848
    %1897 = vst.msk [vmem:[#allocation4 + $0x10] sm:$0xff] %vm1895, %v1850
    %1898 = vst.msk [vmem:[#allocation4 + $0x20] sm:$0xff] %vm1895, %v1852
    %1899 = vst.msk [vmem:[#allocation4 + $0x30] sm:$0xff] %vm1895, %v1854
    %1900 = vst.msk [vmem:[#allocation4 + $0x40] sm:$0xff] %vm1895, %v1856
    %1901 = vst.msk [vmem:[#allocation4 + $0x50] sm:$0xff] %vm1895, %v1858
    %1902 = vst.msk [vmem:[#allocation4 + $0x60] sm:$0xff] %vm1895, %v1860
    %1903 = vst.msk [vmem:[#allocation4 + $0x70] sm:$0xff] %vm1895, %v1862
    %1904 = vst.msk [vmem:[#allocation4 + $0x80] sm:$0xff] %vm1895, %v1864
    %1905 = vst.msk [vmem:[#allocation4 + $0x90] sm:$0xff] %vm1895, %v1866
    %1906 = vst.msk [vmem:[#allocation4 + $0xa0] sm:$0xff] %vm1895, %v1868
    %1907 = vst.msk [vmem:[#allocation4 + $0xb0] sm:$0xff] %vm1895, %v1870
    %1908 = vst.msk [vmem:[#allocation4 + $0xc0] sm:$0xff] %vm1895, %v1872
    %1909 = vst.msk [vmem:[#allocation4 + $0xd0] sm:$0xff] %vm1895, %v1874
    %1910 = vst.msk [vmem:[#allocation4 + $0xe0] sm:$0xff] %vm1895, %v1876
    %1911 = vst.msk [vmem:[#allocation4 + $0xf0] sm:$0xff] %vm1895, %v1878
    %v1912 = vld [vmem:[%s1814 + $0x1] sm:$0xff]
    %v1913 = vld [vmem:[%s1814 + $0x11] sm:$0xff]
    %v1914 = vld [vmem:[%s1814 + $0x21] sm:$0xff]
    %v1915 = vld [vmem:[%s1814 + $0x31] sm:$0xff]
    %v1916 = vld [vmem:[%s1814 + $0x41] sm:$0xff]
    %v1917 = vld [vmem:[%s1814 + $0x51] sm:$0xff]
    %v1918 = vld [vmem:[%s1814 + $0x61] sm:$0xff]
    %v1919 = vld [vmem:[%s1814 + $0x71] sm:$0xff]
    %v1920 = vld [vmem:[%s1814 + $0xa1] sm:$0xff]
    %v1921 = vld [vmem:[%s1814 + $0xb1] sm:$0xff]
    %v1922 = vld [vmem:[%s1814 + $0xc1] sm:$0xff]
    %v1923 = vld [vmem:[%s1814 + $0xd1] sm:$0xff]
    %v1924 = vld [vmem:[%s1814 + $0xe1] sm:$0xff]
    %v1925 = vld [vmem:[%s1814 + $0xf1] sm:$0xff]
    %v1926 = vld [vmem:[%s1814 + $0x101] sm:$0xff]
    %v1927 = vld [vmem:[%s1814 + $0x111] sm:$0xff]
    %1944 = vrot.lane.b32.xlu0 %v1912, 112
    %v1945 = vpop.permute.xlu0 %1944
    %1946 = vrot.lane.b32.xlu0 %v1913, 112
    %v1947 = vpop.permute.xlu0 %1946
    %1948 = vrot.lane.b32.xlu0 %v1914, 112
    %v1949 = vpop.permute.xlu0 %1948
    %1950 = vrot.lane.b32.xlu0 %v1915, 112
    %v1951 = vpop.permute.xlu0 %1950
    %1952 = vrot.lane.b32.xlu0 %v1916, 112
    %v1953 = vpop.permute.xlu0 %1952
    %1954 = vrot.lane.b32.xlu0 %v1917, 112
    %v1955 = vpop.permute.xlu0 %1954
    %1956 = vrot.lane.b32.xlu0 %v1918, 112
    %v1957 = vpop.permute.xlu0 %1956
    %1958 = vrot.lane.b32.xlu0 %v1919, 112
    %v1959 = vpop.permute.xlu0 %1958
    %1960 = vrot.lane.b32.xlu0 %v1920, 112
    %v1961 = vpop.permute.xlu0 %1960
    %1962 = vrot.lane.b32.xlu0 %v1921, 112
    %v1963 = vpop.permute.xlu0 %1962
    %1964 = vrot.lane.b32.xlu0 %v1922, 112
    %v1965 = vpop.permute.xlu0 %1964
    %1966 = vrot.lane.b32.xlu0 %v1923, 112
    %v1967 = vpop.permute.xlu0 %1966
    %1968 = vrot.lane.b32.xlu0 %v1924, 112
    %v1969 = vpop.permute.xlu0 %1968
    %1970 = vrot.lane.b32.xlu0 %v1925, 112
    %v1971 = vpop.permute.xlu0 %1970
    %1972 = vrot.lane.b32.xlu0 %v1926, 112
    %v1973 = vpop.permute.xlu0 %1972
    %1974 = vrot.lane.b32.xlu0 %v1927, 112
    %v1975 = vpop.permute.xlu0 %1974
    %vm1992 = vcmask 1048448
    %1993 = vst.msk [vmem:[#allocation4] sm:$0xff] %vm1992, %v1945
    %1994 = vst.msk [vmem:[#allocation4 + $0x10] sm:$0xff] %vm1992, %v1947
    %1995 = vst.msk [vmem:[#allocation4 + $0x20] sm:$0xff] %vm1992, %v1949
    %1996 = vst.msk [vmem:[#allocation4 + $0x30] sm:$0xff] %vm1992, %v1951
    %1997 = vst.msk [vmem:[#allocation4 + $0x40] sm:$0xff] %vm1992, %v1953
    %1998 = vst.msk [vmem:[#allocation4 + $0x50] sm:$0xff] %vm1992, %v1955
    %1999 = vst.msk [vmem:[#allocation4 + $0x60] sm:$0xff] %vm1992, %v1957
    %2000 = vst.msk [vmem:[#allocation4 + $0x70] sm:$0xff] %vm1992, %v1959
    %2001 = vst.msk [vmem:[#allocation4 + $0x80] sm:$0xff] %vm1992, %v1961
    %2002 = vst.msk [vmem:[#allocation4 + $0x90] sm:$0xff] %vm1992, %v1963
    %2003 = vst.msk [vmem:[#allocation4 + $0xa0] sm:$0xff] %vm1992, %v1965
    %2004 = vst.msk [vmem:[#allocation4 + $0xb0] sm:$0xff] %vm1992, %v1967
    %2005 = vst.msk [vmem:[#allocation4 + $0xc0] sm:$0xff] %vm1992, %v1969
    %2006 = vst.msk [vmem:[#allocation4 + $0xd0] sm:$0xff] %vm1992, %v1971
    %2007 = vst.msk [vmem:[#allocation4 + $0xe0] sm:$0xff] %vm1992, %v1973
    %2008 = vst.msk [vmem:[#allocation4 + $0xf0] sm:$0xff] %vm1992, %v1975
    %v2009 = vld [vmem:[%s1814 + $0x2] sm:$0xff]
    %v2010 = vld [vmem:[%s1814 + $0x12] sm:$0xff]
    %v2011 = vld [vmem:[%s1814 + $0x22] sm:$0xff]
    %v2012 = vld [vmem:[%s1814 + $0x32] sm:$0xff]
    %v2013 = vld [vmem:[%s1814 + $0x42] sm:$0xff]
    %v2014 = vld [vmem:[%s1814 + $0x52] sm:$0xff]
    %v2015 = vld [vmem:[%s1814 + $0x62] sm:$0xff]
    %v2016 = vld [vmem:[%s1814 + $0x72] sm:$0xff]
    %v2017 = vld [vmem:[%s1814 + $0xa2] sm:$0xff]
    %v2018 = vld [vmem:[%s1814 + $0xb2] sm:$0xff]
    %v2019 = vld [vmem:[%s1814 + $0xc2] sm:$0xff]
    %v2020 = vld [vmem:[%s1814 + $0xd2] sm:$0xff]
    %v2021 = vld [vmem:[%s1814 + $0xe2] sm:$0xff]
    %v2022 = vld [vmem:[%s1814 + $0xf2] sm:$0xff]
    %v2023 = vld [vmem:[%s1814 + $0x102] sm:$0xff]
    %v2024 = vld [vmem:[%s1814 + $0x112] sm:$0xff]
    %2025 = vst.msk [vmem:[#allocation4 + $0x8] sm:$0xff] %vm488, %v2009
    %2026 = vst.msk [vmem:[#allocation4 + $0x18] sm:$0xff] %vm488, %v2010
    %2027 = vst.msk [vmem:[#allocation4 + $0x28] sm:$0xff] %vm488, %v2011
    %2028 = vst.msk [vmem:[#allocation4 + $0x38] sm:$0xff] %vm488, %v2012
    %2029 = vst.msk [vmem:[#allocation4 + $0x48] sm:$0xff] %vm488, %v2013
    %2030 = vst.msk [vmem:[#allocation4 + $0x58] sm:$0xff] %vm488, %v2014
    %2031 = vst.msk [vmem:[#allocation4 + $0x68] sm:$0xff] %vm488, %v2015
    %2032 = vst.msk [vmem:[#allocation4 + $0x78] sm:$0xff] %vm488, %v2016
    %2033 = vst.msk [vmem:[#allocation4 + $0x88] sm:$0xff] %vm488, %v2017
    %2034 = vst.msk [vmem:[#allocation4 + $0x98] sm:$0xff] %vm488, %v2018
    %2035 = vst.msk [vmem:[#allocation4 + $0xa8] sm:$0xff] %vm488, %v2019
    %2036 = vst.msk [vmem:[#allocation4 + $0xb8] sm:$0xff] %vm488, %v2020
    %2037 = vst.msk [vmem:[#allocation4 + $0xc8] sm:$0xff] %vm488, %v2021
    %2038 = vst.msk [vmem:[#allocation4 + $0xd8] sm:$0xff] %vm488, %v2022
    %2039 = vst.msk [vmem:[#allocation4 + $0xe8] sm:$0xff] %vm488, %v2023
    %2040 = vst.msk [vmem:[#allocation4 + $0xf8] sm:$0xff] %vm488, %v2024
    %v2041 = vld [vmem:[#allocation4] sm:$0xff]
    %v2042 = vld [vmem:[#allocation4 + $0x8] sm:$0xff]
    %v2043 = vld [vmem:[#allocation4 + $0x10] sm:$0xff]
    %v2044 = vld [vmem:[#allocation4 + $0x18] sm:$0xff]
    %v2045 = vld [vmem:[#allocation4 + $0x20] sm:$0xff]
    %v2046 = vld [vmem:[#allocation4 + $0x28] sm:$0xff]
    %v2047 = vld [vmem:[#allocation4 + $0x30] sm:$0xff]
    %v2048 = vld [vmem:[#allocation4 + $0x38] sm:$0xff]
    %v2049 = vld [vmem:[#allocation4 + $0x40] sm:$0xff]
    %v2050 = vld [vmem:[#allocation4 + $0x48] sm:$0xff]
    %v2051 = vld [vmem:[#allocation4 + $0x50] sm:$0xff]
    %v2052 = vld [vmem:[#allocation4 + $0x58] sm:$0xff]
    %v2053 = vld [vmem:[#allocation4 + $0x60] sm:$0xff]
    %v2054 = vld [vmem:[#allocation4 + $0x68] sm:$0xff]
    %v2055 = vld [vmem:[#allocation4 + $0x70] sm:$0xff]
    %v2056 = vld [vmem:[#allocation4 + $0x78] sm:$0xff]
    %v2057 = vld [vmem:[#allocation4 + $0x80] sm:$0xff]
    %v2058 = vld [vmem:[#allocation4 + $0x88] sm:$0xff]
    %v2059 = vld [vmem:[#allocation4 + $0x90] sm:$0xff]
    %v2060 = vld [vmem:[#allocation4 + $0x98] sm:$0xff]
    %v2061 = vld [vmem:[#allocation4 + $0xa0] sm:$0xff]
    %v2062 = vld [vmem:[#allocation4 + $0xa8] sm:$0xff]
    %v2063 = vld [vmem:[#allocation4 + $0xb0] sm:$0xff]
    %v2064 = vld [vmem:[#allocation4 + $0xb8] sm:$0xff]
    %v2065 = vld [vmem:[#allocation4 + $0xc0] sm:$0xff]
    %v2066 = vld [vmem:[#allocation4 + $0xc8] sm:$0xff]
    %v2067 = vld [vmem:[#allocation4 + $0xd0] sm:$0xff]
    %v2068 = vld [vmem:[#allocation4 + $0xd8] sm:$0xff]
    %v2069 = vld [vmem:[#allocation4 + $0xe0] sm:$0xff]
    %v2070 = vld [vmem:[#allocation4 + $0xe8] sm:$0xff]
    %v2071 = vld [vmem:[#allocation4 + $0xf0] sm:$0xff]
    %v2072 = vld [vmem:[#allocation4 + $0xf8] sm:$0xff]
    %s2073 = scalar_lea.vmem %s1, 144
    %v2074 = vld [vmem:[%s2073] sm:$0xff]
    %v2075 = vld [vmem:[%s2073 + $0x8] sm:$0xff]
    %v2076 = vld [vmem:[%s2073 + $0x10] sm:$0xff]
    %v2077 = vld [vmem:[%s2073 + $0x18] sm:$0xff]
    %v2078 = vld [vmem:[%s2073 + $0x20] sm:$0xff]
    %v2079 = vld [vmem:[%s2073 + $0x28] sm:$0xff]
    %v2080 = vld [vmem:[%s2073 + $0x30] sm:$0xff]
    %v2081 = vld [vmem:[%s2073 + $0x38] sm:$0xff]
    %v2082 = vld [vmem:[%s2073 + $0x40] sm:$0xff]
    %v2083 = vld [vmem:[%s2073 + $0x48] sm:$0xff]
    %v2084 = vld [vmem:[%s2073 + $0x50] sm:$0xff]
    %v2085 = vld [vmem:[%s2073 + $0x58] sm:$0xff]
    %v2086 = vld [vmem:[%s2073 + $0x60] sm:$0xff]
    %v2087 = vld [vmem:[%s2073 + $0x68] sm:$0xff]
    %v2088 = vld [vmem:[%s2073 + $0x70] sm:$0xff]
    %v2089 = vld [vmem:[%s2073 + $0x78] sm:$0xff]
    %v2090 = vld [vmem:[%s2073 + $0x80] sm:$0xff]
    %v2091 = vld [vmem:[%s2073 + $0x88] sm:$0xff]
    %v2093 = vsel %vm488, %v2042, 0
    %v2096 = vsel %vm488, %v2044, 0
    %v2099 = vsel %vm488, %v2046, 0
    %v2102 = vsel %vm488, %v2048, 0
    %v2105 = vsel %vm488, %v2050, 0
    %v2108 = vsel %vm488, %v2052, 0
    %v2111 = vsel %vm488, %v2054, 0
    %v2114 = vsel %vm488, %v2056, 0
    %v2117 = vsel %vm488, %v2058, 0
    %v2120 = vsel %vm488, %v2060, 0
    %v2123 = vsel %vm488, %v2062, 0
    %v2126 = vsel %vm488, %v2064, 0
    %v2129 = vsel %vm488, %v2066, 0
    %v2132 = vsel %vm488, %v2068, 0
    %v2135 = vsel %vm488, %v2070, 0
    %v2138 = vsel %vm488, %v2072, 0
    %2140 = vmatpush.msra.mxu0 %v2089
    %2141 = vmatpush.msra.mxu0 %v2088
    %2142 = vmatpush.msra.mxu0 %v2087
    %2143 = vmatpush.msra.mxu0 %v2086
    %2144 = vmatpush.msra.mxu0 %v2085
    %2145 = vmatpush.msra.mxu0 %v2084
    %2146 = vmatpush.msra.mxu0 %v2083
    %2147 = vmatpush.msra.mxu0 %v2082
    %2148 = vmatpush.msra.mxu0 %v2081
    %2149 = vmatpush.msra.mxu0 %v2080
    %2150 = vmatpush.msra.mxu0 %v2079
    %2151 = vmatpush.msra.mxu0 %v2078
    %2152 = vmatpush.msra.mxu0 %v2077
    %2153 = vmatpush.msra.mxu0 %v2076
    %2154 = vmatpush.msra.mxu0 %v2075
    %2155 = vmatpush.msra.mxu0 %v2074
    %2156 = vmatmul.f32.gmra.mxu0 %v2041
    %v2157 = vpop.f32.mrf.mxu0
    %v2158 = vadd.f32 0.0, %v2157
    %2159 = vmatmul.f32.gmra.mxu0 %v2043
    %v2160 = vpop.f32.mrf.mxu0
    %v2161 = vadd.f32 0.0, %v2160
    %2162 = vmatmul.f32.gmra.mxu0 %v2045
    %v2163 = vpop.f32.mrf.mxu0
    %v2164 = vadd.f32 0.0, %v2163
    %2165 = vmatmul.f32.gmra.mxu0 %v2047
    %v2166 = vpop.f32.mrf.mxu0
    %v2167 = vadd.f32 0.0, %v2166
    %2168 = vmatmul.f32.gmra.mxu0 %v2049
    %v2169 = vpop.f32.mrf.mxu0
    %v2170 = vadd.f32 0.0, %v2169
    %2171 = vmatmul.f32.gmra.mxu0 %v2051
    %v2172 = vpop.f32.mrf.mxu0
    %v2173 = vadd.f32 0.0, %v2172
    %2174 = vmatmul.f32.gmra.mxu0 %v2053
    %v2175 = vpop.f32.mrf.mxu0
    %v2176 = vadd.f32 0.0, %v2175
    %2177 = vmatmul.f32.gmra.mxu0 %v2055
    %v2178 = vpop.f32.mrf.mxu0
    %v2179 = vadd.f32 0.0, %v2178
    %2180 = vmatmul.f32.gmra.mxu0 %v2057
    %v2181 = vpop.f32.mrf.mxu0
    %v2182 = vadd.f32 0.0, %v2181
    %2183 = vmatmul.f32.gmra.mxu0 %v2059
    %v2184 = vpop.f32.mrf.mxu0
    %v2185 = vadd.f32 0.0, %v2184
    %2186 = vmatmul.f32.gmra.mxu0 %v2061
    %v2187 = vpop.f32.mrf.mxu0
    %v2188 = vadd.f32 0.0, %v2187
    %2189 = vmatmul.f32.gmra.mxu0 %v2063
    %v2190 = vpop.f32.mrf.mxu0
    %v2191 = vadd.f32 0.0, %v2190
    %2192 = vmatmul.f32.gmra.mxu0 %v2065
    %v2193 = vpop.f32.mrf.mxu0
    %v2194 = vadd.f32 0.0, %v2193
    %2195 = vmatmul.f32.gmra.mxu0 %v2067
    %v2196 = vpop.f32.mrf.mxu0
    %v2197 = vadd.f32 0.0, %v2196
    %2198 = vmatmul.f32.gmra.mxu0 %v2069
    %v2199 = vpop.f32.mrf.mxu0
    %v2200 = vadd.f32 0.0, %v2199
    %2201 = vmatmul.f32.gmra.mxu0 %v2071
    %v2202 = vpop.f32.mrf.mxu0
    %v2203 = vadd.f32 0.0, %v2202
    %2204 = vdwg.mxu0
    %2205 = vmatpush.msra.mxu0 0.0
    %2206 = vmatpush.msra.mxu0 0.0
    %2207 = vmatpush.msra.mxu0 0.0
    %2208 = vmatpush.msra.mxu0 0.0
    %2209 = vmatpush.msra.mxu0 0.0
    %2210 = vmatpush.msra.mxu0 0.0
    %2211 = vmatpush.msra.mxu0 0.0
    %2212 = vmatpush.msra.mxu0 0.0
    %2213 = vmatpush.msra.mxu0 0.0
    %2214 = vmatpush.msra.mxu0 0.0
    %2215 = vmatpush.msra.mxu0 0.0
    %2216 = vmatpush.msra.mxu0 0.0
    %2217 = vmatpush.msra.mxu0 0.0
    %2218 = vmatpush.msra.mxu0 0.0
    %2219 = vmatpush.msra.mxu0 %v2091
    %2220 = vmatpush.msra.mxu0 %v2090
    %2221 = vmatmul.f32.gmra.mxu0 %v2093
    %v2222 = vpop.f32.mrf.mxu0
    %v2223 = vadd.f32 %v2158, %v2222
    %2224 = vmatmul.f32.gmra.mxu0 %v2096
    %v2225 = vpop.f32.mrf.mxu0
    %v2226 = vadd.f32 %v2161, %v2225
    %2227 = vmatmul.f32.gmra.mxu0 %v2099
    %v2228 = vpop.f32.mrf.mxu0
    %v2229 = vadd.f32 %v2164, %v2228
    %2230 = vmatmul.f32.gmra.mxu0 %v2102
    %v2231 = vpop.f32.mrf.mxu0
    %v2232 = vadd.f32 %v2167, %v2231
    %2233 = vmatmul.f32.gmra.mxu0 %v2105
    %v2234 = vpop.f32.mrf.mxu0
    %v2235 = vadd.f32 %v2170, %v2234
    %2236 = vmatmul.f32.gmra.mxu0 %v2108
    %v2237 = vpop.f32.mrf.mxu0
    %v2238 = vadd.f32 %v2173, %v2237
    %2239 = vmatmul.f32.gmra.mxu0 %v2111
    %v2240 = vpop.f32.mrf.mxu0
    %v2241 = vadd.f32 %v2176, %v2240
    %2242 = vmatmul.f32.gmra.mxu0 %v2114
    %v2243 = vpop.f32.mrf.mxu0
    %v2244 = vadd.f32 %v2179, %v2243
    %2245 = vmatmul.f32.gmra.mxu0 %v2117
    %v2246 = vpop.f32.mrf.mxu0
    %v2247 = vadd.f32 %v2182, %v2246
    %2248 = vmatmul.f32.gmra.mxu0 %v2120
    %v2249 = vpop.f32.mrf.mxu0
    %v2250 = vadd.f32 %v2185, %v2249
    %2251 = vmatmul.f32.gmra.mxu0 %v2123
    %v2252 = vpop.f32.mrf.mxu0
    %v2253 = vadd.f32 %v2188, %v2252
    %2254 = vmatmul.f32.gmra.mxu0 %v2126
    %v2255 = vpop.f32.mrf.mxu0
    %v2256 = vadd.f32 %v2191, %v2255
    %2257 = vmatmul.f32.gmra.mxu0 %v2129
    %v2258 = vpop.f32.mrf.mxu0
    %v2259 = vadd.f32 %v2194, %v2258
    %2260 = vmatmul.f32.gmra.mxu0 %v2132
    %v2261 = vpop.f32.mrf.mxu0
    %v2262 = vadd.f32 %v2197, %v2261
    %2263 = vmatmul.f32.gmra.mxu0 %v2135
    %v2264 = vpop.f32.mrf.mxu0
    %v2265 = vadd.f32 %v2200, %v2264
    %2266 = vmatmul.f32.gmra.mxu0 %v2138
    %v2267 = vpop.f32.mrf.mxu0
    %v2268 = vadd.f32 %v2203, %v2267
    %2269 = vdwg.mxu0
    %v2270 = vsel %vm488, %v2223, 0.0
    %v2271 = vsel %vm488, %v2226, 0.0
    %v2272 = vadd.f32 %v2270, %v2271
    %v2273 = vsel %vm488, %v2229, 0.0
    %v2274 = vadd.f32 %v2272, %v2273
    %v2275 = vsel %vm488, %v2232, 0.0
    %v2276 = vadd.f32 %v2274, %v2275
    %v2277 = vsel %vm488, %v2235, 0.0
    %v2278 = vadd.f32 %v2276, %v2277
    %v2279 = vsel %vm488, %v2238, 0.0
    %v2280 = vadd.f32 %v2278, %v2279
    %v2281 = vsel %vm488, %v2241, 0.0
    %v2282 = vadd.f32 %v2280, %v2281
    %v2283 = vsel %vm488, %v2244, 0.0
    %v2284 = vadd.f32 %v2282, %v2283
    %v2285 = vsel %vm488, %v2247, 0.0
    %v2286 = vadd.f32 %v2284, %v2285
    %v2287 = vsel %vm488, %v2250, 0.0
    %v2288 = vadd.f32 %v2286, %v2287
    %v2289 = vsel %vm488, %v2253, 0.0
    %v2290 = vadd.f32 %v2288, %v2289
    %v2291 = vsel %vm488, %v2256, 0.0
    %v2292 = vadd.f32 %v2290, %v2291
    %v2293 = vsel %vm488, %v2259, 0.0
    %v2294 = vadd.f32 %v2292, %v2293
    %v2295 = vsel %vm488, %v2262, 0.0
    %v2296 = vadd.f32 %v2294, %v2295
    %v2297 = vsel %vm488, %v2265, 0.0
    %v2298 = vadd.f32 %v2296, %v2297
    %v2299 = vsel %vm488, %v2268, 0.0
    %v2300 = vadd.f32 %v2298, %v2299
    %v2301 = vrot.slane %v2300, 4
    %v2302 = vadd.f32 %v2300, %v2301
    %v2303 = vrot.slane %v2302, 2
    %v2304 = vadd.f32 %v2302, %v2303
    %v2305 = vrot.slane %v2304, 1
    %v2306 = vadd.f32 %v2304, %v2305
    %v2307 = vmul.f32 %v2306, 0.0078125
    %v2308 = vsub.f32 %v2223, %v2307
    %v2309 = vsub.f32 %v2226, %v2307
    %v2310 = vsub.f32 %v2229, %v2307
    %v2311 = vsub.f32 %v2232, %v2307
    %v2312 = vsub.f32 %v2235, %v2307
    %v2313 = vsub.f32 %v2238, %v2307
    %v2314 = vsub.f32 %v2241, %v2307
    %v2315 = vsub.f32 %v2244, %v2307
    %v2316 = vsub.f32 %v2247, %v2307
    %v2317 = vsub.f32 %v2250, %v2307
    %v2318 = vsub.f32 %v2253, %v2307
    %v2319 = vsub.f32 %v2256, %v2307
    %v2320 = vsub.f32 %v2259, %v2307
    %v2321 = vsub.f32 %v2262, %v2307
    %v2322 = vsub.f32 %v2265, %v2307
    %v2323 = vsub.f32 %v2268, %v2307
    %v2324 = vmul.f32 %v2308, %v2308
    %v2325 = vmul.f32 %v2309, %v2309
    %v2326 = vmul.f32 %v2310, %v2310
    %v2327 = vmul.f32 %v2311, %v2311
    %v2328 = vmul.f32 %v2312, %v2312
    %v2329 = vmul.f32 %v2313, %v2313
    %v2330 = vmul.f32 %v2314, %v2314
    %v2331 = vmul.f32 %v2315, %v2315
    %v2332 = vmul.f32 %v2316, %v2316
    %v2333 = vmul.f32 %v2317, %v2317
    %v2334 = vmul.f32 %v2318, %v2318
    %v2335 = vmul.f32 %v2319, %v2319
    %v2336 = vmul.f32 %v2320, %v2320
    %v2337 = vmul.f32 %v2321, %v2321
    %v2338 = vmul.f32 %v2322, %v2322
    %v2339 = vmul.f32 %v2323, %v2323
    %v2340 = vsel %vm488, %v2324, 0.0
    %v2341 = vsel %vm488, %v2325, 0.0
    %v2342 = vadd.f32 %v2340, %v2341
    %v2343 = vsel %vm488, %v2326, 0.0
    %v2344 = vadd.f32 %v2342, %v2343
    %v2345 = vsel %vm488, %v2327, 0.0
    %v2346 = vadd.f32 %v2344, %v2345
    %v2347 = vsel %vm488, %v2328, 0.0
    %v2348 = vadd.f32 %v2346, %v2347
    %v2349 = vsel %vm488, %v2329, 0.0
    %v2350 = vadd.f32 %v2348, %v2349
    %v2351 = vsel %vm488, %v2330, 0.0
    %v2352 = vadd.f32 %v2350, %v2351
    %v2353 = vsel %vm488, %v2331, 0.0
    %v2354 = vadd.f32 %v2352, %v2353
    %v2355 = vsel %vm488, %v2332, 0.0
    %v2356 = vadd.f32 %v2354, %v2355
    %v2357 = vsel %vm488, %v2333, 0.0
    %v2358 = vadd.f32 %v2356, %v2357
    %v2359 = vsel %vm488, %v2334, 0.0
    %v2360 = vadd.f32 %v2358, %v2359
    %v2361 = vsel %vm488, %v2335, 0.0
    %v2362 = vadd.f32 %v2360, %v2361
    %v2363 = vsel %vm488, %v2336, 0.0
    %v2364 = vadd.f32 %v2362, %v2363
    %v2365 = vsel %vm488, %v2337, 0.0
    %v2366 = vadd.f32 %v2364, %v2365
    %v2367 = vsel %vm488, %v2338, 0.0
    %v2368 = vadd.f32 %v2366, %v2367
    %v2369 = vsel %vm488, %v2339, 0.0
    %v2370 = vadd.f32 %v2368, %v2369
    %v2371 = vrot.slane %v2370, 4
    %v2372 = vadd.f32 %v2370, %v2371
    %v2373 = vrot.slane %v2372, 2
    %v2374 = vadd.f32 %v2372, %v2373
    %v2375 = vrot.slane %v2374, 1
    %v2376 = vadd.f32 %v2374, %v2375
    %v2377 = vmul.f32 %v2376, 0.0078125
    %v2378 = vadd.f32 %v2377, 1e-05
    %v2379 = vrsqrt.pop %v2378
    %v2380 = vmul.f32 %v2379, %v2378
    %v2381 = vmul.f32 %v2380, %v2379
    %v2382 = vmul.f32 0.5, %v2381
    %v2383 = vsub.f32 1.5, %v2382
    %v2384 = vmul.f32 %v2379, %v2383
    %vm2385 = vweird.f32 %v2378
    %vm2386 = vweird.f32 %v2379
    %vm2387 = vmor %vm2385, %vm2386
    %v2388 = vsel %vm2387, %v2379, %v2384
    %v2389 = vmul.f32 %v15, %v2388
    %v2390 = vmul.f32 %v2307, %v2389
    %v2392 = vrot.slane %v2390, 7
    %v2394 = vsub.f32 %v15, %v2392
    %v2395 = vperm.slane %v2389, 2
    %v2396 = vmul.f32 %v2223, %v2395
    %v2397 = vmul.f32 %v2226, %v2395
    %v2398 = vmul.f32 %v2229, %v2395
    %v2399 = vmul.f32 %v2232, %v2395
    %v2400 = vmul.f32 %v2235, %v2395
    %v2401 = vmul.f32 %v2238, %v2395
    %v2402 = vmul.f32 %v2241, %v2395
    %v2403 = vmul.f32 %v2244, %v2395
    %v2404 = vmul.f32 %v2247, %v2395
    %v2405 = vmul.f32 %v2250, %v2395
    %v2406 = vmul.f32 %v2253, %v2395
    %v2407 = vmul.f32 %v2256, %v2395
    %v2408 = vmul.f32 %v2259, %v2395
    %v2409 = vmul.f32 %v2262, %v2395
    %v2410 = vmul.f32 %v2265, %v2395
    %v2411 = vmul.f32 %v2268, %v2395
    %v2412 = vperm.slane %v2394, 3
    %v2413 = vadd.f32 %v2396, %v2412
    %v2414 = vadd.f32 %v2397, %v2412
    %v2415 = vadd.f32 %v2398, %v2412
    %v2416 = vadd.f32 %v2399, %v2412
    %v2417 = vadd.f32 %v2400, %v2412
    %v2418 = vadd.f32 %v2401, %v2412
    %v2419 = vadd.f32 %v2402, %v2412
    %v2420 = vadd.f32 %v2403, %v2412
    %v2421 = vadd.f32 %v2404, %v2412
    %v2422 = vadd.f32 %v2405, %v2412
    %v2423 = vadd.f32 %v2406, %v2412
    %v2424 = vadd.f32 %v2407, %v2412
    %v2425 = vadd.f32 %v2408, %v2412
    %v2426 = vadd.f32 %v2409, %v2412
    %v2427 = vadd.f32 %v2410, %v2412
    %v2428 = vadd.f32 %v2411, %v2412
    %v2429 = vmax.f32 %v2413, 0.0
    %v2430 = vmax.f32 %v2414, 0.0
    %v2431 = vmax.f32 %v2415, 0.0
    %v2432 = vmax.f32 %v2416, 0.0
    %v2433 = vmax.f32 %v2417, 0.0
    %v2434 = vmax.f32 %v2418, 0.0
    %v2435 = vmax.f32 %v2419, 0.0
    %v2436 = vmax.f32 %v2420, 0.0
    %v2437 = vmax.f32 %v2421, 0.0
    %v2438 = vmax.f32 %v2422, 0.0
    %v2439 = vmax.f32 %v2423, 0.0
    %v2440 = vmax.f32 %v2424, 0.0
    %v2441 = vmax.f32 %v2425, 0.0
    %v2442 = vmax.f32 %v2426, 0.0
    %v2443 = vmax.f32 %v2427, 0.0
    %v2444 = vmax.f32 %v2428, 0.0
    %2445 = vst.msk [vmem:[%s1280 + $0x1] sm:$0xff] %vm488, %v2429
    %2446 = vst.msk [vmem:[%s1280 + $0x11] sm:$0xff] %vm488, %v2430
    %2447 = vst.msk [vmem:[%s1280 + $0x21] sm:$0xff] %vm488, %v2431
    %2448 = vst.msk [vmem:[%s1280 + $0x31] sm:$0xff] %vm488, %v2432
    %2449 = vst.msk [vmem:[%s1280 + $0x41] sm:$0xff] %vm488, %v2433
    %2450 = vst.msk [vmem:[%s1280 + $0x51] sm:$0xff] %vm488, %v2434
    %2451 = vst.msk [vmem:[%s1280 + $0x61] sm:$0xff] %vm488, %v2435
    %2452 = vst.msk [vmem:[%s1280 + $0x71] sm:$0xff] %vm488, %v2436
    %2453 = vst.msk [vmem:[%s1280 + $0xa1] sm:$0xff] %vm488, %v2437
    %2454 = vst.msk [vmem:[%s1280 + $0xb1] sm:$0xff] %vm488, %v2438
    %2455 = vst.msk [vmem:[%s1280 + $0xc1] sm:$0xff] %vm488, %v2439
    %2456 = vst.msk [vmem:[%s1280 + $0xd1] sm:$0xff] %vm488, %v2440
    %2457 = vst.msk [vmem:[%s1280 + $0xe1] sm:$0xff] %vm488, %v2441
    %2458 = vst.msk [vmem:[%s1280 + $0xf1] sm:$0xff] %vm488, %v2442
    %2459 = vst.msk [vmem:[%s1280 + $0x101] sm:$0xff] %vm488, %v2443
    %2460 = vst.msk [vmem:[%s1280 + $0x111] sm:$0xff] %vm488, %v2444
    %v2461 = vld [vmem:[#allocation3] sm:$0xff]
    %v2462 = vld [vmem:[#allocation3 + $0x8] sm:$0x3]
    %v2463 = vld [vmem:[#allocation3 + $0x10] sm:$0xff]
    %v2464 = vld [vmem:[#allocation3 + $0x18] sm:$0x3]
    %v2465 = vld [vmem:[#allocation3 + $0x20] sm:$0xff]
    %v2466 = vld [vmem:[#allocation3 + $0x28] sm:$0x3]
    %v2467 = vld [vmem:[#allocation3 + $0x30] sm:$0xff]
    %v2468 = vld [vmem:[#allocation3 + $0x38] sm:$0x3]
    %v2469 = vld [vmem:[#allocation3 + $0x40] sm:$0xff]
    %v2470 = vld [vmem:[#allocation3 + $0x48] sm:$0x3]
    %v2471 = vld [vmem:[#allocation3 + $0x50] sm:$0xff]
    %v2472 = vld [vmem:[#allocation3 + $0x58] sm:$0x3]
    %v2473 = vld [vmem:[#allocation3 + $0x60] sm:$0xff]
    %v2474 = vld [vmem:[#allocation3 + $0x68] sm:$0x3]
    %v2475 = vld [vmem:[#allocation3 + $0x70] sm:$0xff]
    %v2476 = vld [vmem:[#allocation3 + $0x78] sm:$0x3]
    %v2477 = vld [vmem:[#allocation3 + $0x80] sm:$0xff]
    %v2478 = vld [vmem:[#allocation3 + $0x88] sm:$0x3]
    %v2479 = vld [vmem:[#allocation3 + $0x90] sm:$0xff]
    %v2480 = vld [vmem:[#allocation3 + $0x98] sm:$0x3]
    %v2481 = vld [vmem:[#allocation3 + $0xa0] sm:$0xff]
    %v2482 = vld [vmem:[#allocation3 + $0xa8] sm:$0x3]
    %v2483 = vld [vmem:[#allocation3 + $0xb0] sm:$0xff]
    %v2484 = vld [vmem:[#allocation3 + $0xb8] sm:$0x3]
    %v2485 = vld [vmem:[#allocation3 + $0xc0] sm:$0xff]
    %v2486 = vld [vmem:[#allocation3 + $0xc8] sm:$0x3]
    %v2487 = vld [vmem:[#allocation3 + $0xd0] sm:$0xff]
    %v2488 = vld [vmem:[#allocation3 + $0xd8] sm:$0x3]
    %v2489 = vld [vmem:[#allocation3 + $0xe0] sm:$0xff]
    %v2490 = vld [vmem:[#allocation3 + $0xe8] sm:$0x3]
    %v2491 = vld [vmem:[#allocation3 + $0xf0] sm:$0xff]
    %v2492 = vld [vmem:[#allocation3 + $0xf8] sm:$0x3]
    %v2493 = vld [vmem:[#allocation3 + $0x100] sm:$0xff]
    %v2494 = vld [vmem:[#allocation3 + $0x108] sm:$0x3]
    %v2495 = vld [vmem:[#allocation3 + $0x110] sm:$0xff]
    %v2496 = vld [vmem:[#allocation3 + $0x118] sm:$0x3]
    %v2497 = vld [vmem:[#allocation3 + $0x120] sm:$0xff]
    %v2498 = vld [vmem:[#allocation3 + $0x128] sm:$0x3]
    %v2499 = vld [vmem:[#allocation3 + $0x130] sm:$0xff]
    %v2500 = vld [vmem:[#allocation3 + $0x138] sm:$0x3]
    %v2501 = vmax.f32 %v2461, %v2463
    %v2502 = vmax.f32 %v2462, %v2464
    %v2503 = vmax.f32 %v2465, %v2467
    %v2504 = vmax.f32 %v2466, %v2468
    %v2505 = vmax.f32 %v2469, %v2471
    %v2506 = vmax.f32 %v2470, %v2472
    %v2507 = vmax.f32 %v2473, %v2475
    %v2508 = vmax.f32 %v2474, %v2476
    %v2509 = vmax.f32 %v2477, %v2479
    %v2510 = vmax.f32 %v2478, %v2480
    %v2511 = vmax.f32 %v2481, %v2483
    %v2512 = vmax.f32 %v2482, %v2484
    %v2513 = vmax.f32 %v2485, %v2487
    %v2514 = vmax.f32 %v2486, %v2488
    %v2515 = vmax.f32 %v2489, %v2491
    %v2516 = vmax.f32 %v2490, %v2492
    %v2517 = vmax.f32 %v2493, %v2495
    %v2518 = vmax.f32 %v2494, %v2496
    %v2519 = vmax.f32 %v2497, %v2499
    %v2520 = vmax.f32 %v2498, %v2500
    %2521 = vst.msk [vmem:[#allocation5] sm:$0xff] %vm488, %v2501
    %2522 = vst.msk [vmem:[#allocation5 + $0x8] sm:$0x3] %vm1240, %v2502
    %2523 = vst.msk [vmem:[#allocation5 + $0x10] sm:$0xff] %vm488, %v2503
    %2524 = vst.msk [vmem:[#allocation5 + $0x18] sm:$0x3] %vm1240, %v2504
    %2525 = vst.msk [vmem:[#allocation5 + $0x20] sm:$0xff] %vm488, %v2505
    %2526 = vst.msk [vmem:[#allocation5 + $0x28] sm:$0x3] %vm1240, %v2506
    %2527 = vst.msk [vmem:[#allocation5 + $0x30] sm:$0xff] %vm488, %v2507
    %2528 = vst.msk [vmem:[#allocation5 + $0x38] sm:$0x3] %vm1240, %v2508
    %2529 = vst.msk [vmem:[#allocation5 + $0x40] sm:$0xff] %vm488, %v2509
    %2530 = vst.msk [vmem:[#allocation5 + $0x48] sm:$0x3] %vm1240, %v2510
    %2531 = vst.msk [vmem:[#allocation5 + $0x50] sm:$0xff] %vm488, %v2511
    %2532 = vst.msk [vmem:[#allocation5 + $0x58] sm:$0x3] %vm1240, %v2512
    %2533 = vst.msk [vmem:[#allocation5 + $0x60] sm:$0xff] %vm488, %v2513
    %2534 = vst.msk [vmem:[#allocation5 + $0x68] sm:$0x3] %vm1240, %v2514
    %2535 = vst.msk [vmem:[#allocation5 + $0x70] sm:$0xff] %vm488, %v2515
    %2536 = vst.msk [vmem:[#allocation5 + $0x78] sm:$0x3] %vm1240, %v2516
    %2537 = vst.msk [vmem:[#allocation5 + $0x80] sm:$0xff] %vm488, %v2517
    %2538 = vst.msk [vmem:[#allocation5 + $0x88] sm:$0x3] %vm1240, %v2518
    %2539 = vst.msk [vmem:[#allocation5 + $0x90] sm:$0xff] %vm488, %v2519
    %2540 = vst.msk [vmem:[#allocation5 + $0x98] sm:$0x3] %vm1240, %v2520
    %v2541 = vld [vmem:[#allocation5] ss:$2 sm:$0x1f]
    %s2542 = scalar_lea.vmem [#allocation5], 16
    %v2543 = vld [vmem:[%s2542] ss:$2 sm:$0x1f]
    %s2544 = scalar_lea.vmem [#allocation5], 32
    %v2545 = vld [vmem:[%s2544] ss:$2 sm:$0x1f]
    %s2546 = scalar_lea.vmem [#allocation5], 48
    %v2547 = vld [vmem:[%s2546] ss:$2 sm:$0x1f]
    %s2548 = scalar_lea.vmem [#allocation5], 64
    %v2549 = vld [vmem:[%s2548] ss:$2 sm:$0x1f]
    %s2550 = scalar_lea.vmem [#allocation5], 80
    %v2551 = vld [vmem:[%s2550] ss:$2 sm:$0x1f]
    %s2552 = scalar_lea.vmem [#allocation5], 96
    %v2553 = vld [vmem:[%s2552] ss:$2 sm:$0x1f]
    %s2554 = scalar_lea.vmem [#allocation5], 112
    %v2555 = vld [vmem:[%s2554] ss:$2 sm:$0x1f]
    %s2556 = scalar_lea.vmem [#allocation5], 128
    %v2557 = vld [vmem:[%s2556] ss:$2 sm:$0x1f]
    %s2558 = scalar_lea.vmem [#allocation5], 144
    %v2559 = vld [vmem:[%s2558] ss:$2 sm:$0x1f]
    %s2560 = scalar_lea.vmem [#allocation5], 1
    %v2561 = vld [vmem:[%s2560] ss:$2 sm:$0x1f]
    %s2562 = scalar_lea.vmem [#allocation5], 17
    %v2563 = vld [vmem:[%s2562] ss:$2 sm:$0x1f]
    %s2564 = scalar_lea.vmem [#allocation5], 33
    %v2565 = vld [vmem:[%s2564] ss:$2 sm:$0x1f]
    %s2566 = scalar_lea.vmem [#allocation5], 49
    %v2567 = vld [vmem:[%s2566] ss:$2 sm:$0x1f]
    %s2568 = scalar_lea.vmem [#allocation5], 65
    %v2569 = vld [vmem:[%s2568] ss:$2 sm:$0x1f]
    %s2570 = scalar_lea.vmem [#allocation5], 81
    %v2571 = vld [vmem:[%s2570] ss:$2 sm:$0x1f]
    %s2572 = scalar_lea.vmem [#allocation5], 97
    %v2573 = vld [vmem:[%s2572] ss:$2 sm:$0x1f]
    %s2574 = scalar_lea.vmem [#allocation5], 113
    %v2575 = vld [vmem:[%s2574] ss:$2 sm:$0x1f]
    %s2576 = scalar_lea.vmem [#allocation5], 129
    %v2577 = vld [vmem:[%s2576] ss:$2 sm:$0x1f]
    %s2578 = scalar_lea.vmem [#allocation5], 145
    %v2579 = vld [vmem:[%s2578] ss:$2 sm:$0x1f]
    %v2580 = vmax.f32 %v2541, %v2561
    %v2581 = vmax.f32 %v2543, %v2563
    %v2582 = vmax.f32 %v2545, %v2565
    %v2583 = vmax.f32 %v2547, %v2567
    %v2584 = vmax.f32 %v2549, %v2569
    %v2585 = vmax.f32 %v2551, %v2571
    %v2586 = vmax.f32 %v2553, %v2573
    %v2587 = vmax.f32 %v2555, %v2575
    %v2588 = vmax.f32 %v2557, %v2577
    %v2589 = vmax.f32 %v2559, %v2579
    %2590 = vst.msk [vmem:[#allocation6] sm:$0xff] %vm488, 0.0
    %2591 = vst.msk [vmem:[#allocation6 + $0x8] sm:$0x3] %vm1240, 0.0
    %2592 = vst.msk [vmem:[#allocation6 + $0x10] sm:$0xff] %vm488, 0.0
    %2593 = vst.msk [vmem:[#allocation6 + $0x18] sm:$0x3] %vm1240, 0.0
    %2594 = vst.msk [vmem:[#allocation6 + $0x20] sm:$0xff] %vm488, 0.0
    %2595 = vst.msk [vmem:[#allocation6 + $0x28] sm:$0x3] %vm1240, 0.0
    %2596 = vst.msk [vmem:[#allocation6 + $0x30] sm:$0xff] %vm488, 0.0
    %2597 = vst.msk [vmem:[#allocation6 + $0x38] sm:$0x3] %vm1240, 0.0
    %2598 = vst.msk [vmem:[#allocation6 + $0x40] sm:$0xff] %vm488, 0.0
    %2599 = vst.msk [vmem:[#allocation6 + $0x48] sm:$0x3] %vm1240, 0.0
    %2600 = vst.msk [vmem:[#allocation6 + $0x50] sm:$0xff] %vm488, 0.0
    %2601 = vst.msk [vmem:[#allocation6 + $0x58] sm:$0x3] %vm1240, 0.0
    %2602 = vst.msk [vmem:[#allocation6 + $0x60] sm:$0xff] %vm488, 0.0
    %2603 = vst.msk [vmem:[#allocation6 + $0x68] sm:$0x3] %vm1240, 0.0
    %2604 = vst.msk [vmem:[#allocation6 + $0x70] sm:$0xff] %vm488, 0.0
    %2605 = vst.msk [vmem:[#allocation6 + $0x78] sm:$0x3] %vm1240, 0.0
    %2606 = vst.msk [vmem:[#allocation6 + $0x80] sm:$0xff] %vm488, 0.0
    %2607 = vst.msk [vmem:[#allocation6 + $0x88] sm:$0x3] %vm1240, 0.0
    %2608 = vst.msk [vmem:[#allocation6 + $0x90] sm:$0xff] %vm488, 0.0
    %2609 = vst.msk [vmem:[#allocation6 + $0x98] sm:$0x3] %vm1240, 0.0
    %2610 = vst.msk [vmem:[#allocation6 + $0xa0] sm:$0xff] %vm488, 0.0
    %2611 = vst.msk [vmem:[#allocation6 + $0xa8] sm:$0x3] %vm1240, 0.0
    %2612 = vst.msk [vmem:[#allocation6 + $0xb0] sm:$0xff] %vm488, 0.0
    %2613 = vst.msk [vmem:[#allocation6 + $0xb8] sm:$0x3] %vm1240, 0.0
    %2614 = vst.msk [vmem:[#allocation6 + $0xc0] sm:$0xff] %vm488, 0.0
    %2615 = vst.msk [vmem:[#allocation6 + $0xc8] sm:$0x3] %vm1240, 0.0
    %2616 = vst.msk [vmem:[#allocation6 + $0xd0] sm:$0xff] %vm488, 0.0
    %2617 = vst.msk [vmem:[#allocation6 + $0xd8] sm:$0x3] %vm1240, 0.0
    %s2618 = scalar_lea.vmem [#allocation6], 16
    %vm2619 = vcmask 126976
    %2620 = vst.msk [vmem:[%s2618 + $0x1] sm:$0x1f] %vm2619, %v2580
    %2621 = vst.msk [vmem:[%s2618 + $0x11] sm:$0x1f] %vm2619, %v2581
    %2622 = vst.msk [vmem:[%s2618 + $0x21] sm:$0x1f] %vm2619, %v2582
    %2623 = vst.msk [vmem:[%s2618 + $0x31] sm:$0x1f] %vm2619, %v2583
    %2624 = vst.msk [vmem:[%s2618 + $0x41] sm:$0x1f] %vm2619, %v2584
    %2625 = vst.msk [vmem:[%s2618 + $0x71] sm:$0x1f] %vm2619, %v2585
    %2626 = vst.msk [vmem:[%s2618 + $0x81] sm:$0x1f] %vm2619, %v2586
    %2627 = vst.msk [vmem:[%s2618 + $0x91] sm:$0x1f] %vm2619, %v2587
    %2628 = vst.msk [vmem:[%s2618 + $0xa1] sm:$0x1f] %vm2619, %v2588
    %2629 = vst.msk [vmem:[%s2618 + $0xb1] sm:$0x1f] %vm2619, %v2589
    %v2630 = vld [vmem:[#allocation6] sm:$0xff]
    %v2631 = vld [vmem:[#allocation6 + $0x10] sm:$0xff]
    %v2632 = vld [vmem:[#allocation6 + $0x20] sm:$0xff]
    %v2633 = vld [vmem:[#allocation6 + $0x30] sm:$0xff]
    %v2634 = vld [vmem:[#allocation6 + $0x40] sm:$0xff]
    %v2635 = vld [vmem:[#allocation6 + $0x70] sm:$0xff]
    %v2636 = vld [vmem:[#allocation6 + $0x80] sm:$0xff]
    %v2637 = vld [vmem:[#allocation6 + $0x90] sm:$0xff]
    %v2638 = vld [vmem:[#allocation6 + $0xa0] sm:$0xff]
    %v2639 = vld [vmem:[#allocation6 + $0xb0] sm:$0xff]
    %2640 = vst.msk [vmem:[#allocation7] sm:$0xff] %vm488, %v2630
    %2641 = vst.msk [vmem:[#allocation7 + $0x10] sm:$0xff] %vm488, %v2631
    %2642 = vst.msk [vmem:[#allocation7 + $0x20] sm:$0xff] %vm488, %v2632
    %2643 = vst.msk [vmem:[#allocation7 + $0x30] sm:$0xff] %vm488, %v2633
    %2644 = vst.msk [vmem:[#allocation7 + $0x40] sm:$0xff] %vm488, %v2634
    %2645 = vst.msk [vmem:[#allocation7 + $0x50] sm:$0xff] %vm488, %v2635
    %2646 = vst.msk [vmem:[#allocation7 + $0x60] sm:$0xff] %vm488, %v2636
    %2647 = vst.msk [vmem:[#allocation7 + $0x70] sm:$0xff] %vm488, %v2637
    %2648 = vst.msk [vmem:[#allocation7 + $0x80] sm:$0xff] %vm488, %v2638
    %2649 = vst.msk [vmem:[#allocation7 + $0x90] sm:$0xff] %vm488, %v2639
    %v2650 = vld [vmem:[#allocation6 + $0x1] sm:$0xff]
    %v2651 = vld [vmem:[#allocation6 + $0x11] sm:$0xff]
    %v2652 = vld [vmem:[#allocation6 + $0x21] sm:$0xff]
    %v2653 = vld [vmem:[#allocation6 + $0x31] sm:$0xff]
    %v2654 = vld [vmem:[#allocation6 + $0x41] sm:$0xff]
    %v2655 = vld [vmem:[#allocation6 + $0x71] sm:$0xff]
    %v2656 = vld [vmem:[#allocation6 + $0x81] sm:$0xff]
    %v2657 = vld [vmem:[#allocation6 + $0x91] sm:$0xff]
    %v2658 = vld [vmem:[#allocation6 + $0xa1] sm:$0xff]
    %v2659 = vld [vmem:[#allocation6 + $0xb1] sm:$0xff]
    %2670 = vrot.lane.b32.xlu0 %v2650, 16
    %v2671 = vpop.permute.xlu0 %2670
    %2672 = vrot.lane.b32.xlu0 %v2651, 16
    %v2673 = vpop.permute.xlu0 %2672
    %2674 = vrot.lane.b32.xlu0 %v2652, 16
    %v2675 = vpop.permute.xlu0 %2674
    %2676 = vrot.lane.b32.xlu0 %v2653, 16
    %v2677 = vpop.permute.xlu0 %2676
    %2678 = vrot.lane.b32.xlu0 %v2654, 16
    %v2679 = vpop.permute.xlu0 %2678
    %2680 = vrot.lane.b32.xlu0 %v2655, 16
    %v2681 = vpop.permute.xlu0 %2680
    %2682 = vrot.lane.b32.xlu0 %v2656, 16
    %v2683 = vpop.permute.xlu0 %2682
    %2684 = vrot.lane.b32.xlu0 %v2657, 16
    %v2685 = vpop.permute.xlu0 %2684
    %2686 = vrot.lane.b32.xlu0 %v2658, 16
    %v2687 = vpop.permute.xlu0 %2686
    %2688 = vrot.lane.b32.xlu0 %v2659, 16
    %v2689 = vpop.permute.xlu0 %2688
    %2700 = vst.msk [vmem:[#allocation7] sm:$0xff] %vm1409, %v2671
    %2701 = vst.msk [vmem:[#allocation7 + $0x10] sm:$0xff] %vm1409, %v2673
    %2702 = vst.msk [vmem:[#allocation7 + $0x20] sm:$0xff] %vm1409, %v2675
    %2703 = vst.msk [vmem:[#allocation7 + $0x30] sm:$0xff] %vm1409, %v2677
    %2704 = vst.msk [vmem:[#allocation7 + $0x40] sm:$0xff] %vm1409, %v2679
    %2705 = vst.msk [vmem:[#allocation7 + $0x50] sm:$0xff] %vm1409, %v2681
    %2706 = vst.msk [vmem:[#allocation7 + $0x60] sm:$0xff] %vm1409, %v2683
    %2707 = vst.msk [vmem:[#allocation7 + $0x70] sm:$0xff] %vm1409, %v2685
    %2708 = vst.msk [vmem:[#allocation7 + $0x80] sm:$0xff] %vm1409, %v2687
    %2709 = vst.msk [vmem:[#allocation7 + $0x90] sm:$0xff] %vm1409, %v2689
    %v2710 = vld [vmem:[#allocation6 + $0x2] sm:$0xff]
    %v2711 = vld [vmem:[#allocation6 + $0x12] sm:$0xff]
    %v2712 = vld [vmem:[#allocation6 + $0x22] sm:$0xff]
    %v2713 = vld [vmem:[#allocation6 + $0x32] sm:$0xff]
    %v2714 = vld [vmem:[#allocation6 + $0x42] sm:$0xff]
    %v2715 = vld [vmem:[#allocation6 + $0x72] sm:$0xff]
    %v2716 = vld [vmem:[#allocation6 + $0x82] sm:$0xff]
    %v2717 = vld [vmem:[#allocation6 + $0x92] sm:$0xff]
    %v2718 = vld [vmem:[#allocation6 + $0xa2] sm:$0xff]
    %v2719 = vld [vmem:[#allocation6 + $0xb2] sm:$0xff]
    %2730 = vrot.lane.b32.xlu0 %v2710, 32
    %v2731 = vpop.permute.xlu0 %2730
    %2732 = vrot.lane.b32.xlu0 %v2711, 32
    %v2733 = vpop.permute.xlu0 %2732
    %2734 = vrot.lane.b32.xlu0 %v2712, 32
    %v2735 = vpop.permute.xlu0 %2734
    %2736 = vrot.lane.b32.xlu0 %v2713, 32
    %v2737 = vpop.permute.xlu0 %2736
    %2738 = vrot.lane.b32.xlu0 %v2714, 32
    %v2739 = vpop.permute.xlu0 %2738
    %2740 = vrot.lane.b32.xlu0 %v2715, 32
    %v2741 = vpop.permute.xlu0 %2740
    %2742 = vrot.lane.b32.xlu0 %v2716, 32
    %v2743 = vpop.permute.xlu0 %2742
    %2744 = vrot.lane.b32.xlu0 %v2717, 32
    %v2745 = vpop.permute.xlu0 %2744
    %2746 = vrot.lane.b32.xlu0 %v2718, 32
    %v2747 = vpop.permute.xlu0 %2746
    %2748 = vrot.lane.b32.xlu0 %v2719, 32
    %v2749 = vpop.permute.xlu0 %2748
    %2760 = vst.msk [vmem:[#allocation7] sm:$0xff] %vm1506, %v2731
    %2761 = vst.msk [vmem:[#allocation7 + $0x10] sm:$0xff] %vm1506, %v2733
    %2762 = vst.msk [vmem:[#allocation7 + $0x20] sm:$0xff] %vm1506, %v2735
    %2763 = vst.msk [vmem:[#allocation7 + $0x30] sm:$0xff] %vm1506, %v2737
    %2764 = vst.msk [vmem:[#allocation7 + $0x40] sm:$0xff] %vm1506, %v2739
    %2765 = vst.msk [vmem:[#allocation7 + $0x50] sm:$0xff] %vm1506, %v2741
    %2766 = vst.msk [vmem:[#allocation7 + $0x60] sm:$0xff] %vm1506, %v2743
    %2767 = vst.msk [vmem:[#allocation7 + $0x70] sm:$0xff] %vm1506, %v2745
    %2768 = vst.msk [vmem:[#allocation7 + $0x80] sm:$0xff] %vm1506, %v2747
    %2769 = vst.msk [vmem:[#allocation7 + $0x90] sm:$0xff] %vm1506, %v2749
    %v2770 = vld [vmem:[%s2618] sm:$0xff]
    %v2771 = vld [vmem:[%s2618 + $0x10] sm:$0xff]
    %v2772 = vld [vmem:[%s2618 + $0x20] sm:$0xff]
    %v2773 = vld [vmem:[%s2618 + $0x30] sm:$0xff]
    %v2774 = vld [vmem:[%s2618 + $0x40] sm:$0xff]
    %v2775 = vld [vmem:[%s2618 + $0x70] sm:$0xff]
    %v2776 = vld [vmem:[%s2618 + $0x80] sm:$0xff]
    %v2777 = vld [vmem:[%s2618 + $0x90] sm:$0xff]
    %v2778 = vld [vmem:[%s2618 + $0xa0] sm:$0xff]
    %v2779 = vld [vmem:[%s2618 + $0xb0] sm:$0xff]
    %2790 = vrot.lane.b32.xlu0 %v2770, 48
    %v2791 = vpop.permute.xlu0 %2790
    %2792 = vrot.lane.b32.xlu0 %v2771, 48
    %v2793 = vpop.permute.xlu0 %2792
    %2794 = vrot.lane.b32.xlu0 %v2772, 48
    %v2795 = vpop.permute.xlu0 %2794
    %2796 = vrot.lane.b32.xlu0 %v2773, 48
    %v2797 = vpop.permute.xlu0 %2796
    %2798 = vrot.lane.b32.xlu0 %v2774, 48
    %v2799 = vpop.permute.xlu0 %2798
    %2800 = vrot.lane.b32.xlu0 %v2775, 48
    %v2801 = vpop.permute.xlu0 %2800
    %2802 = vrot.lane.b32.xlu0 %v2776, 48
    %v2803 = vpop.permute.xlu0 %2802
    %2804 = vrot.lane.b32.xlu0 %v2777, 48
    %v2805 = vpop.permute.xlu0 %2804
    %2806 = vrot.lane.b32.xlu0 %v2778, 48
    %v2807 = vpop.permute.xlu0 %2806
    %2808 = vrot.lane.b32.xlu0 %v2779, 48
    %v2809 = vpop.permute.xlu0 %2808
    %2820 = vst.msk [vmem:[#allocation7] sm:$0xff] %vm1603, %v2791
    %2821 = vst.msk [vmem:[#allocation7 + $0x10] sm:$0xff] %vm1603, %v2793
    %2822 = vst.msk [vmem:[#allocation7 + $0x20] sm:$0xff] %vm1603, %v2795
    %2823 = vst.msk [vmem:[#allocation7 + $0x30] sm:$0xff] %vm1603, %v2797
    %2824 = vst.msk [vmem:[#allocation7 + $0x40] sm:$0xff] %vm1603, %v2799
    %2825 = vst.msk [vmem:[#allocation7 + $0x50] sm:$0xff] %vm1603, %v2801
    %2826 = vst.msk [vmem:[#allocation7 + $0x60] sm:$0xff] %vm1603, %v2803
    %2827 = vst.msk [vmem:[#allocation7 + $0x70] sm:$0xff] %vm1603, %v2805
    %2828 = vst.msk [vmem:[#allocation7 + $0x80] sm:$0xff] %vm1603, %v2807
    %2829 = vst.msk [vmem:[#allocation7 + $0x90] sm:$0xff] %vm1603, %v2809
    %v2830 = vld [vmem:[%s2618 + $0x1] sm:$0xff]
    %v2831 = vld [vmem:[%s2618 + $0x11] sm:$0xff]
    %v2832 = vld [vmem:[%s2618 + $0x21] sm:$0xff]
    %v2833 = vld [vmem:[%s2618 + $0x31] sm:$0xff]
    %v2834 = vld [vmem:[%s2618 + $0x41] sm:$0xff]
    %v2835 = vld [vmem:[%s2618 + $0x71] sm:$0xff]
    %v2836 = vld [vmem:[%s2618 + $0x81] sm:$0xff]
    %v2837 = vld [vmem:[%s2618 + $0x91] sm:$0xff]
    %v2838 = vld [vmem:[%s2618 + $0xa1] sm:$0xff]
    %v2839 = vld [vmem:[%s2618 + $0xb1] sm:$0xff]
    %2850 = vrot.lane.b32.xlu0 %v2830, 64
    %v2851 = vpop.permute.xlu0 %2850
    %2852 = vrot.lane.b32.xlu0 %v2831, 64
    %v2853 = vpop.permute.xlu0 %2852
    %2854 = vrot.lane.b32.xlu0 %v2832, 64
    %v2855 = vpop.permute.xlu0 %2854
    %2856 = vrot.lane.b32.xlu0 %v2833, 64
    %v2857 = vpop.permute.xlu0 %2856
    %2858 = vrot.lane.b32.xlu0 %v2834, 64
    %v2859 = vpop.permute.xlu0 %2858
    %2860 = vrot.lane.b32.xlu0 %v2835, 64
    %v2861 = vpop.permute.xlu0 %2860
    %2862 = vrot.lane.b32.xlu0 %v2836, 64
    %v2863 = vpop.permute.xlu0 %2862
    %2864 = vrot.lane.b32.xlu0 %v2837, 64
    %v2865 = vpop.permute.xlu0 %2864
    %2866 = vrot.lane.b32.xlu0 %v2838, 64
    %v2867 = vpop.permute.xlu0 %2866
    %2868 = vrot.lane.b32.xlu0 %v2839, 64
    %v2869 = vpop.permute.xlu0 %2868
    %2880 = vst.msk [vmem:[#allocation7] sm:$0xff] %vm1700, %v2851
    %2881 = vst.msk [vmem:[#allocation7 + $0x10] sm:$0xff] %vm1700, %v2853
    %2882 = vst.msk [vmem:[#allocation7 + $0x20] sm:$0xff] %vm1700, %v2855
    %2883 = vst.msk [vmem:[#allocation7 + $0x30] sm:$0xff] %vm1700, %v2857
    %2884 = vst.msk [vmem:[#allocation7 + $0x40] sm:$0xff] %vm1700, %v2859
    %2885 = vst.msk [vmem:[#allocation7 + $0x50] sm:$0xff] %vm1700, %v2861
    %2886 = vst.msk [vmem:[#allocation7 + $0x60] sm:$0xff] %vm1700, %v2863
    %2887 = vst.msk [vmem:[#allocation7 + $0x70] sm:$0xff] %vm1700, %v2865
    %2888 = vst.msk [vmem:[#allocation7 + $0x80] sm:$0xff] %vm1700, %v2867
    %2889 = vst.msk [vmem:[#allocation7 + $0x90] sm:$0xff] %vm1700, %v2869
    %v2890 = vld [vmem:[%s2618 + $0x2] sm:$0xff]
    %v2891 = vld [vmem:[%s2618 + $0x12] sm:$0xff]
    %v2892 = vld [vmem:[%s2618 + $0x22] sm:$0xff]
    %v2893 = vld [vmem:[%s2618 + $0x32] sm:$0xff]
    %v2894 = vld [vmem:[%s2618 + $0x42] sm:$0xff]
    %v2895 = vld [vmem:[%s2618 + $0x72] sm:$0xff]
    %v2896 = vld [vmem:[%s2618 + $0x82] sm:$0xff]
    %v2897 = vld [vmem:[%s2618 + $0x92] sm:$0xff]
    %v2898 = vld [vmem:[%s2618 + $0xa2] sm:$0xff]
    %v2899 = vld [vmem:[%s2618 + $0xb2] sm:$0xff]
    %2910 = vrot.lane.b32.xlu0 %v2890, 80
    %v2911 = vpop.permute.xlu0 %2910
    %2912 = vrot.lane.b32.xlu0 %v2891, 80
    %v2913 = vpop.permute.xlu0 %2912
    %2914 = vrot.lane.b32.xlu0 %v2892, 80
    %v2915 = vpop.permute.xlu0 %2914
    %2916 = vrot.lane.b32.xlu0 %v2893, 80
    %v2917 = vpop.permute.xlu0 %2916
    %2918 = vrot.lane.b32.xlu0 %v2894, 80
    %v2919 = vpop.permute.xlu0 %2918
    %2920 = vrot.lane.b32.xlu0 %v2895, 80
    %v2921 = vpop.permute.xlu0 %2920
    %2922 = vrot.lane.b32.xlu0 %v2896, 80
    %v2923 = vpop.permute.xlu0 %2922
    %2924 = vrot.lane.b32.xlu0 %v2897, 80
    %v2925 = vpop.permute.xlu0 %2924
    %2926 = vrot.lane.b32.xlu0 %v2898, 80
    %v2927 = vpop.permute.xlu0 %2926
    %2928 = vrot.lane.b32.xlu0 %v2899, 80
    %v2929 = vpop.permute.xlu0 %2928
    %2940 = vst.msk [vmem:[#allocation7] sm:$0xff] %vm1797, %v2911
    %2941 = vst.msk [vmem:[#allocation7 + $0x10] sm:$0xff] %vm1797, %v2913
    %2942 = vst.msk [vmem:[#allocation7 + $0x20] sm:$0xff] %vm1797, %v2915
    %2943 = vst.msk [vmem:[#allocation7 + $0x30] sm:$0xff] %vm1797, %v2917
    %2944 = vst.msk [vmem:[#allocation7 + $0x40] sm:$0xff] %vm1797, %v2919
    %2945 = vst.msk [vmem:[#allocation7 + $0x50] sm:$0xff] %vm1797, %v2921
    %2946 = vst.msk [vmem:[#allocation7 + $0x60] sm:$0xff] %vm1797, %v2923
    %2947 = vst.msk [vmem:[#allocation7 + $0x70] sm:$0xff] %vm1797, %v2925
    %2948 = vst.msk [vmem:[#allocation7 + $0x80] sm:$0xff] %vm1797, %v2927
    %2949 = vst.msk [vmem:[#allocation7 + $0x90] sm:$0xff] %vm1797, %v2929
    %s2950 = scalar_lea.vmem [#allocation6], 32
    %v2951 = vld [vmem:[%s2950] sm:$0xff]
    %v2952 = vld [vmem:[%s2950 + $0x10] sm:$0xff]
    %v2953 = vld [vmem:[%s2950 + $0x20] sm:$0xff]
    %v2954 = vld [vmem:[%s2950 + $0x30] sm:$0xff]
    %v2955 = vld [vmem:[%s2950 + $0x40] sm:$0xff]
    %v2956 = vld [vmem:[%s2950 + $0x70] sm:$0xff]
    %v2957 = vld [vmem:[%s2950 + $0x80] sm:$0xff]
    %v2958 = vld [vmem:[%s2950 + $0x90] sm:$0xff]
    %v2959 = vld [vmem:[%s2950 + $0xa0] sm:$0xff]
    %v2960 = vld [vmem:[%s2950 + $0xb0] sm:$0xff]
    %2971 = vrot.lane.b32.xlu0 %v2951, 96
    %v2972 = vpop.permute.xlu0 %2971
    %2973 = vrot.lane.b32.xlu0 %v2952, 96
    %v2974 = vpop.permute.xlu0 %2973
    %2975 = vrot.lane.b32.xlu0 %v2953, 96
    %v2976 = vpop.permute.xlu0 %2975
    %2977 = vrot.lane.b32.xlu0 %v2954, 96
    %v2978 = vpop.permute.xlu0 %2977
    %2979 = vrot.lane.b32.xlu0 %v2955, 96
    %v2980 = vpop.permute.xlu0 %2979
    %2981 = vrot.lane.b32.xlu0 %v2956, 96
    %v2982 = vpop.permute.xlu0 %2981
    %2983 = vrot.lane.b32.xlu0 %v2957, 96
    %v2984 = vpop.permute.xlu0 %2983
    %2985 = vrot.lane.b32.xlu0 %v2958, 96
    %v2986 = vpop.permute.xlu0 %2985
    %2987 = vrot.lane.b32.xlu0 %v2959, 96
    %v2988 = vpop.permute.xlu0 %2987
    %2989 = vrot.lane.b32.xlu0 %v2960, 96
    %v2990 = vpop.permute.xlu0 %2989
    %3001 = vst.msk [vmem:[#allocation7] sm:$0xff] %vm1895, %v2972
    %3002 = vst.msk [vmem:[#allocation7 + $0x10] sm:$0xff] %vm1895, %v2974
    %3003 = vst.msk [vmem:[#allocation7 + $0x20] sm:$0xff] %vm1895, %v2976
    %3004 = vst.msk [vmem:[#allocation7 + $0x30] sm:$0xff] %vm1895, %v2978
    %3005 = vst.msk [vmem:[#allocation7 + $0x40] sm:$0xff] %vm1895, %v2980
    %3006 = vst.msk [vmem:[#allocation7 + $0x50] sm:$0xff] %vm1895, %v2982
    %3007 = vst.msk [vmem:[#allocation7 + $0x60] sm:$0xff] %vm1895, %v2984
    %3008 = vst.msk [vmem:[#allocation7 + $0x70] sm:$0xff] %vm1895, %v2986
    %3009 = vst.msk [vmem:[#allocation7 + $0x80] sm:$0xff] %vm1895, %v2988
    %3010 = vst.msk [vmem:[#allocation7 + $0x90] sm:$0xff] %vm1895, %v2990
    %v3011 = vld [vmem:[%s2950 + $0x1] sm:$0xff]
    %v3012 = vld [vmem:[%s2950 + $0x11] sm:$0xff]
    %v3013 = vld [vmem:[%s2950 + $0x21] sm:$0xff]
    %v3014 = vld [vmem:[%s2950 + $0x31] sm:$0xff]
    %v3015 = vld [vmem:[%s2950 + $0x41] sm:$0xff]
    %v3016 = vld [vmem:[%s2950 + $0x71] sm:$0xff]
    %v3017 = vld [vmem:[%s2950 + $0x81] sm:$0xff]
    %v3018 = vld [vmem:[%s2950 + $0x91] sm:$0xff]
    %v3019 = vld [vmem:[%s2950 + $0xa1] sm:$0xff]
    %v3020 = vld [vmem:[%s2950 + $0xb1] sm:$0xff]
    %3031 = vrot.lane.b32.xlu0 %v3011, 112
    %v3032 = vpop.permute.xlu0 %3031
    %3033 = vrot.lane.b32.xlu0 %v3012, 112
    %v3034 = vpop.permute.xlu0 %3033
    %3035 = vrot.lane.b32.xlu0 %v3013, 112
    %v3036 = vpop.permute.xlu0 %3035
    %3037 = vrot.lane.b32.xlu0 %v3014, 112
    %v3038 = vpop.permute.xlu0 %3037
    %3039 = vrot.lane.b32.xlu0 %v3015, 112
    %v3040 = vpop.permute.xlu0 %3039
    %3041 = vrot.lane.b32.xlu0 %v3016, 112
    %v3042 = vpop.permute.xlu0 %3041
    %3043 = vrot.lane.b32.xlu0 %v3017, 112
    %v3044 = vpop.permute.xlu0 %3043
    %3045 = vrot.lane.b32.xlu0 %v3018, 112
    %v3046 = vpop.permute.xlu0 %3045
    %3047 = vrot.lane.b32.xlu0 %v3019, 112
    %v3048 = vpop.permute.xlu0 %3047
    %3049 = vrot.lane.b32.xlu0 %v3020, 112
    %v3050 = vpop.permute.xlu0 %3049
    %3061 = vst.msk [vmem:[#allocation7] sm:$0xff] %vm1992, %v3032
    %3062 = vst.msk [vmem:[#allocation7 + $0x10] sm:$0xff] %vm1992, %v3034
    %3063 = vst.msk [vmem:[#allocation7 + $0x20] sm:$0xff] %vm1992, %v3036
    %3064 = vst.msk [vmem:[#allocation7 + $0x30] sm:$0xff] %vm1992, %v3038
    %3065 = vst.msk [vmem:[#allocation7 + $0x40] sm:$0xff] %vm1992, %v3040
    %3066 = vst.msk [vmem:[#allocation7 + $0x50] sm:$0xff] %vm1992, %v3042
    %3067 = vst.msk [vmem:[#allocation7 + $0x60] sm:$0xff] %vm1992, %v3044
    %3068 = vst.msk [vmem:[#allocation7 + $0x70] sm:$0xff] %vm1992, %v3046
    %3069 = vst.msk [vmem:[#allocation7 + $0x80] sm:$0xff] %vm1992, %v3048
    %3070 = vst.msk [vmem:[#allocation7 + $0x90] sm:$0xff] %vm1992, %v3050
    %v3071 = vld [vmem:[%s2950 + $0x2] sm:$0xff]
    %v3072 = vld [vmem:[%s2950 + $0x12] sm:$0xff]
    %v3073 = vld [vmem:[%s2950 + $0x22] sm:$0xff]
    %v3074 = vld [vmem:[%s2950 + $0x32] sm:$0xff]
    %v3075 = vld [vmem:[%s2950 + $0x42] sm:$0xff]
    %v3076 = vld [vmem:[%s2950 + $0x72] sm:$0xff]
    %v3077 = vld [vmem:[%s2950 + $0x82] sm:$0xff]
    %v3078 = vld [vmem:[%s2950 + $0x92] sm:$0xff]
    %v3079 = vld [vmem:[%s2950 + $0xa2] sm:$0xff]
    %v3080 = vld [vmem:[%s2950 + $0xb2] sm:$0xff]
    %3081 = vst.msk [vmem:[#allocation7 + $0x8] sm:$0xff] %vm488, %v3071
    %3082 = vst.msk [vmem:[#allocation7 + $0x18] sm:$0xff] %vm488, %v3072
    %3083 = vst.msk [vmem:[#allocation7 + $0x28] sm:$0xff] %vm488, %v3073
    %3084 = vst.msk [vmem:[#allocation7 + $0x38] sm:$0xff] %vm488, %v3074
    %3085 = vst.msk [vmem:[#allocation7 + $0x48] sm:$0xff] %vm488, %v3075
    %3086 = vst.msk [vmem:[#allocation7 + $0x58] sm:$0xff] %vm488, %v3076
    %3087 = vst.msk [vmem:[#allocation7 + $0x68] sm:$0xff] %vm488, %v3077
    %3088 = vst.msk [vmem:[#allocation7 + $0x78] sm:$0xff] %vm488, %v3078
    %3089 = vst.msk [vmem:[#allocation7 + $0x88] sm:$0xff] %vm488, %v3079
    %3090 = vst.msk [vmem:[#allocation7 + $0x98] sm:$0xff] %vm488, %v3080
    %v3091 = vld [vmem:[#allocation7] sm:$0xff]
    %v3092 = vld [vmem:[#allocation7 + $0x8] sm:$0xff]
    %v3093 = vld [vmem:[#allocation7 + $0x10] sm:$0xff]
    %v3094 = vld [vmem:[#allocation7 + $0x18] sm:$0xff]
    %v3095 = vld [vmem:[#allocation7 + $0x20] sm:$0xff]
    %v3096 = vld [vmem:[#allocation7 + $0x28] sm:$0xff]
    %v3097 = vld [vmem:[#allocation7 + $0x30] sm:$0xff]
    %v3098 = vld [vmem:[#allocation7 + $0x38] sm:$0xff]
    %v3099 = vld [vmem:[#allocation7 + $0x40] sm:$0xff]
    %v3100 = vld [vmem:[#allocation7 + $0x48] sm:$0xff]
    %v3101 = vld [vmem:[#allocation7 + $0x50] sm:$0xff]
    %v3102 = vld [vmem:[#allocation7 + $0x58] sm:$0xff]
    %v3103 = vld [vmem:[#allocation7 + $0x60] sm:$0xff]
    %v3104 = vld [vmem:[#allocation7 + $0x68] sm:$0xff]
    %v3105 = vld [vmem:[#allocation7 + $0x70] sm:$0xff]
    %v3106 = vld [vmem:[#allocation7 + $0x78] sm:$0xff]
    %v3107 = vld [vmem:[#allocation7 + $0x80] sm:$0xff]
    %v3108 = vld [vmem:[#allocation7 + $0x88] sm:$0xff]
    %v3109 = vld [vmem:[#allocation7 + $0x90] sm:$0xff]
    %v3110 = vld [vmem:[#allocation7 + $0x98] sm:$0xff]
    %s3111 = scalar_lea.vmem %s1, 288
    %v3112 = vld [vmem:[%s3111] sm:$0xff]
    %v3113 = vld [vmem:[%s3111 + $0x8] sm:$0xff]
    %v3114 = vld [vmem:[%s3111 + $0x10] sm:$0xff]
    %v3115 = vld [vmem:[%s3111 + $0x18] sm:$0xff]
    %v3116 = vld [vmem:[%s3111 + $0x20] sm:$0xff]
    %v3117 = vld [vmem:[%s3111 + $0x28] sm:$0xff]
    %v3118 = vld [vmem:[%s3111 + $0x30] sm:$0xff]
    %v3119 = vld [vmem:[%s3111 + $0x38] sm:$0xff]
    %v3120 = vld [vmem:[%s3111 + $0x40] sm:$0xff]
    %v3121 = vld [vmem:[%s3111 + $0x48] sm:$0xff]
    %v3122 = vld [vmem:[%s3111 + $0x50] sm:$0xff]
    %v3123 = vld [vmem:[%s3111 + $0x58] sm:$0xff]
    %v3124 = vld [vmem:[%s3111 + $0x60] sm:$0xff]
    %v3125 = vld [vmem:[%s3111 + $0x68] sm:$0xff]
    %v3126 = vld [vmem:[%s3111 + $0x70] sm:$0xff]
    %v3127 = vld [vmem:[%s3111 + $0x78] sm:$0xff]
    %v3128 = vld [vmem:[%s3111 + $0x80] sm:$0xff]
    %v3129 = vld [vmem:[%s3111 + $0x88] sm:$0xff]
    %v3131 = vsel %vm488, %v3092, 0
    %v3134 = vsel %vm488, %v3094, 0
    %v3137 = vsel %vm488, %v3096, 0
    %v3140 = vsel %vm488, %v3098, 0
    %v3143 = vsel %vm488, %v3100, 0
    %v3146 = vsel %vm488, %v3102, 0
    %v3149 = vsel %vm488, %v3104, 0
    %v3152 = vsel %vm488, %v3106, 0
    %v3155 = vsel %vm488, %v3108, 0
    %v3158 = vsel %vm488, %v3110, 0
    %3160 = vmatpush.msra.mxu0 %v3127
    %3161 = vmatpush.msra.mxu0 %v3126
    %3162 = vmatpush.msra.mxu0 %v3125
    %3163 = vmatpush.msra.mxu0 %v3124
    %3164 = vmatpush.msra.mxu0 %v3123
    %3165 = vmatpush.msra.mxu0 %v3122
    %3166 = vmatpush.msra.mxu0 %v3121
    %3167 = vmatpush.msra.mxu0 %v3120
    %3168 = vmatpush.msra.mxu0 %v3119
    %3169 = vmatpush.msra.mxu0 %v3118
    %3170 = vmatpush.msra.mxu0 %v3117
    %3171 = vmatpush.msra.mxu0 %v3116
    %3172 = vmatpush.msra.mxu0 %v3115
    %3173 = vmatpush.msra.mxu0 %v3114
    %3174 = vmatpush.msra.mxu0 %v3113
    %3175 = vmatpush.msra.mxu0 %v3112
    %3176 = vmatmul.f32.gmra.mxu0 %v3091
    %v3177 = vpop.f32.mrf.mxu0
    %v3178 = vadd.f32 0.0, %v3177
    %3179 = vmatmul.f32.gmra.mxu0 %v3093
    %v3180 = vpop.f32.mrf.mxu0
    %v3181 = vadd.f32 0.0, %v3180
    %3182 = vmatmul.f32.gmra.mxu0 %v3095
    %v3183 = vpop.f32.mrf.mxu0
    %v3184 = vadd.f32 0.0, %v3183
    %3185 = vmatmul.f32.gmra.mxu0 %v3097
    %v3186 = vpop.f32.mrf.mxu0
    %v3187 = vadd.f32 0.0, %v3186
    %3188 = vmatmul.f32.gmra.mxu0 %v3099
    %v3189 = vpop.f32.mrf.mxu0
    %v3190 = vadd.f32 0.0, %v3189
    %3191 = vmatmul.f32.gmra.mxu0 %v3101
    %v3192 = vpop.f32.mrf.mxu0
    %v3193 = vadd.f32 0.0, %v3192
    %3194 = vmatmul.f32.gmra.mxu0 %v3103
    %v3195 = vpop.f32.mrf.mxu0
    %v3196 = vadd.f32 0.0, %v3195
    %3197 = vmatmul.f32.gmra.mxu0 %v3105
    %v3198 = vpop.f32.mrf.mxu0
    %v3199 = vadd.f32 0.0, %v3198
    %3200 = vmatmul.f32.gmra.mxu0 %v3107
    %v3201 = vpop.f32.mrf.mxu0
    %v3202 = vadd.f32 0.0, %v3201
    %3203 = vmatmul.f32.gmra.mxu0 %v3109
    %v3204 = vpop.f32.mrf.mxu0
    %v3205 = vadd.f32 0.0, %v3204
    %3206 = vdwg.mxu0
    %3207 = vmatpush.msra.mxu0 0.0
    %3208 = vmatpush.msra.mxu0 0.0
    %3209 = vmatpush.msra.mxu0 0.0
    %3210 = vmatpush.msra.mxu0 0.0
    %3211 = vmatpush.msra.mxu0 0.0
    %3212 = vmatpush.msra.mxu0 0.0
    %3213 = vmatpush.msra.mxu0 0.0
    %3214 = vmatpush.msra.mxu0 0.0
    %3215 = vmatpush.msra.mxu0 0.0
    %3216 = vmatpush.msra.mxu0 0.0
    %3217 = vmatpush.msra.mxu0 0.0
    %3218 = vmatpush.msra.mxu0 0.0
    %3219 = vmatpush.msra.mxu0 0.0
    %3220 = vmatpush.msra.mxu0 0.0
    %3221 = vmatpush.msra.mxu0 %v3129
    %3222 = vmatpush.msra.mxu0 %v3128
    %3223 = vmatmul.f32.gmra.mxu0 %v3131
    %v3224 = vpop.f32.mrf.mxu0
    %v3225 = vadd.f32 %v3178, %v3224
    %3226 = vmatmul.f32.gmra.mxu0 %v3134
    %v3227 = vpop.f32.mrf.mxu0
    %v3228 = vadd.f32 %v3181, %v3227
    %3229 = vmatmul.f32.gmra.mxu0 %v3137
    %v3230 = vpop.f32.mrf.mxu0
    %v3231 = vadd.f32 %v3184, %v3230
    %3232 = vmatmul.f32.gmra.mxu0 %v3140
    %v3233 = vpop.f32.mrf.mxu0
    %v3234 = vadd.f32 %v3187, %v3233
    %3235 = vmatmul.f32.gmra.mxu0 %v3143
    %v3236 = vpop.f32.mrf.mxu0
    %v3237 = vadd.f32 %v3190, %v3236
    %3238 = vmatmul.f32.gmra.mxu0 %v3146
    %v3239 = vpop.f32.mrf.mxu0
    %v3240 = vadd.f32 %v3193, %v3239
    %3241 = vmatmul.f32.gmra.mxu0 %v3149
    %v3242 = vpop.f32.mrf.mxu0
    %v3243 = vadd.f32 %v3196, %v3242
    %3244 = vmatmul.f32.gmra.mxu0 %v3152
    %v3245 = vpop.f32.mrf.mxu0
    %v3246 = vadd.f32 %v3199, %v3245
    %3247 = vmatmul.f32.gmra.mxu0 %v3155
    %v3248 = vpop.f32.mrf.mxu0
    %v3249 = vadd.f32 %v3202, %v3248
    %3250 = vmatmul.f32.gmra.mxu0 %v3158
    %v3251 = vpop.f32.mrf.mxu0
    %v3252 = vadd.f32 %v3205, %v3251
    %3253 = vdwg.mxu0
    %v3254 = vsel %vm2619, %v3225, 0.0
    %v3255 = vsel %vm2619, %v3240, 0.0
    %v3256 = vadd.f32 %v3254, %v3255
    %v3257 = vsel %vm2619, %v3228, 0.0
    %v3258 = vsel %vm2619, %v3243, 0.0
    %v3259 = vadd.f32 %v3257, %v3258
    %v3260 = vsel %vm2619, %v3231, 0.0
    %v3261 = vsel %vm2619, %v3246, 0.0
    %v3262 = vadd.f32 %v3260, %v3261
    %v3263 = vsel %vm2619, %v3234, 0.0
    %v3264 = vsel %vm2619, %v3249, 0.0
    %v3265 = vadd.f32 %v3263, %v3264
    %v3266 = vsel %vm2619, %v3237, 0.0
    %v3267 = vsel %vm2619, %v3252, 0.0
    %v3268 = vadd.f32 %v3266, %v3267
    %v3269 = vsel %vm2619, %v3256, 0.0
    %v3270 = vsel %vm2619, %v3259, 0.0
    %v3271 = vadd.f32 %v3269, %v3270
    %v3272 = vsel %vm2619, %v3262, 0.0
    %v3273 = vadd.f32 %v3271, %v3272
    %v3274 = vsel %vm2619, %v3265, 0.0
    %v3275 = vadd.f32 %v3273, %v3274
    %v3276 = vsel %vm2619, %v3268, 0.0
    %v3277 = vadd.f32 %v3275, %v3276
    %v3278 = vsel %vm2619, %v3277, 0.0
    %v3279 = vrot.slane %v3278, 4
    %v3280 = vadd.f32 %v3278, %v3279
    %v3281 = vrot.slane %v3280, 2
    %v3282 = vadd.f32 %v3280, %v3281
    %v3283 = vrot.slane %v3282, 1
    %v3284 = vadd.f32 %v3282, %v3283
    %v3285 = vmul.f32 %v3284, 0.02
    %v3286 = vsub.f32 %v3225, %v3285
    %v3287 = vsub.f32 %v3228, %v3285
    %v3288 = vsub.f32 %v3231, %v3285
    %v3289 = vsub.f32 %v3234, %v3285
    %v3290 = vsub.f32 %v3237, %v3285
    %v3291 = vsub.f32 %v3240, %v3285
    %v3292 = vsub.f32 %v3243, %v3285
    %v3293 = vsub.f32 %v3246, %v3285
    %v3294 = vsub.f32 %v3249, %v3285
    %v3295 = vsub.f32 %v3252, %v3285
    %v3296 = vmul.f32 %v3286, %v3286
    %v3297 = vmul.f32 %v3287, %v3287
    %v3298 = vmul.f32 %v3288, %v3288
    %v3299 = vmul.f32 %v3289, %v3289
    %v3300 = vmul.f32 %v3290, %v3290
    %v3301 = vmul.f32 %v3291, %v3291
    %v3302 = vmul.f32 %v3292, %v3292
    %v3303 = vmul.f32 %v3293, %v3293
    %v3304 = vmul.f32 %v3294, %v3294
    %v3305 = vmul.f32 %v3295, %v3295
    %v3306 = vsel %vm2619, %v3296, 0.0
    %v3307 = vsel %vm2619, %v3301, 0.0
    %v3308 = vadd.f32 %v3306, %v3307
    %v3309 = vsel %vm2619, %v3297, 0.0
    %v3310 = vsel %vm2619, %v3302, 0.0
    %v3311 = vadd.f32 %v3309, %v3310
    %v3312 = vsel %vm2619, %v3298, 0.0
    %v3313 = vsel %vm2619, %v3303, 0.0
    %v3314 = vadd.f32 %v3312, %v3313
    %v3315 = vsel %vm2619, %v3299, 0.0
    %v3316 = vsel %vm2619, %v3304, 0.0
    %v3317 = vadd.f32 %v3315, %v3316
    %v3318 = vsel %vm2619, %v3300, 0.0
    %v3319 = vsel %vm2619, %v3305, 0.0
    %v3320 = vadd.f32 %v3318, %v3319
    %v3321 = vsel %vm2619, %v3308, 0.0
    %v3322 = vsel %vm2619, %v3311, 0.0
    %v3323 = vadd.f32 %v3321, %v3322
    %v3324 = vsel %vm2619, %v3314, 0.0
    %v3325 = vadd.f32 %v3323, %v3324
    %v3326 = vsel %vm2619, %v3317, 0.0
    %v3327 = vadd.f32 %v3325, %v3326
    %v3328 = vsel %vm2619, %v3320, 0.0
    %v3329 = vadd.f32 %v3327, %v3328
    %v3330 = vsel %vm2619, %v3329, 0.0
    %v3331 = vrot.slane %v3330, 4
    %v3332 = vadd.f32 %v3330, %v3331
    %v3333 = vrot.slane %v3332, 2
    %v3334 = vadd.f32 %v3332, %v3333
    %v3335 = vrot.slane %v3334, 1
    %v3336 = vadd.f32 %v3334, %v3335
    %v3337 = vmul.f32 %v3336, 0.02
    %v3338 = vadd.f32 %v3337, 1e-05
    %v3339 = vrsqrt.pop %v3338
    %v3340 = vmul.f32 %v3339, %v3338
    %v3341 = vmul.f32 %v3340, %v3339
    %v3342 = vmul.f32 0.5, %v3341
    %v3343 = vsub.f32 1.5, %v3342
    %v3344 = vmul.f32 %v3339, %v3343
    %vm3345 = vweird.f32 %v3338
    %vm3346 = vweird.f32 %v3339
    %vm3347 = vmor %vm3345, %vm3346
    %v3348 = vsel %vm3347, %v3339, %v3344
    %v3349 = vmul.f32 %v15, %v3348
    %v3350 = vmul.f32 %v3285, %v3349
    %v3352 = vrot.slane %v3350, 7
    %v3354 = vsub.f32 %v15, %v3352
    %v3355 = vperm.slane %v3349, 4
    %v3356 = vmul.f32 %v3225, %v3355
    %v3357 = vmul.f32 %v3228, %v3355
    %v3358 = vmul.f32 %v3231, %v3355
    %v3359 = vmul.f32 %v3234, %v3355
    %v3360 = vmul.f32 %v3240, %v3355
    %v3361 = vmul.f32 %v3243, %v3355
    %v3362 = vmul.f32 %v3246, %v3355
    %v3363 = vmul.f32 %v3249, %v3355
    %v3364 = vperm.slane %v3354, 5
    %v3365 = vadd.f32 %v3356, %v3364
    %v3366 = vadd.f32 %v3357, %v3364
    %v3367 = vadd.f32 %v3358, %v3364
    %v3368 = vadd.f32 %v3359, %v3364
    %v3369 = vadd.f32 %v3360, %v3364
    %v3370 = vadd.f32 %v3361, %v3364
    %v3371 = vadd.f32 %v3362, %v3364
    %v3372 = vadd.f32 %v3363, %v3364
    %v3373 = vmax.f32 %v3365, 0.0
    %v3374 = vmax.f32 %v3366, 0.0
    %v3375 = vmax.f32 %v3367, 0.0
    %v3376 = vmax.f32 %v3368, 0.0
    %v3377 = vmax.f32 %v3369, 0.0
    %v3378 = vmax.f32 %v3370, 0.0
    %v3379 = vmax.f32 %v3371, 0.0
    %v3380 = vmax.f32 %v3372, 0.0
    %v3381 = vmax.f32 %v3373, %v3374
    %v3382 = vmax.f32 %v3375, %v3376
    %v3383 = vmax.f32 %v3377, %v3378
    %v3384 = vmax.f32 %v3379, %v3380
    %3385 = vst.msk [vmem:[#allocation8] sm:$0xff] %vm488, %v3381
    %3386 = vst.msk [vmem:[#allocation8 + $0x8] sm:$0xff] %vm488, %v3382
    %3387 = vst.msk [vmem:[#allocation8 + $0x10] sm:$0xff] %vm488, %v3383
    %3388 = vst.msk [vmem:[#allocation8 + $0x18] sm:$0xff] %vm488, %v3384
    %v3389 = vld [vmem:[#allocation8] ss:$2 sm:$0x3]
    %s3390 = scalar_lea.vmem [#allocation8], 8
    %v3391 = vld [vmem:[%s3390] ss:$2 sm:$0x3]
    %s3392 = scalar_lea.vmem [#allocation8], 16
    %v3393 = vld [vmem:[%s3392] ss:$2 sm:$0x3]
    %s3394 = scalar_lea.vmem [#allocation8], 24
    %v3395 = vld [vmem:[%s3394] ss:$2 sm:$0x3]
    %s3396 = scalar_lea.vmem [#allocation8], 1
    %v3397 = vld [vmem:[%s3396] ss:$2 sm:$0x3]
    %s3398 = scalar_lea.vmem [#allocation8], 9
    %v3399 = vld [vmem:[%s3398] ss:$2 sm:$0x3]
    %s3400 = scalar_lea.vmem [#allocation8], 17
    %v3401 = vld [vmem:[%s3400] ss:$2 sm:$0x3]
    %s3402 = scalar_lea.vmem [#allocation8], 25
    %v3403 = vld [vmem:[%s3402] ss:$2 sm:$0x3]
    %v3404 = vmax.f32 %v3389, %v3397
    %v3405 = vmax.f32 %v3391, %v3399
    %v3406 = vmax.f32 %v3393, %v3401
    %v3407 = vmax.f32 %v3395, %v3403
    %3408 = vst.msk [vmem:[#allocation9] sm:$0x3] %vm1240, %v3404
    %3409 = vst.msk [vmem:[#allocation9 + $0x2] sm:$0x3] %vm1240, %v3405
    %3410 = vst.msk [vmem:[#allocation9 + $0x4] sm:$0x3] %vm1240, %v3406
    %3411 = vst.msk [vmem:[#allocation9 + $0x6] sm:$0x3] %vm1240, %v3407
    // Predicated region
    $region14: #{encoder_cnn_small.1} parent=1 // pred_check
      _
    $region15: #{encoder_cnn_small.1} parent=1 // pred_check_branch
      %3413 = sbr.rel (0) target = $region17
    $region16: #{encoder_cnn_small.1} parent=1 // pred_region
      %3415 = vsyncadd [#allocation10], 0
      %s3416 = sshll.u32 [#allocation9], 4
      %s3417 = int_to_ptr.vmem [resolvable:$true] %s3416
      %s3418 = sshll.u32 %s3, 4
      %s3419 = int_to_ptr.hbm [resolvable:$true] %s3418
      %3424 = dma.vmem_to_hbm [thread:$0]  %s3417, 128, %s3419, [#allocation10], 32, 32, 2
    $region17: #{encoder_cnn_small.1} parent=1 // pred_fallthru
      _
    // Predicated region
    $region18: #{encoder_cnn_small.1} parent=1 // pred_check
      _
    $region19: #{encoder_cnn_small.1} parent=1 // pred_check_branch
      %3426 = sbr.rel (0) target = $region21
    $region20: #{encoder_cnn_small.1} parent=1 // pred_region
      %3428 = dma.done [#allocation10], 128
    $region21: #{encoder_cnn_small.1} parent=1 // pred_fallthru
      _
    %3429 = vsyncpa [#allocation10], 1

</llo_original>
